<compile_context>
chip_gen: v7x
topology: tpu7x:2x2x1
jax: 0.10.0
libtpu: 0.0.40
codegen_flags: <defaults>
</compile_context>

<pallas_src>
import jax
import jax.numpy as jnp
from jax.experimental import pallas as pl
from jax.experimental.pallas import tpu as pltpu

EPS = 1e-3                      # BatchNorm2d(eps=0.001)


# ----------------------------- in-kernel helpers ----------------------------

def _bn_scale_shift(sm, sq, m, gamma, beta):
    """Fused BatchNorm2d (training mode, biased variance) scale/shift."""
    mean = sm * (1.0 / m)
    var = jnp.maximum(sq * (1.0 / m) - mean * mean, 0.0)   # clamp cancellation
    scale = gamma * jax.lax.rsqrt(var + EPS)               # EUP rsqrt
    shift = beta - mean * scale
    return scale, shift


def _bn_relu(y, gamma, beta):
    """BatchNorm2d (per-call batch stats) + ReLU on (M, C) rows."""
    m = y.shape[0]
    sm = jnp.sum(y, axis=0, keepdims=True)
    sq = jnp.sum(y * y, axis=0, keepdims=True)
    scale, shift = _bn_scale_shift(sm, sq, m, gamma, beta)
    return jnp.maximum(y * scale + shift, 0.0)             # FMA + max per element


def _maxpool_3x3_s2(src_ref, ho, wo):
    """3x3 stride-2 ceil_mode max-pool of a zero-padded (N, 2ho+1, 2wo+1, C) scratch.

    W direction: three sublane-strided window loads straight from the ref
    (no masks, no O(Wo*Wp) expansion).  H direction: plain outer-dim selects.
    Zero padding is exact because the pooled activations are post-ReLU (>= 0).
    Returns (N, ho*wo, C).
    """
    w0 = src_ref[:, :, pl.ds(0, wo, stride=2), :]
    w1 = src_ref[:, :, pl.ds(1, wo, stride=2), :]
    w2 = src_ref[:, :, pl.ds(2, wo, stride=2), :]
    band = jnp.maximum(jnp.maximum(w0, w1), w2)            # (N, 2ho+1, wo, C)
    rows = [jnp.maximum(jnp.maximum(band[:, 2 * i], band[:, 2 * i + 1]),
                        band[:, 2 * i + 2])
            for i in range(ho)]
    return jnp.concatenate(rows, axis=1)                   # (N, ho*wo, C)


# --------------------------------- kernel -----------------------------------

def _stem_kernel(p1_ref, w1_ref, g1_ref, b1_ref,
                 w2_ref, g2_ref, b2_ref,
                 w3_ref, g3_ref, b3_ref,
                 o_ref,
                 y1_ref, s1_ref, p2_ref, cols_ref, s3_ref):
    N, H1P, W1P, C1 = s1_ref.shape          # (2, 17, 17, 16)
    _, H2P, W2P, C2 = p2_ref.shape          # (2, 10, 10, 64)
    _, H3P, W3P, C3 = s3_ref.shape          # (2,  9,  9, 128)
    H1 = H1P - 1                            # 16 (conv1 spatial)
    HO1 = H1 // 2                           # 8
    H2 = H2P - 2                            # 8  (conv2/conv3 spatial)
    HO2 = H2 // 2                           # 4
    f32 = jnp.float32
    bf16 = jnp.bfloat16

    # ---- conv1: one MXU dot on the lane-padded (K=75->128) bf16 im2col ----
    y1_ref[...] = jnp.dot(p1_ref[...], w1_ref[...], preferred_element_type=f32)
    y1 = y1_ref[...]
    m1 = y1.shape[0]
    sm1 = jnp.sum(y1, axis=0, keepdims=True)
    sq1 = jnp.sum(y1 * y1, axis=0, keepdims=True)
    scale1, shift1 = _bn_scale_shift(sm1, sq1, m1, g1_ref[...], b1_ref[...])
    # normalize from the scratch again so y1's live range stays bounded
    # TODO(synk): chunked two-pass BN over M once the batch-tiled grid lands.
    a1 = jnp.maximum(y1_ref[...] * scale1 + shift1, 0.0)   # (N*H1*H1, 16)

    # ---- maxpool1: store act, zero only the 1-row/1-col ceil_mode border ----
    s1_ref[:, 0:H1, 0:H1, :] = a1.reshape(N, H1, H1, C1)
    s1_ref[:, H1:H1 + 1, :, :] = jnp.zeros((N, 1, W1P, C1), f32)
    s1_ref[:, :, H1:H1 + 1, :] = jnp.zeros((N, H1P, 1, C1), f32)
    q1 = _maxpool_3x3_s2(s1_ref, HO1, HO1)                  # (N, 64, 16)

    # ---- conv2 (1x1) + BN + ReLU: pooled rows never leave VMEM ----
    y2 = jnp.dot(q1.reshape(N * HO1 * HO1, C1).astype(bf16), w2_ref[...],
                 preferred_element_type=f32)                # (N*64, 64)
    a2 = _bn_relu(y2, g2_ref[...], b2_ref[...])

    # ---- conv3 (3x3 pad1): K=576 im2col built in VMEM, single MXU dot ----
    p2_ref[:, 1:H2 + 1, 1:H2 + 1, :] = a2.reshape(N, H2, H2, C2)
    p2_ref[:, 0:1, :, :] = jnp.zeros((N, 1, W2P, C2), f32)
    p2_ref[:, H2 + 1:H2 + 2, :, :] = jnp.zeros((N, 1, W2P, C2), f32)
    p2_ref[:, :, 0:1, :] = jnp.zeros((N, H2P, 1, C2), f32)
    p2_ref[:, :, H2 + 1:H2 + 2, :] = jnp.zeros((N, H2P, 1, C2), f32)
    for di in range(3):
        for dj in range(3):
            k0 = (di * 3 + dj) * C2
            win = p2_ref[:, di:di + H2, dj:dj + H2, :]       # (N, 8, 8, 64)
            cols_ref[:, k0:k0 + C2] = win.reshape(N * H2 * H2, C2).astype(bf16)
    y3 = jnp.dot(cols_ref[...], w3_ref[...], preferred_element_type=f32)  # (N*64, 128)
    a3 = _bn_relu(y3, g3_ref[...], b3_ref[...])

    # ---- maxpool2 + single lane/sublane-dense output store ----
    s3_ref[:, 0:H2, 0:H2, :] = a3.reshape(N, H2, H2, C3)
    s3_ref[:, H2:H2 + 1, :, :] = jnp.zeros((N, 1, W3P, C3), f32)
    s3_ref[:, :, H2:H2 + 1, :] = jnp.zeros((N, H3P, 1, C3), f32)
    o_ref[...] = _maxpool_3x3_s2(s3_ref, HO2, HO2)          # (N, 16, 128)


# ------------------------------ wrapper / glue -------------------------------

def _conv1_im2col(x_nhwc, ksize, pad, k_padded):
    """im2col for conv1 (XLA glue), K zero-padded to 128, cast to bf16."""
    n, h, w, cin = x_nhwc.shape
    xp = jnp.pad(x_nhwc, ((0, 0), (pad, pad), (pad, pad), (0, 0)))
    cols = [xp[:, di:di + h, dj:dj + w, :]
            for di in range(ksize) for dj in range(ksize)]
    patches = jnp.stack(cols, axis=3).reshape(n * h * w, ksize * ksize * cin)
    patches = jnp.pad(patches, ((0, 0), (0, k_padded - ksize * ksize * cin)))
    return patches.astype(jnp.bfloat16)


def _stem_forward(params, x_nhwc):
    n, h, w, cin = x_nhwc.shape
    assert h == w and h % 4 == 0
    c1, c2, c3 = 16, 64, 128
    k1 = 5 * 5 * cin
    k1p = 128                                   # lane-pad K -> clean vreg loads

    ho1, wo1 = h // 2, w // 2                   # 3x3 s2 ceil pool of even H
    ho2, wo2 = ho1 // 2, wo1 // 2

    patches1 = _conv1_im2col(x_nhwc, 5, 2, k1p)                        # (NHW,128) bf16
    w1 = jnp.pad(params["conv1_w"].reshape(k1, c1),
                 ((0, k1p - k1), (0, 0))).astype(jnp.bfloat16)
    w2 = params["conv2_w"].reshape(c1, c2).astype(jnp.bfloat16)
    w3 = params["conv3_w"].reshape(9 * c2, c3).astype(jnp.bfloat16)    # (576, 128)
    g1 = params["conv1_g"].reshape(1, c1); b1 = params["conv1_b"].reshape(1, c1)
    g2 = params["conv2_g"].reshape(1, c2); b2 = params["conv2_b"].reshape(1, c2)
    g3 = params["conv3_g"].reshape(1, c3); b3 = params["conv3_b"].reshape(1, c3)

    inputs = (patches1, w1, g1, b1, w2, g2, b2, w3, g3, b3)

    def full_spec(a):
        return pl.BlockSpec(a.shape, lambda i, _r=a.ndim: (0,) * _r)

    m1 = n * h * w
    m2 = n * ho1 * wo1
    flops = 2 * (m1 * k1p * c1 + m2 * c1 * c2 + m2 * 9 * c2 * c3)
    bytes_accessed = int(2 * patches1.size + 2 * (w1.size + w2.size + w3.size)
                         + 4 * (2 * (c1 + c2 + c3)) + 4 * n * ho2 * wo2 * c3)

    out = pl.pallas_call(
        _stem_kernel,
        out_shape=jax.ShapeDtypeStruct((n, ho2 * wo2, c3), jnp.float32),
        grid=(1,),
        in_specs=[full_spec(a) for a in inputs],
        out_specs=pl.BlockSpec((n, ho2 * wo2, c3), lambda i: (0, 0, 0)),
        scratch_shapes=[
            pltpu.VMEM((m1, c1), jnp.float32),                  # conv1 pre-BN
            pltpu.VMEM((n, h + 1, w + 1, c1), jnp.float32),     # pool1 padded input
            pltpu.VMEM((n, ho1 + 2, wo1 + 2, c2), jnp.float32),  # conv3 padded input
            pltpu.VMEM((m2, 9 * c2), jnp.bfloat16),             # conv3 im2col K=576
            pltpu.VMEM((n, ho1 + 1, wo1 + 1, c3), jnp.float32),  # pool2 padded input
        ],
        compiler_params=pltpu.CompilerParams(dimension_semantics=("arbitrary",)),
        cost_estimate=pl.CostEstimate(flops=flops,
                                      transcendentals=c1 + c2 + c3,
                                      bytes_accessed=bytes_accessed),
    )(*inputs)
    return out.reshape(n, ho2, wo2, c3)


# ------------------------------ model / params -------------------------------

def init_params(key):
    ks = jax.random.split(key, 9)

    def conv_w(k, ksize, cin, cout):
        return 0.05 * jax.random.normal(k, (ksize, ksize, cin, cout), jnp.float32)

    def bn(k1, k2, c):
        gamma = 1.0 + 0.1 * jax.random.normal(k1, (c,), jnp.float32)
        beta = 0.1 * jax.random.normal(k2, (c,), jnp.float32)
        return gamma, beta

    p = {}
    p["conv1_w"] = conv_w(ks[0], 5, 3, 16)
    p["conv1_g"], p["conv1_b"] = bn(ks[1], ks[2], 16)
    p["conv2_w"] = conv_w(ks[3], 1, 16, 64)
    p["conv2_g"], p["conv2_b"] = bn(ks[4], ks[5], 64)
    p["conv3_w"] = conv_w(ks[6], 3, 64, 128)
    p["conv3_g"], p["conv3_b"] = bn(ks[7], ks[8], 128)
    return p


@jax.jit
def googlenet_cifar10_forward(params, x_nchw):
    x = jnp.transpose(x_nchw, (0, 2, 3, 1)).astype(jnp.float32)  # NCHW -> NHWC
    out_nhwc = _stem_forward(params, x)                          # fused Pallas stem
    return jnp.transpose(out_nhwc, (0, 3, 1, 2))                 # NHWC -> NCHW


if __name__ == "__main__":
    key = jax.random.PRNGKey(0)
    kp, kx = jax.random.split(key)
    params = init_params(kp)
    # PyTorch-style NCHW input: batch=2, in_channels=3, 16x16 spatial.
    x = jax.random.normal(kx, (2, 3, 16, 16), jnp.float32)

    out = googlenet_cifar10_forward(params, x)
    out = jax.block_until_ready(out)

    # sanity: 16x16 -> conv1 16x16 -> pool 8x8 -> conv2/conv3 8x8 -> pool 4x4, 128 ch
    assert out.shape == (2, 128, 4, 4), out.shape
    assert bool(jnp.all(jnp.isfinite(out))), "non-finite output"
    assert bool(jnp.all(out >= 0.0)), "output should be non-negative after ReLU+maxpool"
    print("KERNEL_OK")
</pallas_src>

<mosaic_0001>
module attributes {stable_mosaic.version = 11 : i64} {
  func.func @_stem_kernel(%arg0: i32, %arg1: memref<512x128xbf16, #tpu.memory_space<vmem>>, %arg2: memref<128x16xbf16, #tpu.memory_space<vmem>>, %arg3: memref<1x16xf32, #tpu.memory_space<vmem>>, %arg4: memref<1x16xf32, #tpu.memory_space<vmem>>, %arg5: memref<16x64xbf16, #tpu.memory_space<vmem>>, %arg6: memref<1x64xf32, #tpu.memory_space<vmem>>, %arg7: memref<1x64xf32, #tpu.memory_space<vmem>>, %arg8: memref<576x128xbf16, #tpu.memory_space<vmem>>, %arg9: memref<1x128xf32, #tpu.memory_space<vmem>>, %arg10: memref<1x128xf32, #tpu.memory_space<vmem>>, %arg11: memref<2x16x128xf32, #tpu.memory_space<vmem>>, %arg12: memref<512x16xf32, #tpu.memory_space<vmem>>, %arg13: memref<2x17x17x16xf32, #tpu.memory_space<vmem>>, %arg14: memref<2x10x10x64xf32, #tpu.memory_space<vmem>>, %arg15: memref<128x576xbf16, #tpu.memory_space<vmem>>, %arg16: memref<2x9x9x128xf32, #tpu.memory_space<vmem>>) attributes {dimension_semantics = [#tpu.dimension_semantics<arbitrary>], iteration_bounds = array<i64: 1>, scalar_prefetch = 0 : i64, scratch_operands = 5 : i64, tpu.core_type = #tpu.core_type<tc>, window_params = [{pipeline_mode = #tpu.pipeline_mode<synchronous>, transform_indices = @transform_0, window_bounds = array<i64: 512, 128>}, {pipeline_mode = #tpu.pipeline_mode<synchronous>, transform_indices = @transform_1, window_bounds = array<i64: 128, 16>}, {pipeline_mode = #tpu.pipeline_mode<synchronous>, transform_indices = @transform_2, window_bounds = array<i64: 1, 16>}, {pipeline_mode = #tpu.pipeline_mode<synchronous>, transform_indices = @transform_3, window_bounds = array<i64: 1, 16>}, {pipeline_mode = #tpu.pipeline_mode<synchronous>, transform_indices = @transform_4, window_bounds = array<i64: 16, 64>}, {pipeline_mode = #tpu.pipeline_mode<synchronous>, transform_indices = @transform_5, window_bounds = array<i64: 1, 64>}, {pipeline_mode = #tpu.pipeline_mode<synchronous>, transform_indices = @transform_6, window_bounds = array<i64: 1, 64>}, {pipeline_mode = #tpu.pipeline_mode<synchronous>, transform_indices = @transform_7, window_bounds = array<i64: 576, 128>}, {pipeline_mode = #tpu.pipeline_mode<synchronous>, transform_indices = @transform_8, window_bounds = array<i64: 1, 128>}, {pipeline_mode = #tpu.pipeline_mode<synchronous>, transform_indices = @transform_9, window_bounds = array<i64: 1, 128>}, {pipeline_mode = #tpu.pipeline_mode<synchronous>, transform_indices = @transform_10, window_bounds = array<i64: 2, 16, 128>}]} {
    %c0 = arith.constant 0 : index
    %c0_0 = arith.constant 0 : index
    %0 = vector.load %arg1[%c0, %c0_0] : memref<512x128xbf16, #tpu.memory_space<vmem>>, vector<512x128xbf16>
    %c0_1 = arith.constant 0 : index
    %c0_2 = arith.constant 0 : index
    %1 = vector.load %arg2[%c0_1, %c0_2] : memref<128x16xbf16, #tpu.memory_space<vmem>>, vector<128x16xbf16>
    %cst = arith.constant dense<0.000000e+00> : vector<512x16xf32>
    %2 = tpu.matmul %0, %1, %cst {dimension_numbers = #tpu.dot_dimension_numbers<[1], [0], [0], [1], [0, 0, 1, 1], [], []>} : vector<512x128xbf16>, vector<128x16xbf16>, vector<512x16xf32> -> vector<512x16xf32>
    %c0_3 = arith.constant 0 : index
    %c0_4 = arith.constant 0 : index
    %3 = vector.load %arg12[%c0_3, %c0_4] : memref<512x16xf32, #tpu.memory_space<vmem>>, vector<512x16xf32>
    tpu.vector_store %arg12[%c0_3, %c0_4], %2 {strides = array<i32>} : memref<512x16xf32, #tpu.memory_space<vmem>>, vector<512x16xf32>,
    %c0_5 = arith.constant 0 : index
    %c0_6 = arith.constant 0 : index
    %4 = vector.load %arg12[%c0_5, %c0_6] : memref<512x16xf32, #tpu.memory_space<vmem>>, vector<512x16xf32>
    %cst_7 = arith.constant dense<0.000000e+00> : vector<16xf32>
    %5 = vector.multi_reduction <add>, %4, %cst_7 [0] : vector<512x16xf32> to vector<16xf32>
    %6 = vector.shape_cast %5 : vector<16xf32> to vector<1x16xf32>
    %7 = arith.mulf %4, %4 : vector<512x16xf32>
    %cst_8 = arith.constant dense<0.000000e+00> : vector<16xf32>
    %8 = vector.multi_reduction <add>, %7, %cst_8 [0] : vector<512x16xf32> to vector<16xf32>
    %9 = vector.shape_cast %8 : vector<16xf32> to vector<1x16xf32>
    %c0_9 = arith.constant 0 : index
    %c0_10 = arith.constant 0 : index
    %10 = vector.load %arg3[%c0_9, %c0_10] : memref<1x16xf32, #tpu.memory_space<vmem>>, vector<1x16xf32>
    %c0_11 = arith.constant 0 : index
    %c0_12 = arith.constant 0 : index
    %11 = vector.load %arg4[%c0_11, %c0_12] : memref<1x16xf32, #tpu.memory_space<vmem>>, vector<1x16xf32>
    %cst_13 = arith.constant 0.001953125 : f32
    %12 = vector.broadcast %cst_13 : f32 to vector<1x16xf32>
    %13 = arith.mulf %6, %12 : vector<1x16xf32>
    %cst_14 = arith.constant 0.001953125 : f32
    %14 = vector.broadcast %cst_14 : f32 to vector<1x16xf32>
    %15 = arith.mulf %9, %14 : vector<1x16xf32>
    %16 = arith.mulf %13, %13 : vector<1x16xf32>
    %17 = arith.subf %15, %16 : vector<1x16xf32>
    %cst_15 = arith.constant 0.000000e+00 : f32
    %18 = vector.broadcast %cst_15 : f32 to vector<1x16xf32>
    %19 = arith.maximumf %17, %18 : vector<1x16xf32>
    %cst_16 = arith.constant 1.000000e-03 : f32
    %20 = vector.broadcast %cst_16 : f32 to vector<1x16xf32>
    %21 = arith.addf %19, %20 : vector<1x16xf32>
    %22 = math.rsqrt %21 : vector<1x16xf32>
    %23 = arith.mulf %10, %22 : vector<1x16xf32>
    %24 = arith.mulf %13, %23 : vector<1x16xf32>
    %25 = arith.subf %11, %24 : vector<1x16xf32>
    %c0_17 = arith.constant 0 : index
    %c0_18 = arith.constant 0 : index
    %26 = vector.load %arg12[%c0_17, %c0_18] : memref<512x16xf32, #tpu.memory_space<vmem>>, vector<512x16xf32>
    %27 = vector.broadcast %23 : vector<1x16xf32> to vector<512x16xf32>
    %28 = arith.mulf %26, %27 : vector<512x16xf32>
    %29 = vector.broadcast %25 : vector<1x16xf32> to vector<512x16xf32>
    %30 = arith.addf %28, %29 : vector<512x16xf32>
    %cst_19 = arith.constant 0.000000e+00 : f32
    %31 = vector.broadcast %cst_19 : f32 to vector<512x16xf32>
    %32 = arith.maximumf %30, %31 : vector<512x16xf32>
    %33 = vector.shape_cast %32 : vector<512x16xf32> to vector<2x16x16x16xf32>
    %c0_20 = arith.constant 0 : index
    %c0_21 = arith.constant 0 : index
    %c0_22 = arith.constant 0 : index
    %c0_23 = arith.constant 0 : index
    %34 = vector.load %arg13[%c0_20, %c0_21, %c0_22, %c0_23] : memref<2x17x17x16xf32, #tpu.memory_space<vmem>>, vector<2x16x16x16xf32>
    tpu.vector_store %arg13[%c0_20, %c0_21, %c0_22, %c0_23], %33 {strides = array<i32>} : memref<2x17x17x16xf32, #tpu.memory_space<vmem>>, vector<2x16x16x16xf32>,
    %cst_24 = arith.constant 0.000000e+00 : f32
    %35 = vector.broadcast %cst_24 : f32 to vector<2x1x17x16xf32>
    %c0_25 = arith.constant 0 : index
    %c16 = arith.constant 16 : index
    %c0_26 = arith.constant 0 : index
    %c0_27 = arith.constant 0 : index
    %36 = vector.load %arg13[%c0_25, %c16, %c0_26, %c0_27] : memref<2x17x17x16xf32, #tpu.memory_space<vmem>>, vector<2x1x17x16xf32>
    tpu.vector_store %arg13[%c0_25, %c16, %c0_26, %c0_27], %35 {strides = array<i32>} : memref<2x17x17x16xf32, #tpu.memory_space<vmem>>, vector<2x1x17x16xf32>,
    %cst_28 = arith.constant 0.000000e+00 : f32
    %37 = vector.broadcast %cst_28 : f32 to vector<2x17x1x16xf32>
    %c0_29 = arith.constant 0 : index
    %c0_30 = arith.constant 0 : index
    %c16_31 = arith.constant 16 : index
    %c0_32 = arith.constant 0 : index
    %38 = vector.load %arg13[%c0_29, %c0_30, %c16_31, %c0_32] : memref<2x17x17x16xf32, #tpu.memory_space<vmem>>, vector<2x17x1x16xf32>
    tpu.vector_store %arg13[%c0_29, %c0_30, %c16_31, %c0_32], %37 {strides = array<i32>} : memref<2x17x17x16xf32, #tpu.memory_space<vmem>>, vector<2x17x1x16xf32>,
    %c0_33 = arith.constant 0 : index
    %c0_34 = arith.constant 0 : index
    %c0_35 = arith.constant 0 : index
    %c0_36 = arith.constant 0 : index
    %39 = tpu.strided_load %arg13[%c0_33, %c0_34, %c0_35, %c0_36] {strides = array<i32: 1, 1, 2, 1>} : memref<2x17x17x16xf32, #tpu.memory_space<vmem>>, vector<2x17x8x16xf32>
    %c0_37 = arith.constant 0 : index
    %c0_38 = arith.constant 0 : index
    %c1 = arith.constant 1 : index
    %c0_39 = arith.constant 0 : index
    %40 = tpu.strided_load %arg13[%c0_37, %c0_38, %c1, %c0_39] {strides = array<i32: 1, 1, 2, 1>} : memref<2x17x17x16xf32, #tpu.memory_space<vmem>>, vector<2x17x8x16xf32>
    %c0_40 = arith.constant 0 : index
    %c0_41 = arith.constant 0 : index
    %c2 = arith.constant 2 : index
    %c0_42 = arith.constant 0 : index
    %41 = tpu.strided_load %arg13[%c0_40, %c0_41, %c2, %c0_42] {strides = array<i32: 1, 1, 2, 1>} : memref<2x17x17x16xf32, #tpu.memory_space<vmem>>, vector<2x17x8x16xf32>
    %42 = arith.maximumf %39, %40 : vector<2x17x8x16xf32>
    %43 = arith.maximumf %42, %41 : vector<2x17x8x16xf32>
    %44 = vector.extract_strided_slice %43 {offsets = [0, 0, 0, 0], sizes = [2, 1, 8, 16], strides = [1, 1, 1, 1]} : vector<2x17x8x16xf32> to vector<2x1x8x16xf32>
    %45 = vector.shape_cast %44 : vector<2x1x8x16xf32> to vector<2x8x16xf32>
    %46 = vector.extract_strided_slice %43 {offsets = [0, 1, 0, 0], sizes = [2, 1, 8, 16], strides = [1, 1, 1, 1]} : vector<2x17x8x16xf32> to vector<2x1x8x16xf32>
    %47 = vector.shape_cast %46 : vector<2x1x8x16xf32> to vector<2x8x16xf32>
    %48 = arith.maximumf %45, %47 : vector<2x8x16xf32>
    %49 = vector.extract_strided_slice %43 {offsets = [0, 2, 0, 0], sizes = [2, 1, 8, 16], strides = [1, 1, 1, 1]} : vector<2x17x8x16xf32> to vector<2x1x8x16xf32>
    %50 = vector.shape_cast %49 : vector<2x1x8x16xf32> to vector<2x8x16xf32>
    %51 = arith.maximumf %48, %50 : vector<2x8x16xf32>
    %52 = vector.extract_strided_slice %43 {offsets = [0, 2, 0, 0], sizes = [2, 1, 8, 16], strides = [1, 1, 1, 1]} : vector<2x17x8x16xf32> to vector<2x1x8x16xf32>
    %53 = vector.shape_cast %52 : vector<2x1x8x16xf32> to vector<2x8x16xf32>
    %54 = vector.extract_strided_slice %43 {offsets = [0, 3, 0, 0], sizes = [2, 1, 8, 16], strides = [1, 1, 1, 1]} : vector<2x17x8x16xf32> to vector<2x1x8x16xf32>
    %55 = vector.shape_cast %54 : vector<2x1x8x16xf32> to vector<2x8x16xf32>
    %56 = arith.maximumf %53, %55 : vector<2x8x16xf32>
    %57 = vector.extract_strided_slice %43 {offsets = [0, 4, 0, 0], sizes = [2, 1, 8, 16], strides = [1, 1, 1, 1]} : vector<2x17x8x16xf32> to vector<2x1x8x16xf32>
    %58 = vector.shape_cast %57 : vector<2x1x8x16xf32> to vector<2x8x16xf32>
    %59 = arith.maximumf %56, %58 : vector<2x8x16xf32>
    %60 = vector.extract_strided_slice %43 {offsets = [0, 4, 0, 0], sizes = [2, 1, 8, 16], strides = [1, 1, 1, 1]} : vector<2x17x8x16xf32> to vector<2x1x8x16xf32>
    %61 = vector.shape_cast %60 : vector<2x1x8x16xf32> to vector<2x8x16xf32>
    %62 = vector.extract_strided_slice %43 {offsets = [0, 5, 0, 0], sizes = [2, 1, 8, 16], strides = [1, 1, 1, 1]} : vector<2x17x8x16xf32> to vector<2x1x8x16xf32>
    %63 = vector.shape_cast %62 : vector<2x1x8x16xf32> to vector<2x8x16xf32>
    %64 = arith.maximumf %61, %63 : vector<2x8x16xf32>
    %65 = vector.extract_strided_slice %43 {offsets = [0, 6, 0, 0], sizes = [2, 1, 8, 16], strides = [1, 1, 1, 1]} : vector<2x17x8x16xf32> to vector<2x1x8x16xf32>
    %66 = vector.shape_cast %65 : vector<2x1x8x16xf32> to vector<2x8x16xf32>
    %67 = arith.maximumf %64, %66 : vector<2x8x16xf32>
    %68 = vector.extract_strided_slice %43 {offsets = [0, 6, 0, 0], sizes = [2, 1, 8, 16], strides = [1, 1, 1, 1]} : vector<2x17x8x16xf32> to vector<2x1x8x16xf32>
    %69 = vector.shape_cast %68 : vector<2x1x8x16xf32> to vector<2x8x16xf32>
    %70 = vector.extract_strided_slice %43 {offsets = [0, 7, 0, 0], sizes = [2, 1, 8, 16], strides = [1, 1, 1, 1]} : vector<2x17x8x16xf32> to vector<2x1x8x16xf32>
    %71 = vector.shape_cast %70 : vector<2x1x8x16xf32> to vector<2x8x16xf32>
    %72 = arith.maximumf %69, %71 : vector<2x8x16xf32>
    %73 = vector.extract_strided_slice %43 {offsets = [0, 8, 0, 0], sizes = [2, 1, 8, 16], strides = [1, 1, 1, 1]} : vector<2x17x8x16xf32> to vector<2x1x8x16xf32>
    %74 = vector.shape_cast %73 : vector<2x1x8x16xf32> to vector<2x8x16xf32>
    %75 = arith.maximumf %72, %74 : vector<2x8x16xf32>
    %76 = vector.extract_strided_slice %43 {offsets = [0, 8, 0, 0], sizes = [2, 1, 8, 16], strides = [1, 1, 1, 1]} : vector<2x17x8x16xf32> to vector<2x1x8x16xf32>
    %77 = vector.shape_cast %76 : vector<2x1x8x16xf32> to vector<2x8x16xf32>
    %78 = vector.extract_strided_slice %43 {offsets = [0, 9, 0, 0], sizes = [2, 1, 8, 16], strides = [1, 1, 1, 1]} : vector<2x17x8x16xf32> to vector<2x1x8x16xf32>
    %79 = vector.shape_cast %78 : vector<2x1x8x16xf32> to vector<2x8x16xf32>
    %80 = arith.maximumf %77, %79 : vector<2x8x16xf32>
    %81 = vector.extract_strided_slice %43 {offsets = [0, 10, 0, 0], sizes = [2, 1, 8, 16], strides = [1, 1, 1, 1]} : vector<2x17x8x16xf32> to vector<2x1x8x16xf32>
    %82 = vector.shape_cast %81 : vector<2x1x8x16xf32> to vector<2x8x16xf32>
    %83 = arith.maximumf %80, %82 : vector<2x8x16xf32>
    %84 = vector.extract_strided_slice %43 {offsets = [0, 10, 0, 0], sizes = [2, 1, 8, 16], strides = [1, 1, 1, 1]} : vector<2x17x8x16xf32> to vector<2x1x8x16xf32>
    %85 = vector.shape_cast %84 : vector<2x1x8x16xf32> to vector<2x8x16xf32>
    %86 = vector.extract_strided_slice %43 {offsets = [0, 11, 0, 0], sizes = [2, 1, 8, 16], strides = [1, 1, 1, 1]} : vector<2x17x8x16xf32> to vector<2x1x8x16xf32>
    %87 = vector.shape_cast %86 : vector<2x1x8x16xf32> to vector<2x8x16xf32>
    %88 = arith.maximumf %85, %87 : vector<2x8x16xf32>
    %89 = vector.extract_strided_slice %43 {offsets = [0, 12, 0, 0], sizes = [2, 1, 8, 16], strides = [1, 1, 1, 1]} : vector<2x17x8x16xf32> to vector<2x1x8x16xf32>
    %90 = vector.shape_cast %89 : vector<2x1x8x16xf32> to vector<2x8x16xf32>
    %91 = arith.maximumf %88, %90 : vector<2x8x16xf32>
    %92 = vector.extract_strided_slice %43 {offsets = [0, 12, 0, 0], sizes = [2, 1, 8, 16], strides = [1, 1, 1, 1]} : vector<2x17x8x16xf32> to vector<2x1x8x16xf32>
    %93 = vector.shape_cast %92 : vector<2x1x8x16xf32> to vector<2x8x16xf32>
    %94 = vector.extract_strided_slice %43 {offsets = [0, 13, 0, 0], sizes = [2, 1, 8, 16], strides = [1, 1, 1, 1]} : vector<2x17x8x16xf32> to vector<2x1x8x16xf32>
    %95 = vector.shape_cast %94 : vector<2x1x8x16xf32> to vector<2x8x16xf32>
    %96 = arith.maximumf %93, %95 : vector<2x8x16xf32>
    %97 = vector.extract_strided_slice %43 {offsets = [0, 14, 0, 0], sizes = [2, 1, 8, 16], strides = [1, 1, 1, 1]} : vector<2x17x8x16xf32> to vector<2x1x8x16xf32>
    %98 = vector.shape_cast %97 : vector<2x1x8x16xf32> to vector<2x8x16xf32>
    %99 = arith.maximumf %96, %98 : vector<2x8x16xf32>
    %100 = vector.extract_strided_slice %43 {offsets = [0, 14, 0, 0], sizes = [2, 1, 8, 16], strides = [1, 1, 1, 1]} : vector<2x17x8x16xf32> to vector<2x1x8x16xf32>
    %101 = vector.shape_cast %100 : vector<2x1x8x16xf32> to vector<2x8x16xf32>
    %102 = vector.extract_strided_slice %43 {offsets = [0, 15, 0, 0], sizes = [2, 1, 8, 16], strides = [1, 1, 1, 1]} : vector<2x17x8x16xf32> to vector<2x1x8x16xf32>
    %103 = vector.shape_cast %102 : vector<2x1x8x16xf32> to vector<2x8x16xf32>
    %104 = arith.maximumf %101, %103 : vector<2x8x16xf32>
    %105 = vector.extract_strided_slice %43 {offsets = [0, 16, 0, 0], sizes = [2, 1, 8, 16], strides = [1, 1, 1, 1]} : vector<2x17x8x16xf32> to vector<2x1x8x16xf32>
    %106 = vector.shape_cast %105 : vector<2x1x8x16xf32> to vector<2x8x16xf32>
    %107 = arith.maximumf %104, %106 : vector<2x8x16xf32>
    %108 = tpu.concatenate %51, %59, %67, %75, %83, %91, %99, %107 in 1 : vector<2x8x16xf32>, vector<2x8x16xf32>, vector<2x8x16xf32>, vector<2x8x16xf32>, vector<2x8x16xf32>, vector<2x8x16xf32>, vector<2x8x16xf32>, vector<2x8x16xf32> -> vector<2x64x16xf32>
    %109 = vector.shape_cast %108 : vector<2x64x16xf32> to vector<128x16xf32>
    %110 = arith.truncf %109 : vector<128x16xf32> to vector<128x16xbf16>
    %c0_43 = arith.constant 0 : index
    %c0_44 = arith.constant 0 : index
    %111 = vector.load %arg5[%c0_43, %c0_44] : memref<16x64xbf16, #tpu.memory_space<vmem>>, vector<16x64xbf16>
    %cst_45 = arith.constant dense<0.000000e+00> : vector<128x64xf32>
    %112 = tpu.matmul %110, %111, %cst_45 {dimension_numbers = #tpu.dot_dimension_numbers<[1], [0], [0], [1], [0, 0, 1, 1], [], []>} : vector<128x16xbf16>, vector<16x64xbf16>, vector<128x64xf32> -> vector<128x64xf32>
    %c0_46 = arith.constant 0 : index
    %c0_47 = arith.constant 0 : index
    %113 = vector.load %arg6[%c0_46, %c0_47] : memref<1x64xf32, #tpu.memory_space<vmem>>, vector<1x64xf32>
    %c0_48 = arith.constant 0 : index
    %c0_49 = arith.constant 0 : index
    %114 = vector.load %arg7[%c0_48, %c0_49] : memref<1x64xf32, #tpu.memory_space<vmem>>, vector<1x64xf32>
    %cst_50 = arith.constant dense<0.000000e+00> : vector<64xf32>
    %115 = vector.multi_reduction <add>, %112, %cst_50 [0] : vector<128x64xf32> to vector<64xf32>
    %116 = vector.shape_cast %115 : vector<64xf32> to vector<1x64xf32>
    %117 = arith.mulf %112, %112 : vector<128x64xf32>
    %cst_51 = arith.constant dense<0.000000e+00> : vector<64xf32>
    %118 = vector.multi_reduction <add>, %117, %cst_51 [0] : vector<128x64xf32> to vector<64xf32>
    %119 = vector.shape_cast %118 : vector<64xf32> to vector<1x64xf32>
    %cst_52 = arith.constant 7.812500e-03 : f32
    %120 = vector.broadcast %cst_52 : f32 to vector<1x64xf32>
    %121 = arith.mulf %116, %120 : vector<1x64xf32>
    %cst_53 = arith.constant 7.812500e-03 : f32
    %122 = vector.broadcast %cst_53 : f32 to vector<1x64xf32>
    %123 = arith.mulf %119, %122 : vector<1x64xf32>
    %124 = arith.mulf %121, %121 : vector<1x64xf32>
    %125 = arith.subf %123, %124 : vector<1x64xf32>
    %cst_54 = arith.constant 0.000000e+00 : f32
    %126 = vector.broadcast %cst_54 : f32 to vector<1x64xf32>
    %127 = arith.maximumf %125, %126 : vector<1x64xf32>
    %cst_55 = arith.constant 1.000000e-03 : f32
    %128 = vector.broadcast %cst_55 : f32 to vector<1x64xf32>
    %129 = arith.addf %127, %128 : vector<1x64xf32>
    %130 = math.rsqrt %129 : vector<1x64xf32>
    %131 = arith.mulf %113, %130 : vector<1x64xf32>
    %132 = arith.mulf %121, %131 : vector<1x64xf32>
    %133 = arith.subf %114, %132 : vector<1x64xf32>
    %134 = vector.broadcast %131 : vector<1x64xf32> to vector<128x64xf32>
    %135 = arith.mulf %112, %134 : vector<128x64xf32>
    %136 = vector.broadcast %133 : vector<1x64xf32> to vector<128x64xf32>
    %137 = arith.addf %135, %136 : vector<128x64xf32>
    %cst_56 = arith.constant 0.000000e+00 : f32
    %138 = vector.broadcast %cst_56 : f32 to vector<128x64xf32>
    %139 = arith.maximumf %137, %138 : vector<128x64xf32>
    %140 = vector.shape_cast %139 : vector<128x64xf32> to vector<2x8x8x64xf32>
    %c0_57 = arith.constant 0 : index
    %c1_58 = arith.constant 1 : index
    %c1_59 = arith.constant 1 : index
    %c0_60 = arith.constant 0 : index
    %141 = vector.load %arg14[%c0_57, %c1_58, %c1_59, %c0_60] : memref<2x10x10x64xf32, #tpu.memory_space<vmem>>, vector<2x8x8x64xf32>
    tpu.vector_store %arg14[%c0_57, %c1_58, %c1_59, %c0_60], %140 {strides = array<i32>} : memref<2x10x10x64xf32, #tpu.memory_space<vmem>>, vector<2x8x8x64xf32>,
    %cst_61 = arith.constant 0.000000e+00 : f32
    %142 = vector.broadcast %cst_61 : f32 to vector<2x1x10x64xf32>
    %c0_62 = arith.constant 0 : index
    %c0_63 = arith.constant 0 : index
    %c0_64 = arith.constant 0 : index
    %c0_65 = arith.constant 0 : index
    %143 = vector.load %arg14[%c0_62, %c0_63, %c0_64, %c0_65] : memref<2x10x10x64xf32, #tpu.memory_space<vmem>>, vector<2x1x10x64xf32>
    tpu.vector_store %arg14[%c0_62, %c0_63, %c0_64, %c0_65], %142 {strides = array<i32>} : memref<2x10x10x64xf32, #tpu.memory_space<vmem>>, vector<2x1x10x64xf32>,
    %cst_66 = arith.constant 0.000000e+00 : f32
    %144 = vector.broadcast %cst_66 : f32 to vector<2x1x10x64xf32>
    %c0_67 = arith.constant 0 : index
    %c9 = arith.constant 9 : index
    %c0_68 = arith.constant 0 : index
    %c0_69 = arith.constant 0 : index
    %145 = vector.load %arg14[%c0_67, %c9, %c0_68, %c0_69] : memref<2x10x10x64xf32, #tpu.memory_space<vmem>>, vector<2x1x10x64xf32>
    tpu.vector_store %arg14[%c0_67, %c9, %c0_68, %c0_69], %144 {strides = array<i32>} : memref<2x10x10x64xf32, #tpu.memory_space<vmem>>, vector<2x1x10x64xf32>,
    %cst_70 = arith.constant 0.000000e+00 : f32
    %146 = vector.broadcast %cst_70 : f32 to vector<2x10x1x64xf32>
    %c0_71 = arith.constant 0 : index
    %c0_72 = arith.constant 0 : index
    %c0_73 = arith.constant 0 : index
    %c0_74 = arith.constant 0 : index
    %147 = vector.load %arg14[%c0_71, %c0_72, %c0_73, %c0_74] : memref<2x10x10x64xf32, #tpu.memory_space<vmem>>, vector<2x10x1x64xf32>
    tpu.vector_store %arg14[%c0_71, %c0_72, %c0_73, %c0_74], %146 {strides = array<i32>} : memref<2x10x10x64xf32, #tpu.memory_space<vmem>>, vector<2x10x1x64xf32>,
    %cst_75 = arith.constant 0.000000e+00 : f32
    %148 = vector.broadcast %cst_75 : f32 to vector<2x10x1x64xf32>
    %c0_76 = arith.constant 0 : index
    %c0_77 = arith.constant 0 : index
    %c9_78 = arith.constant 9 : index
    %c0_79 = arith.constant 0 : index
    %149 = vector.load %arg14[%c0_76, %c0_77, %c9_78, %c0_79] : memref<2x10x10x64xf32, #tpu.memory_space<vmem>>, vector<2x10x1x64xf32>
    tpu.vector_store %arg14[%c0_76, %c0_77, %c9_78, %c0_79], %148 {strides = array<i32>} : memref<2x10x10x64xf32, #tpu.memory_space<vmem>>, vector<2x10x1x64xf32>,
    %c0_80 = arith.constant 0 : index
    %c0_81 = arith.constant 0 : index
    %c0_82 = arith.constant 0 : index
    %c0_83 = arith.constant 0 : index
    %150 = vector.load %arg14[%c0_80, %c0_81, %c0_82, %c0_83] : memref<2x10x10x64xf32, #tpu.memory_space<vmem>>, vector<2x8x8x64xf32>
    %151 = vector.shape_cast %150 : vector<2x8x8x64xf32> to vector<128x64xf32>
    %152 = arith.truncf %151 : vector<128x64xf32> to vector<128x64xbf16>
    %c0_84 = arith.constant 0 : index
    %c0_85 = arith.constant 0 : index
    %153 = vector.load %arg15[%c0_84, %c0_85] : memref<128x576xbf16, #tpu.memory_space<vmem>>, vector<128x64xbf16>
    tpu.vector_store %arg15[%c0_84, %c0_85], %152 {strides = array<i32>} : memref<128x576xbf16, #tpu.memory_space<vmem>>, vector<128x64xbf16>,
    %c0_86 = arith.constant 0 : index
    %c0_87 = arith.constant 0 : index
    %c1_88 = arith.constant 1 : index
    %c0_89 = arith.constant 0 : index
    %154 = vector.load %arg14[%c0_86, %c0_87, %c1_88, %c0_89] : memref<2x10x10x64xf32, #tpu.memory_space<vmem>>, vector<2x8x8x64xf32>
    %155 = vector.shape_cast %154 : vector<2x8x8x64xf32> to vector<128x64xf32>
    %156 = arith.truncf %155 : vector<128x64xf32> to vector<128x64xbf16>
    %c0_90 = arith.constant 0 : index
    %c64 = arith.constant 64 : index
    %157 = vector.load %arg15[%c0_90, %c64] : memref<128x576xbf16, #tpu.memory_space<vmem>>, vector<128x64xbf16>
    tpu.vector_store %arg15[%c0_90, %c64], %156 {strides = array<i32>} : memref<128x576xbf16, #tpu.memory_space<vmem>>, vector<128x64xbf16>,
    %c0_91 = arith.constant 0 : index
    %c0_92 = arith.constant 0 : index
    %c2_93 = arith.constant 2 : index
    %c0_94 = arith.constant 0 : index
    %158 = vector.load %arg14[%c0_91, %c0_92, %c2_93, %c0_94] : memref<2x10x10x64xf32, #tpu.memory_space<vmem>>, vector<2x8x8x64xf32>
    %159 = vector.shape_cast %158 : vector<2x8x8x64xf32> to vector<128x64xf32>
    %160 = arith.truncf %159 : vector<128x64xf32> to vector<128x64xbf16>
    %c0_95 = arith.constant 0 : index
    %c128 = arith.constant 128 : index
    %161 = vector.load %arg15[%c0_95, %c128] : memref<128x576xbf16, #tpu.memory_space<vmem>>, vector<128x64xbf16>
    tpu.vector_store %arg15[%c0_95, %c128], %160 {strides = array<i32>} : memref<128x576xbf16, #tpu.memory_space<vmem>>, vector<128x64xbf16>,
    %c0_96 = arith.constant 0 : index
    %c1_97 = arith.constant 1 : index
    %c0_98 = arith.constant 0 : index
    %c0_99 = arith.constant 0 : index
    %162 = vector.load %arg14[%c0_96, %c1_97, %c0_98, %c0_99] : memref<2x10x10x64xf32, #tpu.memory_space<vmem>>, vector<2x8x8x64xf32>
    %163 = vector.shape_cast %162 : vector<2x8x8x64xf32> to vector<128x64xf32>
    %164 = arith.truncf %163 : vector<128x64xf32> to vector<128x64xbf16>
    %c0_100 = arith.constant 0 : index
    %c192 = arith.constant 192 : index
    %165 = vector.load %arg15[%c0_100, %c192] : memref<128x576xbf16, #tpu.memory_space<vmem>>, vector<128x64xbf16>
    tpu.vector_store %arg15[%c0_100, %c192], %164 {strides = array<i32>} : memref<128x576xbf16, #tpu.memory_space<vmem>>, vector<128x64xbf16>,
    %c0_101 = arith.constant 0 : index
    %c1_102 = arith.constant 1 : index
    %c1_103 = arith.constant 1 : index
    %c0_104 = arith.constant 0 : index
    %166 = vector.load %arg14[%c0_101, %c1_102, %c1_103, %c0_104] : memref<2x10x10x64xf32, #tpu.memory_space<vmem>>, vector<2x8x8x64xf32>
    %167 = vector.shape_cast %166 : vector<2x8x8x64xf32> to vector<128x64xf32>
    %168 = arith.truncf %167 : vector<128x64xf32> to vector<128x64xbf16>
    %c0_105 = arith.constant 0 : index
    %c256 = arith.constant 256 : index
    %169 = vector.load %arg15[%c0_105, %c256] : memref<128x576xbf16, #tpu.memory_space<vmem>>, vector<128x64xbf16>
    tpu.vector_store %arg15[%c0_105, %c256], %168 {strides = array<i32>} : memref<128x576xbf16, #tpu.memory_space<vmem>>, vector<128x64xbf16>,
    %c0_106 = arith.constant 0 : index
    %c1_107 = arith.constant 1 : index
    %c2_108 = arith.constant 2 : index
    %c0_109 = arith.constant 0 : index
    %170 = vector.load %arg14[%c0_106, %c1_107, %c2_108, %c0_109] : memref<2x10x10x64xf32, #tpu.memory_space<vmem>>, vector<2x8x8x64xf32>
    %171 = vector.shape_cast %170 : vector<2x8x8x64xf32> to vector<128x64xf32>
    %172 = arith.truncf %171 : vector<128x64xf32> to vector<128x64xbf16>
    %c0_110 = arith.constant 0 : index
    %c320 = arith.constant 320 : index
    %173 = vector.load %arg15[%c0_110, %c320] : memref<128x576xbf16, #tpu.memory_space<vmem>>, vector<128x64xbf16>
    tpu.vector_store %arg15[%c0_110, %c320], %172 {strides = array<i32>} : memref<128x576xbf16, #tpu.memory_space<vmem>>, vector<128x64xbf16>,
    %c0_111 = arith.constant 0 : index
    %c2_112 = arith.constant 2 : index
    %c0_113 = arith.constant 0 : index
    %c0_114 = arith.constant 0 : index
    %174 = vector.load %arg14[%c0_111, %c2_112, %c0_113, %c0_114] : memref<2x10x10x64xf32, #tpu.memory_space<vmem>>, vector<2x8x8x64xf32>
    %175 = vector.shape_cast %174 : vector<2x8x8x64xf32> to vector<128x64xf32>
    %176 = arith.truncf %175 : vector<128x64xf32> to vector<128x64xbf16>
    %c0_115 = arith.constant 0 : index
    %c384 = arith.constant 384 : index
    %177 = vector.load %arg15[%c0_115, %c384] : memref<128x576xbf16, #tpu.memory_space<vmem>>, vector<128x64xbf16>
    tpu.vector_store %arg15[%c0_115, %c384], %176 {strides = array<i32>} : memref<128x576xbf16, #tpu.memory_space<vmem>>, vector<128x64xbf16>,
    %c0_116 = arith.constant 0 : index
    %c2_117 = arith.constant 2 : index
    %c1_118 = arith.constant 1 : index
    %c0_119 = arith.constant 0 : index
    %178 = vector.load %arg14[%c0_116, %c2_117, %c1_118, %c0_119] : memref<2x10x10x64xf32, #tpu.memory_space<vmem>>, vector<2x8x8x64xf32>
    %179 = vector.shape_cast %178 : vector<2x8x8x64xf32> to vector<128x64xf32>
    %180 = arith.truncf %179 : vector<128x64xf32> to vector<128x64xbf16>
    %c0_120 = arith.constant 0 : index
    %c448 = arith.constant 448 : index
    %181 = vector.load %arg15[%c0_120, %c448] : memref<128x576xbf16, #tpu.memory_space<vmem>>, vector<128x64xbf16>
    tpu.vector_store %arg15[%c0_120, %c448], %180 {strides = array<i32>} : memref<128x576xbf16, #tpu.memory_space<vmem>>, vector<128x64xbf16>,
    %c0_121 = arith.constant 0 : index
    %c2_122 = arith.constant 2 : index
    %c2_123 = arith.constant 2 : index
    %c0_124 = arith.constant 0 : index
    %182 = vector.load %arg14[%c0_121, %c2_122, %c2_123, %c0_124] : memref<2x10x10x64xf32, #tpu.memory_space<vmem>>, vector<2x8x8x64xf32>
    %183 = vector.shape_cast %182 : vector<2x8x8x64xf32> to vector<128x64xf32>
    %184 = arith.truncf %183 : vector<128x64xf32> to vector<128x64xbf16>
    %c0_125 = arith.constant 0 : index
    %c512 = arith.constant 512 : index
    %185 = vector.load %arg15[%c0_125, %c512] : memref<128x576xbf16, #tpu.memory_space<vmem>>, vector<128x64xbf16>
    tpu.vector_store %arg15[%c0_125, %c512], %184 {strides = array<i32>} : memref<128x576xbf16, #tpu.memory_space<vmem>>, vector<128x64xbf16>,
    %c0_126 = arith.constant 0 : index
    %c0_127 = arith.constant 0 : index
    %186 = vector.load %arg15[%c0_126, %c0_127] : memref<128x576xbf16, #tpu.memory_space<vmem>>, vector<128x576xbf16>
    %c0_128 = arith.constant 0 : index
    %c0_129 = arith.constant 0 : index
    %187 = vector.load %arg8[%c0_128, %c0_129] : memref<576x128xbf16, #tpu.memory_space<vmem>>, vector<576x128xbf16>
    %cst_130 = arith.constant dense<0.000000e+00> : vector<128x128xf32>
    %188 = tpu.matmul %186, %187, %cst_130 {dimension_numbers = #tpu.dot_dimension_numbers<[1], [0], [0], [1], [0, 0, 1, 1], [], []>} : vector<128x576xbf16>, vector<576x128xbf16>, vector<128x128xf32> -> vector<128x128xf32>
    %c0_131 = arith.constant 0 : index
    %c0_132 = arith.constant 0 : index
    %189 = vector.load %arg9[%c0_131, %c0_132] : memref<1x128xf32, #tpu.memory_space<vmem>>, vector<1x128xf32>
    %c0_133 = arith.constant 0 : index
    %c0_134 = arith.constant 0 : index
    %190 = vector.load %arg10[%c0_133, %c0_134] : memref<1x128xf32, #tpu.memory_space<vmem>>, vector<1x128xf32>
    %cst_135 = arith.constant dense<0.000000e+00> : vector<128xf32>
    %191 = vector.multi_reduction <add>, %188, %cst_135 [0] : vector<128x128xf32> to vector<128xf32>
    %192 = vector.shape_cast %191 : vector<128xf32> to vector<1x128xf32>
    %193 = arith.mulf %188, %188 : vector<128x128xf32>
    %cst_136 = arith.constant dense<0.000000e+00> : vector<128xf32>
    %194 = vector.multi_reduction <add>, %193, %cst_136 [0] : vector<128x128xf32> to vector<128xf32>
    %195 = vector.shape_cast %194 : vector<128xf32> to vector<1x128xf32>
    %cst_137 = arith.constant 7.812500e-03 : f32
    %196 = vector.broadcast %cst_137 : f32 to vector<1x128xf32>
    %197 = arith.mulf %192, %196 : vector<1x128xf32>
    %cst_138 = arith.constant 7.812500e-03 : f32
    %198 = vector.broadcast %cst_138 : f32 to vector<1x128xf32>
    %199 = arith.mulf %195, %198 : vector<1x128xf32>
    %200 = arith.mulf %197, %197 : vector<1x128xf32>
    %201 = arith.subf %199, %200 : vector<1x128xf32>
    %cst_139 = arith.constant 0.000000e+00 : f32
    %202 = vector.broadcast %cst_139 : f32 to vector<1x128xf32>
    %203 = arith.maximumf %201, %202 : vector<1x128xf32>
    %cst_140 = arith.constant 1.000000e-03 : f32
    %204 = vector.broadcast %cst_140 : f32 to vector<1x128xf32>
    %205 = arith.addf %203, %204 : vector<1x128xf32>
    %206 = math.rsqrt %205 : vector<1x128xf32>
    %207 = arith.mulf %189, %206 : vector<1x128xf32>
    %208 = arith.mulf %197, %207 : vector<1x128xf32>
    %209 = arith.subf %190, %208 : vector<1x128xf32>
    %210 = vector.broadcast %207 : vector<1x128xf32> to vector<128x128xf32>
    %211 = arith.mulf %188, %210 : vector<128x128xf32>
    %212 = vector.broadcast %209 : vector<1x128xf32> to vector<128x128xf32>
    %213 = arith.addf %211, %212 : vector<128x128xf32>
    %cst_141 = arith.constant 0.000000e+00 : f32
    %214 = vector.broadcast %cst_141 : f32 to vector<128x128xf32>
    %215 = arith.maximumf %213, %214 : vector<128x128xf32>
    %216 = vector.shape_cast %215 : vector<128x128xf32> to vector<2x8x8x128xf32>
    %c0_142 = arith.constant 0 : index
    %c0_143 = arith.constant 0 : index
    %c0_144 = arith.constant 0 : index
    %c0_145 = arith.constant 0 : index
    %217 = vector.load %arg16[%c0_142, %c0_143, %c0_144, %c0_145] : memref<2x9x9x128xf32, #tpu.memory_space<vmem>>, vector<2x8x8x128xf32>
    tpu.vector_store %arg16[%c0_142, %c0_143, %c0_144, %c0_145], %216 {strides = array<i32>} : memref<2x9x9x128xf32, #tpu.memory_space<vmem>>, vector<2x8x8x128xf32>,
    %cst_146 = arith.constant 0.000000e+00 : f32
    %218 = vector.broadcast %cst_146 : f32 to vector<2x1x9x128xf32>
    %c0_147 = arith.constant 0 : index
    %c8 = arith.constant 8 : index
    %c0_148 = arith.constant 0 : index
    %c0_149 = arith.constant 0 : index
    %219 = vector.load %arg16[%c0_147, %c8, %c0_148, %c0_149] : memref<2x9x9x128xf32, #tpu.memory_space<vmem>>, vector<2x1x9x128xf32>
    tpu.vector_store %arg16[%c0_147, %c8, %c0_148, %c0_149], %218 {strides = array<i32>} : memref<2x9x9x128xf32, #tpu.memory_space<vmem>>, vector<2x1x9x128xf32>,
    %cst_150 = arith.constant 0.000000e+00 : f32
    %220 = vector.broadcast %cst_150 : f32 to vector<2x9x1x128xf32>
    %c0_151 = arith.constant 0 : index
    %c0_152 = arith.constant 0 : index
    %c8_153 = arith.constant 8 : index
    %c0_154 = arith.constant 0 : index
    %221 = vector.load %arg16[%c0_151, %c0_152, %c8_153, %c0_154] : memref<2x9x9x128xf32, #tpu.memory_space<vmem>>, vector<2x9x1x128xf32>
    tpu.vector_store %arg16[%c0_151, %c0_152, %c8_153, %c0_154], %220 {strides = array<i32>} : memref<2x9x9x128xf32, #tpu.memory_space<vmem>>, vector<2x9x1x128xf32>,
    %c0_155 = arith.constant 0 : index
    %c0_156 = arith.constant 0 : index
    %c0_157 = arith.constant 0 : index
    %c0_158 = arith.constant 0 : index
    %222 = tpu.strided_load %arg16[%c0_155, %c0_156, %c0_157, %c0_158] {strides = array<i32: 1, 1, 2, 1>} : memref<2x9x9x128xf32, #tpu.memory_space<vmem>>, vector<2x9x4x128xf32>
    %c0_159 = arith.constant 0 : index
    %c0_160 = arith.constant 0 : index
    %c1_161 = arith.constant 1 : index
    %c0_162 = arith.constant 0 : index
    %223 = tpu.strided_load %arg16[%c0_159, %c0_160, %c1_161, %c0_162] {strides = array<i32: 1, 1, 2, 1>} : memref<2x9x9x128xf32, #tpu.memory_space<vmem>>, vector<2x9x4x128xf32>
    %c0_163 = arith.constant 0 : index
    %c0_164 = arith.constant 0 : index
    %c2_165 = arith.constant 2 : index
    %c0_166 = arith.constant 0 : index
    %224 = tpu.strided_load %arg16[%c0_163, %c0_164, %c2_165, %c0_166] {strides = array<i32: 1, 1, 2, 1>} : memref<2x9x9x128xf32, #tpu.memory_space<vmem>>, vector<2x9x4x128xf32>
    %225 = arith.maximumf %222, %223 : vector<2x9x4x128xf32>
    %226 = arith.maximumf %225, %224 : vector<2x9x4x128xf32>
    %227 = vector.extract_strided_slice %226 {offsets = [0, 0, 0, 0], sizes = [2, 1, 4, 128], strides = [1, 1, 1, 1]} : vector<2x9x4x128xf32> to vector<2x1x4x128xf32>
    %228 = vector.shape_cast %227 : vector<2x1x4x128xf32> to vector<2x4x128xf32>
    %229 = vector.extract_strided_slice %226 {offsets = [0, 1, 0, 0], sizes = [2, 1, 4, 128], strides = [1, 1, 1, 1]} : vector<2x9x4x128xf32> to vector<2x1x4x128xf32>
    %230 = vector.shape_cast %229 : vector<2x1x4x128xf32> to vector<2x4x128xf32>
    %231 = arith.maximumf %228, %230 : vector<2x4x128xf32>
    %232 = vector.extract_strided_slice %226 {offsets = [0, 2, 0, 0], sizes = [2, 1, 4, 128], strides = [1, 1, 1, 1]} : vector<2x9x4x128xf32> to vector<2x1x4x128xf32>
    %233 = vector.shape_cast %232 : vector<2x1x4x128xf32> to vector<2x4x128xf32>
    %234 = arith.maximumf %231, %233 : vector<2x4x128xf32>
    %235 = vector.extract_strided_slice %226 {offsets = [0, 2, 0, 0], sizes = [2, 1, 4, 128], strides = [1, 1, 1, 1]} : vector<2x9x4x128xf32> to vector<2x1x4x128xf32>
    %236 = vector.shape_cast %235 : vector<2x1x4x128xf32> to vector<2x4x128xf32>
    %237 = vector.extract_strided_slice %226 {offsets = [0, 3, 0, 0], sizes = [2, 1, 4, 128], strides = [1, 1, 1, 1]} : vector<2x9x4x128xf32> to vector<2x1x4x128xf32>
    %238 = vector.shape_cast %237 : vector<2x1x4x128xf32> to vector<2x4x128xf32>
    %239 = arith.maximumf %236, %238 : vector<2x4x128xf32>
    %240 = vector.extract_strided_slice %226 {offsets = [0, 4, 0, 0], sizes = [2, 1, 4, 128], strides = [1, 1, 1, 1]} : vector<2x9x4x128xf32> to vector<2x1x4x128xf32>
    %241 = vector.shape_cast %240 : vector<2x1x4x128xf32> to vector<2x4x128xf32>
    %242 = arith.maximumf %239, %241 : vector<2x4x128xf32>
    %243 = vector.extract_strided_slice %226 {offsets = [0, 4, 0, 0], sizes = [2, 1, 4, 128], strides = [1, 1, 1, 1]} : vector<2x9x4x128xf32> to vector<2x1x4x128xf32>
    %244 = vector.shape_cast %243 : vector<2x1x4x128xf32> to vector<2x4x128xf32>
    %245 = vector.extract_strided_slice %226 {offsets = [0, 5, 0, 0], sizes = [2, 1, 4, 128], strides = [1, 1, 1, 1]} : vector<2x9x4x128xf32> to vector<2x1x4x128xf32>
    %246 = vector.shape_cast %245 : vector<2x1x4x128xf32> to vector<2x4x128xf32>
    %247 = arith.maximumf %244, %246 : vector<2x4x128xf32>
    %248 = vector.extract_strided_slice %226 {offsets = [0, 6, 0, 0], sizes = [2, 1, 4, 128], strides = [1, 1, 1, 1]} : vector<2x9x4x128xf32> to vector<2x1x4x128xf32>
    %249 = vector.shape_cast %248 : vector<2x1x4x128xf32> to vector<2x4x128xf32>
    %250 = arith.maximumf %247, %249 : vector<2x4x128xf32>
    %251 = vector.extract_strided_slice %226 {offsets = [0, 6, 0, 0], sizes = [2, 1, 4, 128], strides = [1, 1, 1, 1]} : vector<2x9x4x128xf32> to vector<2x1x4x128xf32>
    %252 = vector.shape_cast %251 : vector<2x1x4x128xf32> to vector<2x4x128xf32>
    %253 = vector.extract_strided_slice %226 {offsets = [0, 7, 0, 0], sizes = [2, 1, 4, 128], strides = [1, 1, 1, 1]} : vector<2x9x4x128xf32> to vector<2x1x4x128xf32>
    %254 = vector.shape_cast %253 : vector<2x1x4x128xf32> to vector<2x4x128xf32>
    %255 = arith.maximumf %252, %254 : vector<2x4x128xf32>
    %256 = vector.extract_strided_slice %226 {offsets = [0, 8, 0, 0], sizes = [2, 1, 4, 128], strides = [1, 1, 1, 1]} : vector<2x9x4x128xf32> to vector<2x1x4x128xf32>
    %257 = vector.shape_cast %256 : vector<2x1x4x128xf32> to vector<2x4x128xf32>
    %258 = arith.maximumf %255, %257 : vector<2x4x128xf32>
    %259 = tpu.concatenate %234, %242, %250, %258 in 1 : vector<2x4x128xf32>, vector<2x4x128xf32>, vector<2x4x128xf32>, vector<2x4x128xf32> -> vector<2x16x128xf32>
    %c0_167 = arith.constant 0 : index
    %c0_168 = arith.constant 0 : index
    %c0_169 = arith.constant 0 : index
    %260 = vector.load %arg11[%c0_167, %c0_168, %c0_169] : memref<2x16x128xf32, #tpu.memory_space<vmem>>, vector<2x16x128xf32>
    tpu.vector_store %arg11[%c0_167, %c0_168, %c0_169], %259 {strides = array<i32>} : memref<2x16x128xf32, #tpu.memory_space<vmem>>, vector<2x16x128xf32>,
    return
  }
  func.func @transform_0(%arg0: i32) -> (i32, i32) {
    %c0_i32 = arith.constant 0 : i32
    %c0_i32_0 = arith.constant 0 : i32
    %c0_i32_1 = arith.constant 0 : i32
    return %c0_i32, %c0_i32_0 : i32, i32
  }
  func.func @transform_1(%arg0: i32) -> (i32, i32) {
    %c0_i32 = arith.constant 0 : i32
    %c0_i32_0 = arith.constant 0 : i32
    %c0_i32_1 = arith.constant 0 : i32
    return %c0_i32, %c0_i32_0 : i32, i32
  }
  func.func @transform_2(%arg0: i32) -> (i32, i32) {
    %c0_i32 = arith.constant 0 : i32
    %c0_i32_0 = arith.constant 0 : i32
    %c0_i32_1 = arith.constant 0 : i32
    return %c0_i32, %c0_i32_0 : i32, i32
  }
  func.func @transform_3(%arg0: i32) -> (i32, i32) {
    %c0_i32 = arith.constant 0 : i32
    %c0_i32_0 = arith.constant 0 : i32
    %c0_i32_1 = arith.constant 0 : i32
    return %c0_i32, %c0_i32_0 : i32, i32
  }
  func.func @transform_4(%arg0: i32) -> (i32, i32) {
    %c0_i32 = arith.constant 0 : i32
    %c0_i32_0 = arith.constant 0 : i32
    %c0_i32_1 = arith.constant 0 : i32
    return %c0_i32, %c0_i32_0 : i32, i32
  }
  func.func @transform_5(%arg0: i32) -> (i32, i32) {
    %c0_i32 = arith.constant 0 : i32
    %c0_i32_0 = arith.constant 0 : i32
    %c0_i32_1 = arith.constant 0 : i32
    return %c0_i32, %c0_i32_0 : i32, i32
  }
  func.func @transform_6(%arg0: i32) -> (i32, i32) {
    %c0_i32 = arith.constant 0 : i32
    %c0_i32_0 = arith.constant 0 : i32
    %c0_i32_1 = arith.constant 0 : i32
    return %c0_i32, %c0_i32_0 : i32, i32
  }
  func.func @transform_7(%arg0: i32) -> (i32, i32) {
    %c0_i32 = arith.constant 0 : i32
    %c0_i32_0 = arith.constant 0 : i32
    %c0_i32_1 = arith.constant 0 : i32
    return %c0_i32, %c0_i32_0 : i32, i32
  }
  func.func @transform_8(%arg0: i32) -> (i32, i32) {
    %c0_i32 = arith.constant 0 : i32
    %c0_i32_0 = arith.constant 0 : i32
    %c0_i32_1 = arith.constant 0 : i32
    return %c0_i32, %c0_i32_0 : i32, i32
  }
  func.func @transform_9(%arg0: i32) -> (i32, i32) {
    %c0_i32 = arith.constant 0 : i32
    %c0_i32_0 = arith.constant 0 : i32
    %c0_i32_1 = arith.constant 0 : i32
    return %c0_i32, %c0_i32_0 : i32, i32
  }
  func.func @transform_10(%arg0: i32) -> (i32, i32, i32) {
    %c0_i32 = arith.constant 0 : i32
    %c0_i32_0 = arith.constant 0 : i32
    %c0_i32_1 = arith.constant 0 : i32
    %c0_i32_2 = arith.constant 0 : i32
    return %c0_i32, %c0_i32_0, %c0_i32_1 : i32, i32, i32
  }
}

</mosaic_0001>

<llo_original>
// kernel: googlenet_cifar10_forward.1
$region0: #{googlenet_cifar10_forward.1}
  #allocation0 [shape = 'u32[]', space=smem, size = 0x4, offset = 0x4, fixed_abs, tag = 'smem constant byte address 0x4 - core index']
  #allocation1 [shape = 'u32[144,128]{1,0:T(1,128)}', space=vmem, size = 0x12000, scoped, tag = 'internal scratch']
  #allocation2 [shape = 'f32[512,16]{1,0:T(8,128)}', space=vmem, size = 0x40000, scoped, tag = 'scratch operand']
  #allocation3 [shape = 'f32[2,17,17,16]{3,2,1,0:T(8,128)}', space=vmem, size = 0x66000, scoped, tag = 'scratch operand']
  #allocation4 [shape = 'f32[2,10,10,64]{3,2,1,0:T(8,128)}', space=vmem, size = 0x28000, scoped, tag = 'scratch operand']
  #allocation5 [shape = 'bf16[128,576]{1,0:T(16,128)(2,1)}', space=vmem, size = 0x28000, scoped, tag = 'scratch operand']
  #allocation6 [shape = 'f32[2,9,9,128]{3,2,1,0:T(8,128)}', space=vmem, size = 0x24000, scoped, tag = 'scratch operand']
  %s0 = inlined_call_operand.vmem [shape: bf16[512,128], index: 0, kind: input, shape index: {}]
  %s1 = inlined_call_operand.vmem [shape: bf16[128,16], index: 1, kind: input, shape index: {}]
  %s2 = inlined_call_operand.vmem [shape: f32[1,16], index: 2, kind: input, shape index: {}]
  %s3 = inlined_call_operand.vmem [shape: f32[1,16], index: 3, kind: input, shape index: {}]
  %s4 = inlined_call_operand.vmem [shape: bf16[16,64], index: 4, kind: input, shape index: {}]
  %s5 = inlined_call_operand.vmem [shape: f32[1,64], index: 5, kind: input, shape index: {}]
  %s6 = inlined_call_operand.vmem [shape: f32[1,64], index: 6, kind: input, shape index: {}]
  %s7 = inlined_call_operand.vmem [shape: bf16[576,128], index: 7, kind: input, shape index: {}]
  %s8 = inlined_call_operand.vmem [shape: f32[1,128], index: 8, kind: input, shape index: {}]
  %s9 = inlined_call_operand.vmem [shape: f32[1,128], index: 9, kind: input, shape index: {}]
  %s10 = inlined_call_operand.hbm [shape: f32[2,16,128], index: 10, kind: output, shape index: {}]
  %s11 = sld [smem:[#allocation0]]
  $region50: #{googlenet_cifar10_forward.1} parent=0
    _
  %s13 = ssub.s32 1, %s11
  %s14 = scalar_select 0, %s13, %s11
  $region1: #{googlenet_cifar10_forward.1} parent=0
    #allocation7 [shape = 'u8[16384]{0}', space=vmem, size = 0x4000, scoped, tag = 'output window, operand 0, single buffered']
    #allocation8 [shape = 's32[1]{0}', space=sflag, size = 0x4, scoped, tag = 'scoped memory for googlenet_cifar10_forward.1']
    %15 = vsyncpa [#allocation8], 0
    // Predicated region
    $region2: #{googlenet_cifar10_forward.1} parent=1 // pred_check
      _
    $region3: #{googlenet_cifar10_forward.1} parent=1 // pred_check_branch
      %17 = sbr.rel (0) target = $region5
    $region4: #{googlenet_cifar10_forward.1} parent=1 // pred_region
      _
    $region5: #{googlenet_cifar10_forward.1} parent=1 // pred_fallthru
      _
    // Predicated region
    $region6: #{googlenet_cifar10_forward.1} parent=1 // pred_check
      _
    $region7: #{googlenet_cifar10_forward.1} parent=1 // pred_check_branch
      %19 = sbr.rel (0) target = $region9
    $region8: #{googlenet_cifar10_forward.1} parent=1 // pred_region
      _
    $region9: #{googlenet_cifar10_forward.1} parent=1 // pred_fallthru
      _
    // Predicated region
    $region10: #{googlenet_cifar10_forward.1} parent=1 // pred_check
      _
    $region11: #{googlenet_cifar10_forward.1} parent=1 // pred_check_branch
      %21 = sbr.rel (0) target = $region13
    $region12: #{googlenet_cifar10_forward.1} parent=1 // pred_region
      _
    $region13: #{googlenet_cifar10_forward.1} parent=1 // pred_fallthru
      _
    // Predicated region
    $region14: #{googlenet_cifar10_forward.1} parent=1 // pred_check
      _
    $region15: #{googlenet_cifar10_forward.1} parent=1 // pred_check_branch
      %23 = sbr.rel (0) target = $region17
    $region16: #{googlenet_cifar10_forward.1} parent=1 // pred_region
      _
    $region17: #{googlenet_cifar10_forward.1} parent=1 // pred_fallthru
      _
    // Predicated region
    $region18: #{googlenet_cifar10_forward.1} parent=1 // pred_check
      _
    $region19: #{googlenet_cifar10_forward.1} parent=1 // pred_check_branch
      %25 = sbr.rel (0) target = $region21
    $region20: #{googlenet_cifar10_forward.1} parent=1 // pred_region
      _
    $region21: #{googlenet_cifar10_forward.1} parent=1 // pred_fallthru
      _
    // Predicated region
    $region22: #{googlenet_cifar10_forward.1} parent=1 // pred_check
      _
    $region23: #{googlenet_cifar10_forward.1} parent=1 // pred_check_branch
      %27 = sbr.rel (0) target = $region25
    $region24: #{googlenet_cifar10_forward.1} parent=1 // pred_region
      _
    $region25: #{googlenet_cifar10_forward.1} parent=1 // pred_fallthru
      _
    // Predicated region
    $region26: #{googlenet_cifar10_forward.1} parent=1 // pred_check
      _
    $region27: #{googlenet_cifar10_forward.1} parent=1 // pred_check_branch
      %29 = sbr.rel (0) target = $region29
    $region28: #{googlenet_cifar10_forward.1} parent=1 // pred_region
      _
    $region29: #{googlenet_cifar10_forward.1} parent=1 // pred_fallthru
      _
    // Predicated region
    $region30: #{googlenet_cifar10_forward.1} parent=1 // pred_check
      _
    $region31: #{googlenet_cifar10_forward.1} parent=1 // pred_check_branch
      %31 = sbr.rel (0) target = $region33
    $region32: #{googlenet_cifar10_forward.1} parent=1 // pred_region
      _
    $region33: #{googlenet_cifar10_forward.1} parent=1 // pred_fallthru
      _
    // Predicated region
    $region34: #{googlenet_cifar10_forward.1} parent=1 // pred_check
      _
    $region35: #{googlenet_cifar10_forward.1} parent=1 // pred_check_branch
      %33 = sbr.rel (0) target = $region37
    $region36: #{googlenet_cifar10_forward.1} parent=1 // pred_region
      _
    $region37: #{googlenet_cifar10_forward.1} parent=1 // pred_fallthru
      _
    // Predicated region
    $region38: #{googlenet_cifar10_forward.1} parent=1 // pred_check
      _
    $region39: #{googlenet_cifar10_forward.1} parent=1 // pred_check_branch
      %35 = sbr.rel (0) target = $region41
    $region40: #{googlenet_cifar10_forward.1} parent=1 // pred_region
      _
    $region41: #{googlenet_cifar10_forward.1} parent=1 // pred_fallthru
      _
    %v37 = vld [vmem:[%s0] sm:$0xf]
    %v38 = vld [vmem:[%s0 + $0x4] sm:$0xf]
    %v39 = vld [vmem:[%s0 + $0x8] sm:$0xf]
    %v40 = vld [vmem:[%s0 + $0xc] sm:$0xf]
    %v41 = vld [vmem:[%s0 + $0x10] sm:$0xf]
    %v42 = vld [vmem:[%s0 + $0x14] sm:$0xf]
    %v43 = vld [vmem:[%s0 + $0x18] sm:$0xf]
    %v44 = vld [vmem:[%s0 + $0x1c] sm:$0xf]
    %v45 = vld [vmem:[%s0 + $0x20] sm:$0xf]
    %v46 = vld [vmem:[%s0 + $0x24] sm:$0xf]
    %v47 = vld [vmem:[%s0 + $0x28] sm:$0xf]
    %v48 = vld [vmem:[%s0 + $0x2c] sm:$0xf]
    %v49 = vld [vmem:[%s0 + $0x30] sm:$0xf]
    %v50 = vld [vmem:[%s0 + $0x34] sm:$0xf]
    %v51 = vld [vmem:[%s0 + $0x38] sm:$0xf]
    %v52 = vld [vmem:[%s0 + $0x3c] sm:$0xf]
    %v53 = vld [vmem:[%s0 + $0x40] sm:$0xf]
    %v54 = vld [vmem:[%s0 + $0x44] sm:$0xf]
    %v55 = vld [vmem:[%s0 + $0x48] sm:$0xf]
    %v56 = vld [vmem:[%s0 + $0x4c] sm:$0xf]
    %v57 = vld [vmem:[%s0 + $0x50] sm:$0xf]
    %v58 = vld [vmem:[%s0 + $0x54] sm:$0xf]
    %v59 = vld [vmem:[%s0 + $0x58] sm:$0xf]
    %v60 = vld [vmem:[%s0 + $0x5c] sm:$0xf]
    %v61 = vld [vmem:[%s0 + $0x60] sm:$0xf]
    %v62 = vld [vmem:[%s0 + $0x64] sm:$0xf]
    %v63 = vld [vmem:[%s0 + $0x68] sm:$0xf]
    %v64 = vld [vmem:[%s0 + $0x6c] sm:$0xf]
    %v65 = vld [vmem:[%s0 + $0x70] sm:$0xf]
    %v66 = vld [vmem:[%s0 + $0x74] sm:$0xf]
    %v67 = vld [vmem:[%s0 + $0x78] sm:$0xf]
    %v68 = vld [vmem:[%s0 + $0x7c] sm:$0xf]
    %v69 = vld [vmem:[%s0 + $0x80] sm:$0xf]
    %v70 = vld [vmem:[%s0 + $0x84] sm:$0xf]
    %v71 = vld [vmem:[%s0 + $0x88] sm:$0xf]
    %v72 = vld [vmem:[%s0 + $0x8c] sm:$0xf]
    %v73 = vld [vmem:[%s0 + $0x90] sm:$0xf]
    %v74 = vld [vmem:[%s0 + $0x94] sm:$0xf]
    %v75 = vld [vmem:[%s0 + $0x98] sm:$0xf]
    %v76 = vld [vmem:[%s0 + $0x9c] sm:$0xf]
    %v77 = vld [vmem:[%s0 + $0xa0] sm:$0xf]
    %v78 = vld [vmem:[%s0 + $0xa4] sm:$0xf]
    %v79 = vld [vmem:[%s0 + $0xa8] sm:$0xf]
    %v80 = vld [vmem:[%s0 + $0xac] sm:$0xf]
    %v81 = vld [vmem:[%s0 + $0xb0] sm:$0xf]
    %v82 = vld [vmem:[%s0 + $0xb4] sm:$0xf]
    %v83 = vld [vmem:[%s0 + $0xb8] sm:$0xf]
    %v84 = vld [vmem:[%s0 + $0xbc] sm:$0xf]
    %v85 = vld [vmem:[%s0 + $0xc0] sm:$0xf]
    %v86 = vld [vmem:[%s0 + $0xc4] sm:$0xf]
    %v87 = vld [vmem:[%s0 + $0xc8] sm:$0xf]
    %v88 = vld [vmem:[%s0 + $0xcc] sm:$0xf]
    %v89 = vld [vmem:[%s0 + $0xd0] sm:$0xf]
    %v90 = vld [vmem:[%s0 + $0xd4] sm:$0xf]
    %v91 = vld [vmem:[%s0 + $0xd8] sm:$0xf]
    %v92 = vld [vmem:[%s0 + $0xdc] sm:$0xf]
    %v93 = vld [vmem:[%s0 + $0xe0] sm:$0xf]
    %v94 = vld [vmem:[%s0 + $0xe4] sm:$0xf]
    %v95 = vld [vmem:[%s0 + $0xe8] sm:$0xf]
    %v96 = vld [vmem:[%s0 + $0xec] sm:$0xf]
    %v97 = vld [vmem:[%s0 + $0xf0] sm:$0xf]
    %v98 = vld [vmem:[%s0 + $0xf4] sm:$0xf]
    %v99 = vld [vmem:[%s0 + $0xf8] sm:$0xf]
    %v100 = vld [vmem:[%s0 + $0xfc] sm:$0xf]
    %v101 = vld [vmem:[%s1] sm:$0xf]
    %v102 = vld [vmem:[%s1 + $0x4] sm:$0xf]
    %v103 = vld [vmem:[%s1 + $0x8] sm:$0xf]
    %v104 = vld [vmem:[%s1 + $0xc] sm:$0xf]
    %v105 = vld [vmem:[%s1 + $0x10] sm:$0xf]
    %v106 = vld [vmem:[%s1 + $0x14] sm:$0xf]
    %v107 = vld [vmem:[%s1 + $0x18] sm:$0xf]
    %v108 = vld [vmem:[%s1 + $0x1c] sm:$0xf]
    %v109 = vld [vmem:[%s1 + $0x20] sm:$0xf]
    %v110 = vld [vmem:[%s1 + $0x24] sm:$0xf]
    %v111 = vld [vmem:[%s1 + $0x28] sm:$0xf]
    %v112 = vld [vmem:[%s1 + $0x2c] sm:$0xf]
    %v113 = vld [vmem:[%s1 + $0x30] sm:$0xf]
    %v114 = vld [vmem:[%s1 + $0x34] sm:$0xf]
    %v115 = vld [vmem:[%s1 + $0x38] sm:$0xf]
    %v116 = vld [vmem:[%s1 + $0x3c] sm:$0xf]
    %v181 = vunpack.c.l.b16 %v37
    %v182 = vunpack.c.l.b16 %v38
    %v183 = vunpack.c.l.b16 %v39
    %v184 = vunpack.c.l.b16 %v40
    %v185 = vunpack.c.l.b16 %v41
    %v186 = vunpack.c.l.b16 %v42
    %v187 = vunpack.c.l.b16 %v43
    %v188 = vunpack.c.l.b16 %v44
    %v189 = vunpack.c.l.b16 %v45
    %v190 = vunpack.c.l.b16 %v46
    %v191 = vunpack.c.l.b16 %v47
    %v192 = vunpack.c.l.b16 %v48
    %v193 = vunpack.c.l.b16 %v49
    %v194 = vunpack.c.l.b16 %v50
    %v195 = vunpack.c.l.b16 %v51
    %v196 = vunpack.c.l.b16 %v52
    %v197 = vunpack.c.l.b16 %v53
    %v198 = vunpack.c.l.b16 %v54
    %v199 = vunpack.c.l.b16 %v55
    %v200 = vunpack.c.l.b16 %v56
    %v201 = vunpack.c.l.b16 %v57
    %v202 = vunpack.c.l.b16 %v58
    %v203 = vunpack.c.l.b16 %v59
    %v204 = vunpack.c.l.b16 %v60
    %v205 = vunpack.c.l.b16 %v61
    %v206 = vunpack.c.l.b16 %v62
    %v207 = vunpack.c.l.b16 %v63
    %v208 = vunpack.c.l.b16 %v64
    %v209 = vunpack.c.l.b16 %v65
    %v210 = vunpack.c.l.b16 %v66
    %v211 = vunpack.c.l.b16 %v67
    %v212 = vunpack.c.l.b16 %v68
    %v213 = vunpack.c.l.b16 %v69
    %v214 = vunpack.c.l.b16 %v70
    %v215 = vunpack.c.l.b16 %v71
    %v216 = vunpack.c.l.b16 %v72
    %v217 = vunpack.c.l.b16 %v73
    %v218 = vunpack.c.l.b16 %v74
    %v219 = vunpack.c.l.b16 %v75
    %v220 = vunpack.c.l.b16 %v76
    %v221 = vunpack.c.l.b16 %v77
    %v222 = vunpack.c.l.b16 %v78
    %v223 = vunpack.c.l.b16 %v79
    %v224 = vunpack.c.l.b16 %v80
    %v225 = vunpack.c.l.b16 %v81
    %v226 = vunpack.c.l.b16 %v82
    %v227 = vunpack.c.l.b16 %v83
    %v228 = vunpack.c.l.b16 %v84
    %v229 = vunpack.c.l.b16 %v85
    %v230 = vunpack.c.l.b16 %v86
    %v231 = vunpack.c.l.b16 %v87
    %v232 = vunpack.c.l.b16 %v88
    %v233 = vunpack.c.l.b16 %v89
    %v234 = vunpack.c.l.b16 %v90
    %v235 = vunpack.c.l.b16 %v91
    %v236 = vunpack.c.l.b16 %v92
    %v237 = vunpack.c.l.b16 %v93
    %v238 = vunpack.c.l.b16 %v94
    %v239 = vunpack.c.l.b16 %v95
    %v240 = vunpack.c.l.b16 %v96
    %v241 = vunpack.c.l.b16 %v97
    %v242 = vunpack.c.l.b16 %v98
    %v243 = vunpack.c.l.b16 %v99
    %v244 = vunpack.c.l.b16 %v100
    %v245 = vpack.c.b16 %v182, %v181
    %v246 = vpack.c.b16 %v184, %v183
    %v247 = vpack.c.b16 %v186, %v185
    %v248 = vpack.c.b16 %v188, %v187
    %v249 = vpack.c.b16 %v190, %v189
    %v250 = vpack.c.b16 %v192, %v191
    %v251 = vpack.c.b16 %v194, %v193
    %v252 = vpack.c.b16 %v196, %v195
    %v253 = vpack.c.b16 %v198, %v197
    %v254 = vpack.c.b16 %v200, %v199
    %v255 = vpack.c.b16 %v202, %v201
    %v256 = vpack.c.b16 %v204, %v203
    %v257 = vpack.c.b16 %v206, %v205
    %v258 = vpack.c.b16 %v208, %v207
    %v259 = vpack.c.b16 %v210, %v209
    %v260 = vpack.c.b16 %v212, %v211
    %v261 = vpack.c.b16 %v214, %v213
    %v262 = vpack.c.b16 %v216, %v215
    %v263 = vpack.c.b16 %v218, %v217
    %v264 = vpack.c.b16 %v220, %v219
    %v265 = vpack.c.b16 %v222, %v221
    %v266 = vpack.c.b16 %v224, %v223
    %v267 = vpack.c.b16 %v226, %v225
    %v268 = vpack.c.b16 %v228, %v227
    %v269 = vpack.c.b16 %v230, %v229
    %v270 = vpack.c.b16 %v232, %v231
    %v271 = vpack.c.b16 %v234, %v233
    %v272 = vpack.c.b16 %v236, %v235
    %v273 = vpack.c.b16 %v238, %v237
    %v274 = vpack.c.b16 %v240, %v239
    %v275 = vpack.c.b16 %v242, %v241
    %v276 = vpack.c.b16 %v244, %v243
    %v325 = vunpack.c.l.b16 %v101
    %v326 = vunpack.c.l.b16 %v102
    %v327 = vunpack.c.l.b16 %v103
    %v328 = vunpack.c.l.b16 %v104
    %v329 = vunpack.c.l.b16 %v105
    %v330 = vunpack.c.l.b16 %v106
    %v331 = vunpack.c.l.b16 %v107
    %v332 = vunpack.c.l.b16 %v108
    %v333 = vunpack.c.l.b16 %v109
    %v334 = vunpack.c.l.b16 %v110
    %v335 = vunpack.c.l.b16 %v111
    %v336 = vunpack.c.l.b16 %v112
    %v337 = vunpack.c.l.b16 %v113
    %v338 = vunpack.c.l.b16 %v114
    %v339 = vunpack.c.l.b16 %v115
    %v340 = vunpack.c.l.b16 %v116
    %v341 = vpack.c.b16 %v326, %v325
    %v342 = vpack.c.b16 %v328, %v327
    %v343 = vpack.c.b16 %v330, %v329
    %v344 = vpack.c.b16 %v332, %v331
    %v345 = vpack.c.b16 %v334, %v333
    %v346 = vpack.c.b16 %v336, %v335
    %v347 = vpack.c.b16 %v338, %v337
    %v348 = vpack.c.b16 %v340, %v339
    %357 = vmatprep.subr.bf16.mxu0 0
    %358 = vmatpush1.bf16.msra.mxu0 %v341
    %359 = vmatprep.subr.bf16.mxu0 0
    %360 = vmatpush1.bf16.msra.mxu0 %v342
    %361 = vmatprep.subr.bf16.mxu0 0
    %362 = vmatpush1.bf16.msra.mxu0 %v343
    %363 = vmatprep.subr.bf16.mxu0 0
    %364 = vmatpush1.bf16.msra.mxu0 %v344
    %365 = vmatprep.subr.bf16.mxu0 0
    %366 = vmatpush1.bf16.msra.mxu0 %v345
    %367 = vmatprep.subr.bf16.mxu0 0
    %368 = vmatpush1.bf16.msra.mxu0 %v346
    %369 = vmatprep.subr.bf16.mxu0 0
    %370 = vmatpush1.bf16.msra.mxu0 %v347
    %371 = vmatprep.subr.bf16.mxu0 0
    %372 = vmatpush1.bf16.msra.mxu0 %v348
    %373 = vmatprep.subr.bf16.mxu0 0
    %374 = vmatpush1.bf16.msra.mxu0 0
    %375 = vmatprep.subr.bf16.mxu0 0
    %376 = vmatpush1.bf16.msra.mxu0 0
    %377 = vmatprep.subr.bf16.mxu0 0
    %378 = vmatpush1.bf16.msra.mxu0 0
    %379 = vmatprep.subr.bf16.mxu0 0
    %380 = vmatpush1.bf16.msra.mxu0 0
    %381 = vmatprep.subr.bf16.mxu0 0
    %382 = vmatpush1.bf16.msra.mxu0 0
    %383 = vmatprep.subr.bf16.mxu0 0
    %384 = vmatpush1.bf16.msra.mxu0 0
    %385 = vmatprep.subr.bf16.mxu0 0
    %386 = vmatpush1.bf16.msra.mxu0 0
    %387 = vmatprep.subr.bf16.mxu0 0
    %388 = vmatpush1.bf16.msra.mxu0 0
    %389 = vmatprep.mubr.bf16.mxu0 0
    %390 = vmatmul.mubr.bf16.gmra.mrb[0].mxu0 %v245
    %v391 = vpop.f32.mrb[0].mxu0
    %v392 = vadd.f32 0.0, %v391
    %v393 = vpop.f32.mrb[0].mxu0
    %v394 = vpop.f32.mrb[0].mxu0
    %v395 = vadd.f32 0.0, %v394
    %v396 = vpop.f32.mrb[0].mxu0
    %397 = vmatprep.mubr.bf16.mxu0 0
    %398 = vmatmul.mubr.bf16.gmra.mrb[0].mxu0 %v246
    %v399 = vpop.f32.mrb[0].mxu0
    %v400 = vadd.f32 0.0, %v399
    %v401 = vpop.f32.mrb[0].mxu0
    %v402 = vpop.f32.mrb[0].mxu0
    %v403 = vadd.f32 0.0, %v402
    %v404 = vpop.f32.mrb[0].mxu0
    %405 = vmatprep.mubr.bf16.mxu0 0
    %406 = vmatmul.mubr.bf16.gmra.mrb[0].mxu0 %v247
    %v407 = vpop.f32.mrb[0].mxu0
    %v408 = vadd.f32 0.0, %v407
    %v409 = vpop.f32.mrb[0].mxu0
    %v410 = vpop.f32.mrb[0].mxu0
    %v411 = vadd.f32 0.0, %v410
    %v412 = vpop.f32.mrb[0].mxu0
    %413 = vmatprep.mubr.bf16.mxu0 0
    %414 = vmatmul.mubr.bf16.gmra.mrb[0].mxu0 %v248
    %v415 = vpop.f32.mrb[0].mxu0
    %v416 = vadd.f32 0.0, %v415
    %v417 = vpop.f32.mrb[0].mxu0
    %v418 = vpop.f32.mrb[0].mxu0
    %v419 = vadd.f32 0.0, %v418
    %v420 = vpop.f32.mrb[0].mxu0
    %421 = vmatprep.mubr.bf16.mxu0 0
    %422 = vmatmul.mubr.bf16.gmra.mrb[0].mxu0 %v249
    %v423 = vpop.f32.mrb[0].mxu0
    %v424 = vadd.f32 0.0, %v423
    %v425 = vpop.f32.mrb[0].mxu0
    %v426 = vpop.f32.mrb[0].mxu0
    %v427 = vadd.f32 0.0, %v426
    %v428 = vpop.f32.mrb[0].mxu0
    %429 = vmatprep.mubr.bf16.mxu0 0
    %430 = vmatmul.mubr.bf16.gmra.mrb[0].mxu0 %v250
    %v431 = vpop.f32.mrb[0].mxu0
    %v432 = vadd.f32 0.0, %v431
    %v433 = vpop.f32.mrb[0].mxu0
    %v434 = vpop.f32.mrb[0].mxu0
    %v435 = vadd.f32 0.0, %v434
    %v436 = vpop.f32.mrb[0].mxu0
    %437 = vmatprep.mubr.bf16.mxu0 0
    %438 = vmatmul.mubr.bf16.gmra.mrb[0].mxu0 %v251
    %v439 = vpop.f32.mrb[0].mxu0
    %v440 = vadd.f32 0.0, %v439
    %v441 = vpop.f32.mrb[0].mxu0
    %v442 = vpop.f32.mrb[0].mxu0
    %v443 = vadd.f32 0.0, %v442
    %v444 = vpop.f32.mrb[0].mxu0
    %445 = vmatprep.mubr.bf16.mxu0 0
    %446 = vmatmul.mubr.bf16.gmra.mrb[0].mxu0 %v252
    %v447 = vpop.f32.mrb[0].mxu0
    %v448 = vadd.f32 0.0, %v447
    %v449 = vpop.f32.mrb[0].mxu0
    %v450 = vpop.f32.mrb[0].mxu0
    %v451 = vadd.f32 0.0, %v450
    %v452 = vpop.f32.mrb[0].mxu0
    %453 = vmatprep.mubr.bf16.mxu0 0
    %454 = vmatmul.mubr.bf16.gmra.mrb[0].mxu0 %v253
    %v455 = vpop.f32.mrb[0].mxu0
    %v456 = vadd.f32 0.0, %v455
    %v457 = vpop.f32.mrb[0].mxu0
    %v458 = vpop.f32.mrb[0].mxu0
    %v459 = vadd.f32 0.0, %v458
    %v460 = vpop.f32.mrb[0].mxu0
    %461 = vmatprep.mubr.bf16.mxu0 0
    %462 = vmatmul.mubr.bf16.gmra.mrb[0].mxu0 %v254
    %v463 = vpop.f32.mrb[0].mxu0
    %v464 = vadd.f32 0.0, %v463
    %v465 = vpop.f32.mrb[0].mxu0
    %v466 = vpop.f32.mrb[0].mxu0
    %v467 = vadd.f32 0.0, %v466
    %v468 = vpop.f32.mrb[0].mxu0
    %469 = vmatprep.mubr.bf16.mxu0 0
    %470 = vmatmul.mubr.bf16.gmra.mrb[0].mxu0 %v255
    %v471 = vpop.f32.mrb[0].mxu0
    %v472 = vadd.f32 0.0, %v471
    %v473 = vpop.f32.mrb[0].mxu0
    %v474 = vpop.f32.mrb[0].mxu0
    %v475 = vadd.f32 0.0, %v474
    %v476 = vpop.f32.mrb[0].mxu0
    %477 = vmatprep.mubr.bf16.mxu0 0
    %478 = vmatmul.mubr.bf16.gmra.mrb[0].mxu0 %v256
    %v479 = vpop.f32.mrb[0].mxu0
    %v480 = vadd.f32 0.0, %v479
    %v481 = vpop.f32.mrb[0].mxu0
    %v482 = vpop.f32.mrb[0].mxu0
    %v483 = vadd.f32 0.0, %v482
    %v484 = vpop.f32.mrb[0].mxu0
    %485 = vmatprep.mubr.bf16.mxu0 0
    %486 = vmatmul.mubr.bf16.gmra.mrb[0].mxu0 %v257
    %v487 = vpop.f32.mrb[0].mxu0
    %v488 = vadd.f32 0.0, %v487
    %v489 = vpop.f32.mrb[0].mxu0
    %v490 = vpop.f32.mrb[0].mxu0
    %v491 = vadd.f32 0.0, %v490
    %v492 = vpop.f32.mrb[0].mxu0
    %493 = vmatprep.mubr.bf16.mxu0 0
    %494 = vmatmul.mubr.bf16.gmra.mrb[0].mxu0 %v258
    %v495 = vpop.f32.mrb[0].mxu0
    %v496 = vadd.f32 0.0, %v495
    %v497 = vpop.f32.mrb[0].mxu0
    %v498 = vpop.f32.mrb[0].mxu0
    %v499 = vadd.f32 0.0, %v498
    %v500 = vpop.f32.mrb[0].mxu0
    %501 = vmatprep.mubr.bf16.mxu0 0
    %502 = vmatmul.mubr.bf16.gmra.mrb[0].mxu0 %v259
    %v503 = vpop.f32.mrb[0].mxu0
    %v504 = vadd.f32 0.0, %v503
    %v505 = vpop.f32.mrb[0].mxu0
    %v506 = vpop.f32.mrb[0].mxu0
    %v507 = vadd.f32 0.0, %v506
    %v508 = vpop.f32.mrb[0].mxu0
    %509 = vmatprep.mubr.bf16.mxu0 0
    %510 = vmatmul.mubr.bf16.gmra.mrb[0].mxu0 %v260
    %v511 = vpop.f32.mrb[0].mxu0
    %v512 = vadd.f32 0.0, %v511
    %v513 = vpop.f32.mrb[0].mxu0
    %v514 = vpop.f32.mrb[0].mxu0
    %v515 = vadd.f32 0.0, %v514
    %v516 = vpop.f32.mrb[0].mxu0
    %517 = vmatprep.mubr.bf16.mxu0 0
    %518 = vmatmul.mubr.bf16.gmra.mrb[0].mxu0 %v261
    %v519 = vpop.f32.mrb[0].mxu0
    %v520 = vadd.f32 0.0, %v519
    %v521 = vpop.f32.mrb[0].mxu0
    %v522 = vpop.f32.mrb[0].mxu0
    %v523 = vadd.f32 0.0, %v522
    %v524 = vpop.f32.mrb[0].mxu0
    %525 = vmatprep.mubr.bf16.mxu0 0
    %526 = vmatmul.mubr.bf16.gmra.mrb[0].mxu0 %v262
    %v527 = vpop.f32.mrb[0].mxu0
    %v528 = vadd.f32 0.0, %v527
    %v529 = vpop.f32.mrb[0].mxu0
    %v530 = vpop.f32.mrb[0].mxu0
    %v531 = vadd.f32 0.0, %v530
    %v532 = vpop.f32.mrb[0].mxu0
    %533 = vmatprep.mubr.bf16.mxu0 0
    %534 = vmatmul.mubr.bf16.gmra.mrb[0].mxu0 %v263
    %v535 = vpop.f32.mrb[0].mxu0
    %v536 = vadd.f32 0.0, %v535
    %v537 = vpop.f32.mrb[0].mxu0
    %v538 = vpop.f32.mrb[0].mxu0
    %v539 = vadd.f32 0.0, %v538
    %v540 = vpop.f32.mrb[0].mxu0
    %541 = vmatprep.mubr.bf16.mxu0 0
    %542 = vmatmul.mubr.bf16.gmra.mrb[0].mxu0 %v264
    %v543 = vpop.f32.mrb[0].mxu0
    %v544 = vadd.f32 0.0, %v543
    %v545 = vpop.f32.mrb[0].mxu0
    %v546 = vpop.f32.mrb[0].mxu0
    %v547 = vadd.f32 0.0, %v546
    %v548 = vpop.f32.mrb[0].mxu0
    %549 = vmatprep.mubr.bf16.mxu0 0
    %550 = vmatmul.mubr.bf16.gmra.mrb[0].mxu0 %v265
    %v551 = vpop.f32.mrb[0].mxu0
    %v552 = vadd.f32 0.0, %v551
    %v553 = vpop.f32.mrb[0].mxu0
    %v554 = vpop.f32.mrb[0].mxu0
    %v555 = vadd.f32 0.0, %v554
    %v556 = vpop.f32.mrb[0].mxu0
    %557 = vmatprep.mubr.bf16.mxu0 0
    %558 = vmatmul.mubr.bf16.gmra.mrb[0].mxu0 %v266
    %v559 = vpop.f32.mrb[0].mxu0
    %v560 = vadd.f32 0.0, %v559
    %v561 = vpop.f32.mrb[0].mxu0
    %v562 = vpop.f32.mrb[0].mxu0
    %v563 = vadd.f32 0.0, %v562
    %v564 = vpop.f32.mrb[0].mxu0
    %565 = vmatprep.mubr.bf16.mxu0 0
    %566 = vmatmul.mubr.bf16.gmra.mrb[0].mxu0 %v267
    %v567 = vpop.f32.mrb[0].mxu0
    %v568 = vadd.f32 0.0, %v567
    %v569 = vpop.f32.mrb[0].mxu0
    %v570 = vpop.f32.mrb[0].mxu0
    %v571 = vadd.f32 0.0, %v570
    %v572 = vpop.f32.mrb[0].mxu0
    %573 = vmatprep.mubr.bf16.mxu0 0
    %574 = vmatmul.mubr.bf16.gmra.mrb[0].mxu0 %v268
    %v575 = vpop.f32.mrb[0].mxu0
    %v576 = vadd.f32 0.0, %v575
    %v577 = vpop.f32.mrb[0].mxu0
    %v578 = vpop.f32.mrb[0].mxu0
    %v579 = vadd.f32 0.0, %v578
    %v580 = vpop.f32.mrb[0].mxu0
    %581 = vmatprep.mubr.bf16.mxu0 0
    %582 = vmatmul.mubr.bf16.gmra.mrb[0].mxu0 %v269
    %v583 = vpop.f32.mrb[0].mxu0
    %v584 = vadd.f32 0.0, %v583
    %v585 = vpop.f32.mrb[0].mxu0
    %v586 = vpop.f32.mrb[0].mxu0
    %v587 = vadd.f32 0.0, %v586
    %v588 = vpop.f32.mrb[0].mxu0
    %589 = vmatprep.mubr.bf16.mxu0 0
    %590 = vmatmul.mubr.bf16.gmra.mrb[0].mxu0 %v270
    %v591 = vpop.f32.mrb[0].mxu0
    %v592 = vadd.f32 0.0, %v591
    %v593 = vpop.f32.mrb[0].mxu0
    %v594 = vpop.f32.mrb[0].mxu0
    %v595 = vadd.f32 0.0, %v594
    %v596 = vpop.f32.mrb[0].mxu0
    %597 = vmatprep.mubr.bf16.mxu0 0
    %598 = vmatmul.mubr.bf16.gmra.mrb[0].mxu0 %v271
    %v599 = vpop.f32.mrb[0].mxu0
    %v600 = vadd.f32 0.0, %v599
    %v601 = vpop.f32.mrb[0].mxu0
    %v602 = vpop.f32.mrb[0].mxu0
    %v603 = vadd.f32 0.0, %v602
    %v604 = vpop.f32.mrb[0].mxu0
    %605 = vmatprep.mubr.bf16.mxu0 0
    %606 = vmatmul.mubr.bf16.gmra.mrb[0].mxu0 %v272
    %v607 = vpop.f32.mrb[0].mxu0
    %v608 = vadd.f32 0.0, %v607
    %v609 = vpop.f32.mrb[0].mxu0
    %v610 = vpop.f32.mrb[0].mxu0
    %v611 = vadd.f32 0.0, %v610
    %v612 = vpop.f32.mrb[0].mxu0
    %613 = vmatprep.mubr.bf16.mxu0 0
    %614 = vmatmul.mubr.bf16.gmra.mrb[0].mxu0 %v273
    %v615 = vpop.f32.mrb[0].mxu0
    %v616 = vadd.f32 0.0, %v615
    %v617 = vpop.f32.mrb[0].mxu0
    %v618 = vpop.f32.mrb[0].mxu0
    %v619 = vadd.f32 0.0, %v618
    %v620 = vpop.f32.mrb[0].mxu0
    %621 = vmatprep.mubr.bf16.mxu0 0
    %622 = vmatmul.mubr.bf16.gmra.mrb[0].mxu0 %v274
    %v623 = vpop.f32.mrb[0].mxu0
    %v624 = vadd.f32 0.0, %v623
    %v625 = vpop.f32.mrb[0].mxu0
    %v626 = vpop.f32.mrb[0].mxu0
    %v627 = vadd.f32 0.0, %v626
    %v628 = vpop.f32.mrb[0].mxu0
    %629 = vmatprep.mubr.bf16.mxu0 0
    %630 = vmatmul.mubr.bf16.gmra.mrb[0].mxu0 %v275
    %v631 = vpop.f32.mrb[0].mxu0
    %v632 = vadd.f32 0.0, %v631
    %v633 = vpop.f32.mrb[0].mxu0
    %v634 = vpop.f32.mrb[0].mxu0
    %v635 = vadd.f32 0.0, %v634
    %v636 = vpop.f32.mrb[0].mxu0
    %637 = vmatprep.mubr.bf16.mxu0 0
    %638 = vmatmul.mubr.bf16.gmra.mrb[0].mxu0 %v276
    %v639 = vpop.f32.mrb[0].mxu0
    %v640 = vadd.f32 0.0, %v639
    %v641 = vpop.f32.mrb[0].mxu0
    %v642 = vpop.f32.mrb[0].mxu0
    %v643 = vadd.f32 0.0, %v642
    %v644 = vpop.f32.mrb[0].mxu0
    %645 = vdwg.mxu0
    %vm646 = vcmask 130048
    %647 = vst.msk [vmem:[#allocation2] sm:$0xff] %vm646, %v392
    %648 = vst.msk [vmem:[#allocation2 + $0x8] sm:$0xff] %vm646, %v395
    %649 = vst.msk [vmem:[#allocation2 + $0x10] sm:$0xff] %vm646, %v400
    %650 = vst.msk [vmem:[#allocation2 + $0x18] sm:$0xff] %vm646, %v403
    %651 = vst.msk [vmem:[#allocation2 + $0x20] sm:$0xff] %vm646, %v408
    %652 = vst.msk [vmem:[#allocation2 + $0x28] sm:$0xff] %vm646, %v411
    %653 = vst.msk [vmem:[#allocation2 + $0x30] sm:$0xff] %vm646, %v416
    %654 = vst.msk [vmem:[#allocation2 + $0x38] sm:$0xff] %vm646, %v419
    %655 = vst.msk [vmem:[#allocation2 + $0x40] sm:$0xff] %vm646, %v424
    %656 = vst.msk [vmem:[#allocation2 + $0x48] sm:$0xff] %vm646, %v427
    %657 = vst.msk [vmem:[#allocation2 + $0x50] sm:$0xff] %vm646, %v432
    %658 = vst.msk [vmem:[#allocation2 + $0x58] sm:$0xff] %vm646, %v435
    %659 = vst.msk [vmem:[#allocation2 + $0x60] sm:$0xff] %vm646, %v440
    %660 = vst.msk [vmem:[#allocation2 + $0x68] sm:$0xff] %vm646, %v443
    %661 = vst.msk [vmem:[#allocation2 + $0x70] sm:$0xff] %vm646, %v448
    %662 = vst.msk [vmem:[#allocation2 + $0x78] sm:$0xff] %vm646, %v451
    %663 = vst.msk [vmem:[#allocation2 + $0x80] sm:$0xff] %vm646, %v456
    %664 = vst.msk [vmem:[#allocation2 + $0x88] sm:$0xff] %vm646, %v459
    %665 = vst.msk [vmem:[#allocation2 + $0x90] sm:$0xff] %vm646, %v464
    %666 = vst.msk [vmem:[#allocation2 + $0x98] sm:$0xff] %vm646, %v467
    %667 = vst.msk [vmem:[#allocation2 + $0xa0] sm:$0xff] %vm646, %v472
    %668 = vst.msk [vmem:[#allocation2 + $0xa8] sm:$0xff] %vm646, %v475
    %669 = vst.msk [vmem:[#allocation2 + $0xb0] sm:$0xff] %vm646, %v480
    %670 = vst.msk [vmem:[#allocation2 + $0xb8] sm:$0xff] %vm646, %v483
    %671 = vst.msk [vmem:[#allocation2 + $0xc0] sm:$0xff] %vm646, %v488
    %672 = vst.msk [vmem:[#allocation2 + $0xc8] sm:$0xff] %vm646, %v491
    %673 = vst.msk [vmem:[#allocation2 + $0xd0] sm:$0xff] %vm646, %v496
    %674 = vst.msk [vmem:[#allocation2 + $0xd8] sm:$0xff] %vm646, %v499
    %675 = vst.msk [vmem:[#allocation2 + $0xe0] sm:$0xff] %vm646, %v504
    %676 = vst.msk [vmem:[#allocation2 + $0xe8] sm:$0xff] %vm646, %v507
    %677 = vst.msk [vmem:[#allocation2 + $0xf0] sm:$0xff] %vm646, %v512
    %678 = vst.msk [vmem:[#allocation2 + $0xf8] sm:$0xff] %vm646, %v515
    %679 = vst.msk [vmem:[#allocation2 + $0x100] sm:$0xff] %vm646, %v520
    %680 = vst.msk [vmem:[#allocation2 + $0x108] sm:$0xff] %vm646, %v523
    %681 = vst.msk [vmem:[#allocation2 + $0x110] sm:$0xff] %vm646, %v528
    %682 = vst.msk [vmem:[#allocation2 + $0x118] sm:$0xff] %vm646, %v531
    %683 = vst.msk [vmem:[#allocation2 + $0x120] sm:$0xff] %vm646, %v536
    %684 = vst.msk [vmem:[#allocation2 + $0x128] sm:$0xff] %vm646, %v539
    %685 = vst.msk [vmem:[#allocation2 + $0x130] sm:$0xff] %vm646, %v544
    %686 = vst.msk [vmem:[#allocation2 + $0x138] sm:$0xff] %vm646, %v547
    %687 = vst.msk [vmem:[#allocation2 + $0x140] sm:$0xff] %vm646, %v552
    %688 = vst.msk [vmem:[#allocation2 + $0x148] sm:$0xff] %vm646, %v555
    %689 = vst.msk [vmem:[#allocation2 + $0x150] sm:$0xff] %vm646, %v560
    %690 = vst.msk [vmem:[#allocation2 + $0x158] sm:$0xff] %vm646, %v563
    %691 = vst.msk [vmem:[#allocation2 + $0x160] sm:$0xff] %vm646, %v568
    %692 = vst.msk [vmem:[#allocation2 + $0x168] sm:$0xff] %vm646, %v571
    %693 = vst.msk [vmem:[#allocation2 + $0x170] sm:$0xff] %vm646, %v576
    %694 = vst.msk [vmem:[#allocation2 + $0x178] sm:$0xff] %vm646, %v579
    %695 = vst.msk [vmem:[#allocation2 + $0x180] sm:$0xff] %vm646, %v584
    %696 = vst.msk [vmem:[#allocation2 + $0x188] sm:$0xff] %vm646, %v587
    %697 = vst.msk [vmem:[#allocation2 + $0x190] sm:$0xff] %vm646, %v592
    %698 = vst.msk [vmem:[#allocation2 + $0x198] sm:$0xff] %vm646, %v595
    %699 = vst.msk [vmem:[#allocation2 + $0x1a0] sm:$0xff] %vm646, %v600
    %700 = vst.msk [vmem:[#allocation2 + $0x1a8] sm:$0xff] %vm646, %v603
    %701 = vst.msk [vmem:[#allocation2 + $0x1b0] sm:$0xff] %vm646, %v608
    %702 = vst.msk [vmem:[#allocation2 + $0x1b8] sm:$0xff] %vm646, %v611
    %703 = vst.msk [vmem:[#allocation2 + $0x1c0] sm:$0xff] %vm646, %v616
    %704 = vst.msk [vmem:[#allocation2 + $0x1c8] sm:$0xff] %vm646, %v619
    %705 = vst.msk [vmem:[#allocation2 + $0x1d0] sm:$0xff] %vm646, %v624
    %706 = vst.msk [vmem:[#allocation2 + $0x1d8] sm:$0xff] %vm646, %v627
    %707 = vst.msk [vmem:[#allocation2 + $0x1e0] sm:$0xff] %vm646, %v632
    %708 = vst.msk [vmem:[#allocation2 + $0x1e8] sm:$0xff] %vm646, %v635
    %709 = vst.msk [vmem:[#allocation2 + $0x1f0] sm:$0xff] %vm646, %v640
    %710 = vst.msk [vmem:[#allocation2 + $0x1f8] sm:$0xff] %vm646, %v643
    %v711 = vld [vmem:[#allocation2] sm:$0xff]
    %v712 = vld [vmem:[#allocation2 + $0x8] sm:$0xff]
    %v713 = vld [vmem:[#allocation2 + $0x10] sm:$0xff]
    %v714 = vld [vmem:[#allocation2 + $0x18] sm:$0xff]
    %v715 = vld [vmem:[#allocation2 + $0x20] sm:$0xff]
    %v716 = vld [vmem:[#allocation2 + $0x28] sm:$0xff]
    %v717 = vld [vmem:[#allocation2 + $0x30] sm:$0xff]
    %v718 = vld [vmem:[#allocation2 + $0x38] sm:$0xff]
    %v719 = vld [vmem:[#allocation2 + $0x40] sm:$0xff]
    %v720 = vld [vmem:[#allocation2 + $0x48] sm:$0xff]
    %v721 = vld [vmem:[#allocation2 + $0x50] sm:$0xff]
    %v722 = vld [vmem:[#allocation2 + $0x58] sm:$0xff]
    %v723 = vld [vmem:[#allocation2 + $0x60] sm:$0xff]
    %v724 = vld [vmem:[#allocation2 + $0x68] sm:$0xff]
    %v725 = vld [vmem:[#allocation2 + $0x70] sm:$0xff]
    %v726 = vld [vmem:[#allocation2 + $0x78] sm:$0xff]
    %v727 = vld [vmem:[#allocation2 + $0x80] sm:$0xff]
    %v728 = vld [vmem:[#allocation2 + $0x88] sm:$0xff]
    %v729 = vld [vmem:[#allocation2 + $0x90] sm:$0xff]
    %v730 = vld [vmem:[#allocation2 + $0x98] sm:$0xff]
    %v731 = vld [vmem:[#allocation2 + $0xa0] sm:$0xff]
    %v732 = vld [vmem:[#allocation2 + $0xa8] sm:$0xff]
    %v733 = vld [vmem:[#allocation2 + $0xb0] sm:$0xff]
    %v734 = vld [vmem:[#allocation2 + $0xb8] sm:$0xff]
    %v735 = vld [vmem:[#allocation2 + $0xc0] sm:$0xff]
    %v736 = vld [vmem:[#allocation2 + $0xc8] sm:$0xff]
    %v737 = vld [vmem:[#allocation2 + $0xd0] sm:$0xff]
    %v738 = vld [vmem:[#allocation2 + $0xd8] sm:$0xff]
    %v739 = vld [vmem:[#allocation2 + $0xe0] sm:$0xff]
    %v740 = vld [vmem:[#allocation2 + $0xe8] sm:$0xff]
    %v741 = vld [vmem:[#allocation2 + $0xf0] sm:$0xff]
    %v742 = vld [vmem:[#allocation2 + $0xf8] sm:$0xff]
    %v743 = vld [vmem:[#allocation2 + $0x100] sm:$0xff]
    %v744 = vld [vmem:[#allocation2 + $0x108] sm:$0xff]
    %v745 = vld [vmem:[#allocation2 + $0x110] sm:$0xff]
    %v746 = vld [vmem:[#allocation2 + $0x118] sm:$0xff]
    %v747 = vld [vmem:[#allocation2 + $0x120] sm:$0xff]
    %v748 = vld [vmem:[#allocation2 + $0x128] sm:$0xff]
    %v749 = vld [vmem:[#allocation2 + $0x130] sm:$0xff]
    %v750 = vld [vmem:[#allocation2 + $0x138] sm:$0xff]
    %v751 = vld [vmem:[#allocation2 + $0x140] sm:$0xff]
    %v752 = vld [vmem:[#allocation2 + $0x148] sm:$0xff]
    %v753 = vld [vmem:[#allocation2 + $0x150] sm:$0xff]
    %v754 = vld [vmem:[#allocation2 + $0x158] sm:$0xff]
    %v755 = vld [vmem:[#allocation2 + $0x160] sm:$0xff]
    %v756 = vld [vmem:[#allocation2 + $0x168] sm:$0xff]
    %v757 = vld [vmem:[#allocation2 + $0x170] sm:$0xff]
    %v758 = vld [vmem:[#allocation2 + $0x178] sm:$0xff]
    %v759 = vld [vmem:[#allocation2 + $0x180] sm:$0xff]
    %v760 = vld [vmem:[#allocation2 + $0x188] sm:$0xff]
    %v761 = vld [vmem:[#allocation2 + $0x190] sm:$0xff]
    %v762 = vld [vmem:[#allocation2 + $0x198] sm:$0xff]
    %v763 = vld [vmem:[#allocation2 + $0x1a0] sm:$0xff]
    %v764 = vld [vmem:[#allocation2 + $0x1a8] sm:$0xff]
    %v765 = vld [vmem:[#allocation2 + $0x1b0] sm:$0xff]
    %v766 = vld [vmem:[#allocation2 + $0x1b8] sm:$0xff]
    %v767 = vld [vmem:[#allocation2 + $0x1c0] sm:$0xff]
    %v768 = vld [vmem:[#allocation2 + $0x1c8] sm:$0xff]
    %v769 = vld [vmem:[#allocation2 + $0x1d0] sm:$0xff]
    %v770 = vld [vmem:[#allocation2 + $0x1d8] sm:$0xff]
    %v771 = vld [vmem:[#allocation2 + $0x1e0] sm:$0xff]
    %v772 = vld [vmem:[#allocation2 + $0x1e8] sm:$0xff]
    %v773 = vld [vmem:[#allocation2 + $0x1f0] sm:$0xff]
    %v774 = vld [vmem:[#allocation2 + $0x1f8] sm:$0xff]
    %v775 = vsel %vm646, %v711, 0.0
    %v776 = vsel %vm646, %v712, 0.0
    %v777 = vadd.f32 %v775, %v776
    %v778 = vsel %vm646, %v713, 0.0
    %v779 = vadd.f32 %v777, %v778
    %v780 = vsel %vm646, %v714, 0.0
    %v781 = vadd.f32 %v779, %v780
    %v782 = vsel %vm646, %v715, 0.0
    %v783 = vadd.f32 %v781, %v782
    %v784 = vsel %vm646, %v716, 0.0
    %v785 = vadd.f32 %v783, %v784
    %v786 = vsel %vm646, %v717, 0.0
    %v787 = vadd.f32 %v785, %v786
    %v788 = vsel %vm646, %v718, 0.0
    %v789 = vadd.f32 %v787, %v788
    %v790 = vsel %vm646, %v719, 0.0
    %v791 = vadd.f32 %v789, %v790
    %v792 = vsel %vm646, %v720, 0.0
    %v793 = vadd.f32 %v791, %v792
    %v794 = vsel %vm646, %v721, 0.0
    %v795 = vadd.f32 %v793, %v794
    %v796 = vsel %vm646, %v722, 0.0
    %v797 = vadd.f32 %v795, %v796
    %v798 = vsel %vm646, %v723, 0.0
    %v799 = vadd.f32 %v797, %v798
    %v800 = vsel %vm646, %v724, 0.0
    %v801 = vadd.f32 %v799, %v800
    %v802 = vsel %vm646, %v725, 0.0
    %v803 = vadd.f32 %v801, %v802
    %v804 = vsel %vm646, %v726, 0.0
    %v805 = vadd.f32 %v803, %v804
    %v806 = vsel %vm646, %v727, 0.0
    %v807 = vadd.f32 %v805, %v806
    %v808 = vsel %vm646, %v728, 0.0
    %v809 = vadd.f32 %v807, %v808
    %v810 = vsel %vm646, %v729, 0.0
    %v811 = vadd.f32 %v809, %v810
    %v812 = vsel %vm646, %v730, 0.0
    %v813 = vadd.f32 %v811, %v812
    %v814 = vsel %vm646, %v731, 0.0
    %v815 = vadd.f32 %v813, %v814
    %v816 = vsel %vm646, %v732, 0.0
    %v817 = vadd.f32 %v815, %v816
    %v818 = vsel %vm646, %v733, 0.0
    %v819 = vadd.f32 %v817, %v818
    %v820 = vsel %vm646, %v734, 0.0
    %v821 = vadd.f32 %v819, %v820
    %v822 = vsel %vm646, %v735, 0.0
    %v823 = vadd.f32 %v821, %v822
    %v824 = vsel %vm646, %v736, 0.0
    %v825 = vadd.f32 %v823, %v824
    %v826 = vsel %vm646, %v737, 0.0
    %v827 = vadd.f32 %v825, %v826
    %v828 = vsel %vm646, %v738, 0.0
    %v829 = vadd.f32 %v827, %v828
    %v830 = vsel %vm646, %v739, 0.0
    %v831 = vadd.f32 %v829, %v830
    %v832 = vsel %vm646, %v740, 0.0
    %v833 = vadd.f32 %v831, %v832
    %v834 = vsel %vm646, %v741, 0.0
    %v835 = vadd.f32 %v833, %v834
    %v836 = vsel %vm646, %v742, 0.0
    %v837 = vadd.f32 %v835, %v836
    %v838 = vsel %vm646, %v743, 0.0
    %v839 = vadd.f32 %v837, %v838
    %v840 = vsel %vm646, %v744, 0.0
    %v841 = vadd.f32 %v839, %v840
    %v842 = vsel %vm646, %v745, 0.0
    %v843 = vadd.f32 %v841, %v842
    %v844 = vsel %vm646, %v746, 0.0
    %v845 = vadd.f32 %v843, %v844
    %v846 = vsel %vm646, %v747, 0.0
    %v847 = vadd.f32 %v845, %v846
    %v848 = vsel %vm646, %v748, 0.0
    %v849 = vadd.f32 %v847, %v848
    %v850 = vsel %vm646, %v749, 0.0
    %v851 = vadd.f32 %v849, %v850
    %v852 = vsel %vm646, %v750, 0.0
    %v853 = vadd.f32 %v851, %v852
    %v854 = vsel %vm646, %v751, 0.0
    %v855 = vadd.f32 %v853, %v854
    %v856 = vsel %vm646, %v752, 0.0
    %v857 = vadd.f32 %v855, %v856
    %v858 = vsel %vm646, %v753, 0.0
    %v859 = vadd.f32 %v857, %v858
    %v860 = vsel %vm646, %v754, 0.0
    %v861 = vadd.f32 %v859, %v860
    %v862 = vsel %vm646, %v755, 0.0
    %v863 = vadd.f32 %v861, %v862
    %v864 = vsel %vm646, %v756, 0.0
    %v865 = vadd.f32 %v863, %v864
    %v866 = vsel %vm646, %v757, 0.0
    %v867 = vadd.f32 %v865, %v866
    %v868 = vsel %vm646, %v758, 0.0
    %v869 = vadd.f32 %v867, %v868
    %v870 = vsel %vm646, %v759, 0.0
    %v871 = vadd.f32 %v869, %v870
    %v872 = vsel %vm646, %v760, 0.0
    %v873 = vadd.f32 %v871, %v872
    %v874 = vsel %vm646, %v761, 0.0
    %v875 = vadd.f32 %v873, %v874
    %v876 = vsel %vm646, %v762, 0.0
    %v877 = vadd.f32 %v875, %v876
    %v878 = vsel %vm646, %v763, 0.0
    %v879 = vadd.f32 %v877, %v878
    %v880 = vsel %vm646, %v764, 0.0
    %v881 = vadd.f32 %v879, %v880
    %v882 = vsel %vm646, %v765, 0.0
    %v883 = vadd.f32 %v881, %v882
    %v884 = vsel %vm646, %v766, 0.0
    %v885 = vadd.f32 %v883, %v884
    %v886 = vsel %vm646, %v767, 0.0
    %v887 = vadd.f32 %v885, %v886
    %v888 = vsel %vm646, %v768, 0.0
    %v889 = vadd.f32 %v887, %v888
    %v890 = vsel %vm646, %v769, 0.0
    %v891 = vadd.f32 %v889, %v890
    %v892 = vsel %vm646, %v770, 0.0
    %v893 = vadd.f32 %v891, %v892
    %v894 = vsel %vm646, %v771, 0.0
    %v895 = vadd.f32 %v893, %v894
    %v896 = vsel %vm646, %v772, 0.0
    %v897 = vadd.f32 %v895, %v896
    %v898 = vsel %vm646, %v773, 0.0
    %v899 = vadd.f32 %v897, %v898
    %v900 = vsel %vm646, %v774, 0.0
    %v901 = vadd.f32 %v899, %v900
    %v902 = vrot.slane %v901, 4
    %v903 = vadd.f32 %v901, %v902
    %v904 = vrot.slane %v903, 2
    %v905 = vadd.f32 %v903, %v904
    %v906 = vrot.slane %v905, 1
    %v907 = vadd.f32 %v905, %v906
    %v908 = vmul.f32 %v711, %v711
    %v909 = vmul.f32 %v712, %v712
    %v910 = vmul.f32 %v713, %v713
    %v911 = vmul.f32 %v714, %v714
    %v912 = vmul.f32 %v715, %v715
    %v913 = vmul.f32 %v716, %v716
    %v914 = vmul.f32 %v717, %v717
    %v915 = vmul.f32 %v718, %v718
    %v916 = vmul.f32 %v719, %v719
    %v917 = vmul.f32 %v720, %v720
    %v918 = vmul.f32 %v721, %v721
    %v919 = vmul.f32 %v722, %v722
    %v920 = vmul.f32 %v723, %v723
    %v921 = vmul.f32 %v724, %v724
    %v922 = vmul.f32 %v725, %v725
    %v923 = vmul.f32 %v726, %v726
    %v924 = vmul.f32 %v727, %v727
    %v925 = vmul.f32 %v728, %v728
    %v926 = vmul.f32 %v729, %v729
    %v927 = vmul.f32 %v730, %v730
    %v928 = vmul.f32 %v731, %v731
    %v929 = vmul.f32 %v732, %v732
    %v930 = vmul.f32 %v733, %v733
    %v931 = vmul.f32 %v734, %v734
    %v932 = vmul.f32 %v735, %v735
    %v933 = vmul.f32 %v736, %v736
    %v934 = vmul.f32 %v737, %v737
    %v935 = vmul.f32 %v738, %v738
    %v936 = vmul.f32 %v739, %v739
    %v937 = vmul.f32 %v740, %v740
    %v938 = vmul.f32 %v741, %v741
    %v939 = vmul.f32 %v742, %v742
    %v940 = vmul.f32 %v743, %v743
    %v941 = vmul.f32 %v744, %v744
    %v942 = vmul.f32 %v745, %v745
    %v943 = vmul.f32 %v746, %v746
    %v944 = vmul.f32 %v747, %v747
    %v945 = vmul.f32 %v748, %v748
    %v946 = vmul.f32 %v749, %v749
    %v947 = vmul.f32 %v750, %v750
    %v948 = vmul.f32 %v751, %v751
    %v949 = vmul.f32 %v752, %v752
    %v950 = vmul.f32 %v753, %v753
    %v951 = vmul.f32 %v754, %v754
    %v952 = vmul.f32 %v755, %v755
    %v953 = vmul.f32 %v756, %v756
    %v954 = vmul.f32 %v757, %v757
    %v955 = vmul.f32 %v758, %v758
    %v956 = vmul.f32 %v759, %v759
    %v957 = vmul.f32 %v760, %v760
    %v958 = vmul.f32 %v761, %v761
    %v959 = vmul.f32 %v762, %v762
    %v960 = vmul.f32 %v763, %v763
    %v961 = vmul.f32 %v764, %v764
    %v962 = vmul.f32 %v765, %v765
    %v963 = vmul.f32 %v766, %v766
    %v964 = vmul.f32 %v767, %v767
    %v965 = vmul.f32 %v768, %v768
    %v966 = vmul.f32 %v769, %v769
    %v967 = vmul.f32 %v770, %v770
    %v968 = vmul.f32 %v771, %v771
    %v969 = vmul.f32 %v772, %v772
    %v970 = vmul.f32 %v773, %v773
    %v971 = vmul.f32 %v774, %v774
    %v972 = vsel %vm646, %v908, 0.0
    %v973 = vsel %vm646, %v909, 0.0
    %v974 = vadd.f32 %v972, %v973
    %v975 = vsel %vm646, %v910, 0.0
    %v976 = vadd.f32 %v974, %v975
    %v977 = vsel %vm646, %v911, 0.0
    %v978 = vadd.f32 %v976, %v977
    %v979 = vsel %vm646, %v912, 0.0
    %v980 = vadd.f32 %v978, %v979
    %v981 = vsel %vm646, %v913, 0.0
    %v982 = vadd.f32 %v980, %v981
    %v983 = vsel %vm646, %v914, 0.0
    %v984 = vadd.f32 %v982, %v983
    %v985 = vsel %vm646, %v915, 0.0
    %v986 = vadd.f32 %v984, %v985
    %v987 = vsel %vm646, %v916, 0.0
    %v988 = vadd.f32 %v986, %v987
    %v989 = vsel %vm646, %v917, 0.0
    %v990 = vadd.f32 %v988, %v989
    %v991 = vsel %vm646, %v918, 0.0
    %v992 = vadd.f32 %v990, %v991
    %v993 = vsel %vm646, %v919, 0.0
    %v994 = vadd.f32 %v992, %v993
    %v995 = vsel %vm646, %v920, 0.0
    %v996 = vadd.f32 %v994, %v995
    %v997 = vsel %vm646, %v921, 0.0
    %v998 = vadd.f32 %v996, %v997
    %v999 = vsel %vm646, %v922, 0.0
    %v1000 = vadd.f32 %v998, %v999
    %v1001 = vsel %vm646, %v923, 0.0
    %v1002 = vadd.f32 %v1000, %v1001
    %v1003 = vsel %vm646, %v924, 0.0
    %v1004 = vadd.f32 %v1002, %v1003
    %v1005 = vsel %vm646, %v925, 0.0
    %v1006 = vadd.f32 %v1004, %v1005
    %v1007 = vsel %vm646, %v926, 0.0
    %v1008 = vadd.f32 %v1006, %v1007
    %v1009 = vsel %vm646, %v927, 0.0
    %v1010 = vadd.f32 %v1008, %v1009
    %v1011 = vsel %vm646, %v928, 0.0
    %v1012 = vadd.f32 %v1010, %v1011
    %v1013 = vsel %vm646, %v929, 0.0
    %v1014 = vadd.f32 %v1012, %v1013
    %v1015 = vsel %vm646, %v930, 0.0
    %v1016 = vadd.f32 %v1014, %v1015
    %v1017 = vsel %vm646, %v931, 0.0
    %v1018 = vadd.f32 %v1016, %v1017
    %v1019 = vsel %vm646, %v932, 0.0
    %v1020 = vadd.f32 %v1018, %v1019
    %v1021 = vsel %vm646, %v933, 0.0
    %v1022 = vadd.f32 %v1020, %v1021
    %v1023 = vsel %vm646, %v934, 0.0
    %v1024 = vadd.f32 %v1022, %v1023
    %v1025 = vsel %vm646, %v935, 0.0
    %v1026 = vadd.f32 %v1024, %v1025
    %v1027 = vsel %vm646, %v936, 0.0
    %v1028 = vadd.f32 %v1026, %v1027
    %v1029 = vsel %vm646, %v937, 0.0
    %v1030 = vadd.f32 %v1028, %v1029
    %v1031 = vsel %vm646, %v938, 0.0
    %v1032 = vadd.f32 %v1030, %v1031
    %v1033 = vsel %vm646, %v939, 0.0
    %v1034 = vadd.f32 %v1032, %v1033
    %v1035 = vsel %vm646, %v940, 0.0
    %v1036 = vadd.f32 %v1034, %v1035
    %v1037 = vsel %vm646, %v941, 0.0
    %v1038 = vadd.f32 %v1036, %v1037
    %v1039 = vsel %vm646, %v942, 0.0
    %v1040 = vadd.f32 %v1038, %v1039
    %v1041 = vsel %vm646, %v943, 0.0
    %v1042 = vadd.f32 %v1040, %v1041
    %v1043 = vsel %vm646, %v944, 0.0
    %v1044 = vadd.f32 %v1042, %v1043
    %v1045 = vsel %vm646, %v945, 0.0
    %v1046 = vadd.f32 %v1044, %v1045
    %v1047 = vsel %vm646, %v946, 0.0
    %v1048 = vadd.f32 %v1046, %v1047
    %v1049 = vsel %vm646, %v947, 0.0
    %v1050 = vadd.f32 %v1048, %v1049
    %v1051 = vsel %vm646, %v948, 0.0
    %v1052 = vadd.f32 %v1050, %v1051
    %v1053 = vsel %vm646, %v949, 0.0
    %v1054 = vadd.f32 %v1052, %v1053
    %v1055 = vsel %vm646, %v950, 0.0
    %v1056 = vadd.f32 %v1054, %v1055
    %v1057 = vsel %vm646, %v951, 0.0
    %v1058 = vadd.f32 %v1056, %v1057
    %v1059 = vsel %vm646, %v952, 0.0
    %v1060 = vadd.f32 %v1058, %v1059
    %v1061 = vsel %vm646, %v953, 0.0
    %v1062 = vadd.f32 %v1060, %v1061
    %v1063 = vsel %vm646, %v954, 0.0
    %v1064 = vadd.f32 %v1062, %v1063
    %v1065 = vsel %vm646, %v955, 0.0
    %v1066 = vadd.f32 %v1064, %v1065
    %v1067 = vsel %vm646, %v956, 0.0
    %v1068 = vadd.f32 %v1066, %v1067
    %v1069 = vsel %vm646, %v957, 0.0
    %v1070 = vadd.f32 %v1068, %v1069
    %v1071 = vsel %vm646, %v958, 0.0
    %v1072 = vadd.f32 %v1070, %v1071
    %v1073 = vsel %vm646, %v959, 0.0
    %v1074 = vadd.f32 %v1072, %v1073
    %v1075 = vsel %vm646, %v960, 0.0
    %v1076 = vadd.f32 %v1074, %v1075
    %v1077 = vsel %vm646, %v961, 0.0
    %v1078 = vadd.f32 %v1076, %v1077
    %v1079 = vsel %vm646, %v962, 0.0
    %v1080 = vadd.f32 %v1078, %v1079
    %v1081 = vsel %vm646, %v963, 0.0
    %v1082 = vadd.f32 %v1080, %v1081
    %v1083 = vsel %vm646, %v964, 0.0
    %v1084 = vadd.f32 %v1082, %v1083
    %v1085 = vsel %vm646, %v965, 0.0
    %v1086 = vadd.f32 %v1084, %v1085
    %v1087 = vsel %vm646, %v966, 0.0
    %v1088 = vadd.f32 %v1086, %v1087
    %v1089 = vsel %vm646, %v967, 0.0
    %v1090 = vadd.f32 %v1088, %v1089
    %v1091 = vsel %vm646, %v968, 0.0
    %v1092 = vadd.f32 %v1090, %v1091
    %v1093 = vsel %vm646, %v969, 0.0
    %v1094 = vadd.f32 %v1092, %v1093
    %v1095 = vsel %vm646, %v970, 0.0
    %v1096 = vadd.f32 %v1094, %v1095
    %v1097 = vsel %vm646, %v971, 0.0
    %v1098 = vadd.f32 %v1096, %v1097
    %v1099 = vrot.slane %v1098, 4
    %v1100 = vadd.f32 %v1098, %v1099
    %v1101 = vrot.slane %v1100, 2
    %v1102 = vadd.f32 %v1100, %v1101
    %v1103 = vrot.slane %v1102, 1
    %v1104 = vadd.f32 %v1102, %v1103
    %v1105 = vld [vmem:[%s2] sm:$0x1]
    %v1106 = vld [vmem:[%s3] sm:$0x1]
    %v1107 = vmul.f32 %v907, 0.001953125
    %v1108 = vmul.f32 %v1104, 0.001953125
    %v1109 = vmul.f32 %v1107, %v1107
    %v1110 = vsub.f32 %v1108, %v1109
    %v1111 = vmax.f32 %v1110, 0.0
    %v1112 = vadd.f32 %v1111, 0.001
    %v1113 = vrsqrt.pop %v1112
    %v1114 = vmul.f32 %v1105, %v1113
    %v1115 = vmul.f32 %v1107, %v1114
    %v1116 = vsub.f32 %v1106, %v1115
    %v1118 = vlaneseq
    %v1119 = vshrl.u32 %v1118, 7
    %v1120 = vsub.s32 0, %v1119
    %v1121 = vrot.slane %v1114, %v1120
    %v1123 = vmul.f32 %v711, %v1121
    %v1124 = vmul.f32 %v712, %v1121
    %v1125 = vmul.f32 %v713, %v1121
    %v1126 = vmul.f32 %v714, %v1121
    %v1127 = vmul.f32 %v715, %v1121
    %v1128 = vmul.f32 %v716, %v1121
    %v1129 = vmul.f32 %v717, %v1121
    %v1130 = vmul.f32 %v718, %v1121
    %v1131 = vmul.f32 %v719, %v1121
    %v1132 = vmul.f32 %v720, %v1121
    %v1133 = vmul.f32 %v721, %v1121
    %v1134 = vmul.f32 %v722, %v1121
    %v1135 = vmul.f32 %v723, %v1121
    %v1136 = vmul.f32 %v724, %v1121
    %v1137 = vmul.f32 %v725, %v1121
    %v1138 = vmul.f32 %v726, %v1121
    %v1139 = vmul.f32 %v727, %v1121
    %v1140 = vmul.f32 %v728, %v1121
    %v1141 = vmul.f32 %v729, %v1121
    %v1142 = vmul.f32 %v730, %v1121
    %v1143 = vmul.f32 %v731, %v1121
    %v1144 = vmul.f32 %v732, %v1121
    %v1145 = vmul.f32 %v733, %v1121
    %v1146 = vmul.f32 %v734, %v1121
    %v1147 = vmul.f32 %v735, %v1121
    %v1148 = vmul.f32 %v736, %v1121
    %v1149 = vmul.f32 %v737, %v1121
    %v1150 = vmul.f32 %v738, %v1121
    %v1151 = vmul.f32 %v739, %v1121
    %v1152 = vmul.f32 %v740, %v1121
    %v1153 = vmul.f32 %v741, %v1121
    %v1154 = vmul.f32 %v742, %v1121
    %v1155 = vmul.f32 %v743, %v1121
    %v1156 = vmul.f32 %v744, %v1121
    %v1157 = vmul.f32 %v745, %v1121
    %v1158 = vmul.f32 %v746, %v1121
    %v1159 = vmul.f32 %v747, %v1121
    %v1160 = vmul.f32 %v748, %v1121
    %v1161 = vmul.f32 %v749, %v1121
    %v1162 = vmul.f32 %v750, %v1121
    %v1163 = vmul.f32 %v751, %v1121
    %v1164 = vmul.f32 %v752, %v1121
    %v1165 = vmul.f32 %v753, %v1121
    %v1166 = vmul.f32 %v754, %v1121
    %v1167 = vmul.f32 %v755, %v1121
    %v1168 = vmul.f32 %v756, %v1121
    %v1169 = vmul.f32 %v757, %v1121
    %v1170 = vmul.f32 %v758, %v1121
    %v1171 = vmul.f32 %v759, %v1121
    %v1172 = vmul.f32 %v760, %v1121
    %v1173 = vmul.f32 %v761, %v1121
    %v1174 = vmul.f32 %v762, %v1121
    %v1175 = vmul.f32 %v763, %v1121
    %v1176 = vmul.f32 %v764, %v1121
    %v1177 = vmul.f32 %v765, %v1121
    %v1178 = vmul.f32 %v766, %v1121
    %v1179 = vmul.f32 %v767, %v1121
    %v1180 = vmul.f32 %v768, %v1121
    %v1181 = vmul.f32 %v769, %v1121
    %v1182 = vmul.f32 %v770, %v1121
    %v1183 = vmul.f32 %v771, %v1121
    %v1184 = vmul.f32 %v772, %v1121
    %v1185 = vmul.f32 %v773, %v1121
    %v1186 = vmul.f32 %v774, %v1121
    %v1188 = vlaneseq
    %v1189 = vshrl.u32 %v1188, 7
    %v1190 = vsub.s32 0, %v1189
    %v1191 = vrot.slane %v1116, %v1190
    %v1193 = vadd.f32 %v1123, %v1191
    %v1194 = vadd.f32 %v1124, %v1191
    %v1195 = vadd.f32 %v1125, %v1191
    %v1196 = vadd.f32 %v1126, %v1191
    %v1197 = vadd.f32 %v1127, %v1191
    %v1198 = vadd.f32 %v1128, %v1191
    %v1199 = vadd.f32 %v1129, %v1191
    %v1200 = vadd.f32 %v1130, %v1191
    %v1201 = vadd.f32 %v1131, %v1191
    %v1202 = vadd.f32 %v1132, %v1191
    %v1203 = vadd.f32 %v1133, %v1191
    %v1204 = vadd.f32 %v1134, %v1191
    %v1205 = vadd.f32 %v1135, %v1191
    %v1206 = vadd.f32 %v1136, %v1191
    %v1207 = vadd.f32 %v1137, %v1191
    %v1208 = vadd.f32 %v1138, %v1191
    %v1209 = vadd.f32 %v1139, %v1191
    %v1210 = vadd.f32 %v1140, %v1191
    %v1211 = vadd.f32 %v1141, %v1191
    %v1212 = vadd.f32 %v1142, %v1191
    %v1213 = vadd.f32 %v1143, %v1191
    %v1214 = vadd.f32 %v1144, %v1191
    %v1215 = vadd.f32 %v1145, %v1191
    %v1216 = vadd.f32 %v1146, %v1191
    %v1217 = vadd.f32 %v1147, %v1191
    %v1218 = vadd.f32 %v1148, %v1191
    %v1219 = vadd.f32 %v1149, %v1191
    %v1220 = vadd.f32 %v1150, %v1191
    %v1221 = vadd.f32 %v1151, %v1191
    %v1222 = vadd.f32 %v1152, %v1191
    %v1223 = vadd.f32 %v1153, %v1191
    %v1224 = vadd.f32 %v1154, %v1191
    %v1225 = vadd.f32 %v1155, %v1191
    %v1226 = vadd.f32 %v1156, %v1191
    %v1227 = vadd.f32 %v1157, %v1191
    %v1228 = vadd.f32 %v1158, %v1191
    %v1229 = vadd.f32 %v1159, %v1191
    %v1230 = vadd.f32 %v1160, %v1191
    %v1231 = vadd.f32 %v1161, %v1191
    %v1232 = vadd.f32 %v1162, %v1191
    %v1233 = vadd.f32 %v1163, %v1191
    %v1234 = vadd.f32 %v1164, %v1191
    %v1235 = vadd.f32 %v1165, %v1191
    %v1236 = vadd.f32 %v1166, %v1191
    %v1237 = vadd.f32 %v1167, %v1191
    %v1238 = vadd.f32 %v1168, %v1191
    %v1239 = vadd.f32 %v1169, %v1191
    %v1240 = vadd.f32 %v1170, %v1191
    %v1241 = vadd.f32 %v1171, %v1191
    %v1242 = vadd.f32 %v1172, %v1191
    %v1243 = vadd.f32 %v1173, %v1191
    %v1244 = vadd.f32 %v1174, %v1191
    %v1245 = vadd.f32 %v1175, %v1191
    %v1246 = vadd.f32 %v1176, %v1191
    %v1247 = vadd.f32 %v1177, %v1191
    %v1248 = vadd.f32 %v1178, %v1191
    %v1249 = vadd.f32 %v1179, %v1191
    %v1250 = vadd.f32 %v1180, %v1191
    %v1251 = vadd.f32 %v1181, %v1191
    %v1252 = vadd.f32 %v1182, %v1191
    %v1253 = vadd.f32 %v1183, %v1191
    %v1254 = vadd.f32 %v1184, %v1191
    %v1255 = vadd.f32 %v1185, %v1191
    %v1256 = vadd.f32 %v1186, %v1191
    %v1257 = vmax.f32 %v1193, 0.0
    %v1258 = vmax.f32 %v1194, 0.0
    %v1259 = vmax.f32 %v1195, 0.0
    %v1260 = vmax.f32 %v1196, 0.0
    %v1261 = vmax.f32 %v1197, 0.0
    %v1262 = vmax.f32 %v1198, 0.0
    %v1263 = vmax.f32 %v1199, 0.0
    %v1264 = vmax.f32 %v1200, 0.0
    %v1265 = vmax.f32 %v1201, 0.0
    %v1266 = vmax.f32 %v1202, 0.0
    %v1267 = vmax.f32 %v1203, 0.0
    %v1268 = vmax.f32 %v1204, 0.0
    %v1269 = vmax.f32 %v1205, 0.0
    %v1270 = vmax.f32 %v1206, 0.0
    %v1271 = vmax.f32 %v1207, 0.0
    %v1272 = vmax.f32 %v1208, 0.0
    %v1273 = vmax.f32 %v1209, 0.0
    %v1274 = vmax.f32 %v1210, 0.0
    %v1275 = vmax.f32 %v1211, 0.0
    %v1276 = vmax.f32 %v1212, 0.0
    %v1277 = vmax.f32 %v1213, 0.0
    %v1278 = vmax.f32 %v1214, 0.0
    %v1279 = vmax.f32 %v1215, 0.0
    %v1280 = vmax.f32 %v1216, 0.0
    %v1281 = vmax.f32 %v1217, 0.0
    %v1282 = vmax.f32 %v1218, 0.0
    %v1283 = vmax.f32 %v1219, 0.0
    %v1284 = vmax.f32 %v1220, 0.0
    %v1285 = vmax.f32 %v1221, 0.0
    %v1286 = vmax.f32 %v1222, 0.0
    %v1287 = vmax.f32 %v1223, 0.0
    %v1288 = vmax.f32 %v1224, 0.0
    %v1289 = vmax.f32 %v1225, 0.0
    %v1290 = vmax.f32 %v1226, 0.0
    %v1291 = vmax.f32 %v1227, 0.0
    %v1292 = vmax.f32 %v1228, 0.0
    %v1293 = vmax.f32 %v1229, 0.0
    %v1294 = vmax.f32 %v1230, 0.0
    %v1295 = vmax.f32 %v1231, 0.0
    %v1296 = vmax.f32 %v1232, 0.0
    %v1297 = vmax.f32 %v1233, 0.0
    %v1298 = vmax.f32 %v1234, 0.0
    %v1299 = vmax.f32 %v1235, 0.0
    %v1300 = vmax.f32 %v1236, 0.0
    %v1301 = vmax.f32 %v1237, 0.0
    %v1302 = vmax.f32 %v1238, 0.0
    %v1303 = vmax.f32 %v1239, 0.0
    %v1304 = vmax.f32 %v1240, 0.0
    %v1305 = vmax.f32 %v1241, 0.0
    %v1306 = vmax.f32 %v1242, 0.0
    %v1307 = vmax.f32 %v1243, 0.0
    %v1308 = vmax.f32 %v1244, 0.0
    %v1309 = vmax.f32 %v1245, 0.0
    %v1310 = vmax.f32 %v1246, 0.0
    %v1311 = vmax.f32 %v1247, 0.0
    %v1312 = vmax.f32 %v1248, 0.0
    %v1313 = vmax.f32 %v1249, 0.0
    %v1314 = vmax.f32 %v1250, 0.0
    %v1315 = vmax.f32 %v1251, 0.0
    %v1316 = vmax.f32 %v1252, 0.0
    %v1317 = vmax.f32 %v1253, 0.0
    %v1318 = vmax.f32 %v1254, 0.0
    %v1319 = vmax.f32 %v1255, 0.0
    %v1320 = vmax.f32 %v1256, 0.0
    %1321 = vst.msk [vmem:[#allocation3] sm:$0xff] %vm646, %v1257
    %1322 = vst.msk [vmem:[#allocation3 + $0x8] sm:$0xff] %vm646, %v1258
    %1323 = vst.msk [vmem:[#allocation3 + $0x18] sm:$0xff] %vm646, %v1259
    %1324 = vst.msk [vmem:[#allocation3 + $0x20] sm:$0xff] %vm646, %v1260
    %1325 = vst.msk [vmem:[#allocation3 + $0x30] sm:$0xff] %vm646, %v1261
    %1326 = vst.msk [vmem:[#allocation3 + $0x38] sm:$0xff] %vm646, %v1262
    %1327 = vst.msk [vmem:[#allocation3 + $0x48] sm:$0xff] %vm646, %v1263
    %1328 = vst.msk [vmem:[#allocation3 + $0x50] sm:$0xff] %vm646, %v1264
    %1329 = vst.msk [vmem:[#allocation3 + $0x60] sm:$0xff] %vm646, %v1265
    %1330 = vst.msk [vmem:[#allocation3 + $0x68] sm:$0xff] %vm646, %v1266
    %1331 = vst.msk [vmem:[#allocation3 + $0x78] sm:$0xff] %vm646, %v1267
    %1332 = vst.msk [vmem:[#allocation3 + $0x80] sm:$0xff] %vm646, %v1268
    %1333 = vst.msk [vmem:[#allocation3 + $0x90] sm:$0xff] %vm646, %v1269
    %1334 = vst.msk [vmem:[#allocation3 + $0x98] sm:$0xff] %vm646, %v1270
    %1335 = vst.msk [vmem:[#allocation3 + $0xa8] sm:$0xff] %vm646, %v1271
    %1336 = vst.msk [vmem:[#allocation3 + $0xb0] sm:$0xff] %vm646, %v1272
    %1337 = vst.msk [vmem:[#allocation3 + $0xc0] sm:$0xff] %vm646, %v1273
    %1338 = vst.msk [vmem:[#allocation3 + $0xc8] sm:$0xff] %vm646, %v1274
    %1339 = vst.msk [vmem:[#allocation3 + $0xd8] sm:$0xff] %vm646, %v1275
    %1340 = vst.msk [vmem:[#allocation3 + $0xe0] sm:$0xff] %vm646, %v1276
    %1341 = vst.msk [vmem:[#allocation3 + $0xf0] sm:$0xff] %vm646, %v1277
    %1342 = vst.msk [vmem:[#allocation3 + $0xf8] sm:$0xff] %vm646, %v1278
    %1343 = vst.msk [vmem:[#allocation3 + $0x108] sm:$0xff] %vm646, %v1279
    %1344 = vst.msk [vmem:[#allocation3 + $0x110] sm:$0xff] %vm646, %v1280
    %1345 = vst.msk [vmem:[#allocation3 + $0x120] sm:$0xff] %vm646, %v1281
    %1346 = vst.msk [vmem:[#allocation3 + $0x128] sm:$0xff] %vm646, %v1282
    %1347 = vst.msk [vmem:[#allocation3 + $0x138] sm:$0xff] %vm646, %v1283
    %1348 = vst.msk [vmem:[#allocation3 + $0x140] sm:$0xff] %vm646, %v1284
    %1349 = vst.msk [vmem:[#allocation3 + $0x150] sm:$0xff] %vm646, %v1285
    %1350 = vst.msk [vmem:[#allocation3 + $0x158] sm:$0xff] %vm646, %v1286
    %1351 = vst.msk [vmem:[#allocation3 + $0x168] sm:$0xff] %vm646, %v1287
    %1352 = vst.msk [vmem:[#allocation3 + $0x170] sm:$0xff] %vm646, %v1288
    %1353 = vst.msk [vmem:[#allocation3 + $0x198] sm:$0xff] %vm646, %v1289
    %1354 = vst.msk [vmem:[#allocation3 + $0x1a0] sm:$0xff] %vm646, %v1290
    %1355 = vst.msk [vmem:[#allocation3 + $0x1b0] sm:$0xff] %vm646, %v1291
    %1356 = vst.msk [vmem:[#allocation3 + $0x1b8] sm:$0xff] %vm646, %v1292
    %1357 = vst.msk [vmem:[#allocation3 + $0x1c8] sm:$0xff] %vm646, %v1293
    %1358 = vst.msk [vmem:[#allocation3 + $0x1d0] sm:$0xff] %vm646, %v1294
    %1359 = vst.msk [vmem:[#allocation3 + $0x1e0] sm:$0xff] %vm646, %v1295
    %1360 = vst.msk [vmem:[#allocation3 + $0x1e8] sm:$0xff] %vm646, %v1296
    %1361 = vst.msk [vmem:[#allocation3 + $0x1f8] sm:$0xff] %vm646, %v1297
    %1362 = vst.msk [vmem:[#allocation3 + $0x200] sm:$0xff] %vm646, %v1298
    %1363 = vst.msk [vmem:[#allocation3 + $0x210] sm:$0xff] %vm646, %v1299
    %1364 = vst.msk [vmem:[#allocation3 + $0x218] sm:$0xff] %vm646, %v1300
    %1365 = vst.msk [vmem:[#allocation3 + $0x228] sm:$0xff] %vm646, %v1301
    %1366 = vst.msk [vmem:[#allocation3 + $0x230] sm:$0xff] %vm646, %v1302
    %1367 = vst.msk [vmem:[#allocation3 + $0x240] sm:$0xff] %vm646, %v1303
    %1368 = vst.msk [vmem:[#allocation3 + $0x248] sm:$0xff] %vm646, %v1304
    %1369 = vst.msk [vmem:[#allocation3 + $0x258] sm:$0xff] %vm646, %v1305
    %1370 = vst.msk [vmem:[#allocation3 + $0x260] sm:$0xff] %vm646, %v1306
    %1371 = vst.msk [vmem:[#allocation3 + $0x270] sm:$0xff] %vm646, %v1307
    %1372 = vst.msk [vmem:[#allocation3 + $0x278] sm:$0xff] %vm646, %v1308
    %1373 = vst.msk [vmem:[#allocation3 + $0x288] sm:$0xff] %vm646, %v1309
    %1374 = vst.msk [vmem:[#allocation3 + $0x290] sm:$0xff] %vm646, %v1310
    %1375 = vst.msk [vmem:[#allocation3 + $0x2a0] sm:$0xff] %vm646, %v1311
    %1376 = vst.msk [vmem:[#allocation3 + $0x2a8] sm:$0xff] %vm646, %v1312
    %1377 = vst.msk [vmem:[#allocation3 + $0x2b8] sm:$0xff] %vm646, %v1313
    %1378 = vst.msk [vmem:[#allocation3 + $0x2c0] sm:$0xff] %vm646, %v1314
    %1379 = vst.msk [vmem:[#allocation3 + $0x2d0] sm:$0xff] %vm646, %v1315
    %1380 = vst.msk [vmem:[#allocation3 + $0x2d8] sm:$0xff] %vm646, %v1316
    %1381 = vst.msk [vmem:[#allocation3 + $0x2e8] sm:$0xff] %vm646, %v1317
    %1382 = vst.msk [vmem:[#allocation3 + $0x2f0] sm:$0xff] %vm646, %v1318
    %1383 = vst.msk [vmem:[#allocation3 + $0x300] sm:$0xff] %vm646, %v1319
    %1384 = vst.msk [vmem:[#allocation3 + $0x308] sm:$0xff] %vm646, %v1320
    %s1385 = scalar_lea.vmem [#allocation3], 384
    %1386 = vst.msk [vmem:[%s1385] sm:$0xff] %vm646, 0.0
    %1387 = vst.msk [vmem:[%s1385 + $0x8] sm:$0xff] %vm646, 0.0
    %vm1388 = vcmask 122880
    %1389 = vst.msk [vmem:[%s1385 + $0x10] sm:$0x1] %vm1388, 0.0
    %1390 = vst.msk [vmem:[%s1385 + $0x198] sm:$0xff] %vm646, 0.0
    %1391 = vst.msk [vmem:[%s1385 + $0x1a0] sm:$0xff] %vm646, 0.0
    %1392 = vst.msk [vmem:[%s1385 + $0x1a8] sm:$0x1] %vm1388, 0.0
    %1393 = vst.msk [vmem:[#allocation3 + $0x10] sm:$0x1] %vm1388, 0.0
    %1394 = vst.msk [vmem:[#allocation3 + $0x28] sm:$0x1] %vm1388, 0.0
    %1395 = vst.msk [vmem:[#allocation3 + $0x40] sm:$0x1] %vm1388, 0.0
    %1396 = vst.msk [vmem:[#allocation3 + $0x58] sm:$0x1] %vm1388, 0.0
    %1397 = vst.msk [vmem:[#allocation3 + $0x70] sm:$0x1] %vm1388, 0.0
    %1398 = vst.msk [vmem:[#allocation3 + $0x88] sm:$0x1] %vm1388, 0.0
    %1399 = vst.msk [vmem:[#allocation3 + $0xa0] sm:$0x1] %vm1388, 0.0
    %1400 = vst.msk [vmem:[#allocation3 + $0xb8] sm:$0x1] %vm1388, 0.0
    %1401 = vst.msk [vmem:[#allocation3 + $0xd0] sm:$0x1] %vm1388, 0.0
    %1402 = vst.msk [vmem:[#allocation3 + $0xe8] sm:$0x1] %vm1388, 0.0
    %1403 = vst.msk [vmem:[#allocation3 + $0x100] sm:$0x1] %vm1388, 0.0
    %1404 = vst.msk [vmem:[#allocation3 + $0x118] sm:$0x1] %vm1388, 0.0
    %1405 = vst.msk [vmem:[#allocation3 + $0x130] sm:$0x1] %vm1388, 0.0
    %1406 = vst.msk [vmem:[#allocation3 + $0x148] sm:$0x1] %vm1388, 0.0
    %1407 = vst.msk [vmem:[#allocation3 + $0x160] sm:$0x1] %vm1388, 0.0
    %1408 = vst.msk [vmem:[#allocation3 + $0x178] sm:$0x1] %vm1388, 0.0
    %1409 = vst.msk [vmem:[#allocation3 + $0x190] sm:$0x1] %vm1388, 0.0
    %1410 = vst.msk [vmem:[#allocation3 + $0x1a8] sm:$0x1] %vm1388, 0.0
    %1411 = vst.msk [vmem:[#allocation3 + $0x1c0] sm:$0x1] %vm1388, 0.0
    %1412 = vst.msk [vmem:[#allocation3 + $0x1d8] sm:$0x1] %vm1388, 0.0
    %1413 = vst.msk [vmem:[#allocation3 + $0x1f0] sm:$0x1] %vm1388, 0.0
    %1414 = vst.msk [vmem:[#allocation3 + $0x208] sm:$0x1] %vm1388, 0.0
    %1415 = vst.msk [vmem:[#allocation3 + $0x220] sm:$0x1] %vm1388, 0.0
    %1416 = vst.msk [vmem:[#allocation3 + $0x238] sm:$0x1] %vm1388, 0.0
    %1417 = vst.msk [vmem:[#allocation3 + $0x250] sm:$0x1] %vm1388, 0.0
    %1418 = vst.msk [vmem:[#allocation3 + $0x268] sm:$0x1] %vm1388, 0.0
    %1419 = vst.msk [vmem:[#allocation3 + $0x280] sm:$0x1] %vm1388, 0.0
    %1420 = vst.msk [vmem:[#allocation3 + $0x298] sm:$0x1] %vm1388, 0.0
    %1421 = vst.msk [vmem:[#allocation3 + $0x2b0] sm:$0x1] %vm1388, 0.0
    %1422 = vst.msk [vmem:[#allocation3 + $0x2c8] sm:$0x1] %vm1388, 0.0
    %1423 = vst.msk [vmem:[#allocation3 + $0x2e0] sm:$0x1] %vm1388, 0.0
    %1424 = vst.msk [vmem:[#allocation3 + $0x2f8] sm:$0x1] %vm1388, 0.0
    %1425 = vst.msk [vmem:[#allocation3 + $0x310] sm:$0x1] %vm1388, 0.0
    %1426 = vst.msk [vmem:[#allocation3 + $0x328] sm:$0x1] %vm1388, 0.0
    %v1427 = vld [vmem:[#allocation3] ss:$2 sm:$0xff]
    %s1428 = scalar_lea.vmem [#allocation3], 24
    %v1429 = vld [vmem:[%s1428] ss:$2 sm:$0xff]
    %s1430 = scalar_lea.vmem [#allocation3], 48
    %v1431 = vld [vmem:[%s1430] ss:$2 sm:$0xff]
    %s1432 = scalar_lea.vmem [#allocation3], 72
    %v1433 = vld [vmem:[%s1432] ss:$2 sm:$0xff]
    %s1434 = scalar_lea.vmem [#allocation3], 96
    %v1435 = vld [vmem:[%s1434] ss:$2 sm:$0xff]
    %s1436 = scalar_lea.vmem [#allocation3], 120
    %v1437 = vld [vmem:[%s1436] ss:$2 sm:$0xff]
    %s1438 = scalar_lea.vmem [#allocation3], 144
    %v1439 = vld [vmem:[%s1438] ss:$2 sm:$0xff]
    %s1440 = scalar_lea.vmem [#allocation3], 168
    %v1441 = vld [vmem:[%s1440] ss:$2 sm:$0xff]
    %s1442 = scalar_lea.vmem [#allocation3], 192
    %v1443 = vld [vmem:[%s1442] ss:$2 sm:$0xff]
    %s1444 = scalar_lea.vmem [#allocation3], 216
    %v1445 = vld [vmem:[%s1444] ss:$2 sm:$0xff]
    %s1446 = scalar_lea.vmem [#allocation3], 240
    %v1447 = vld [vmem:[%s1446] ss:$2 sm:$0xff]
    %s1448 = scalar_lea.vmem [#allocation3], 264
    %v1449 = vld [vmem:[%s1448] ss:$2 sm:$0xff]
    %s1450 = scalar_lea.vmem [#allocation3], 288
    %v1451 = vld [vmem:[%s1450] ss:$2 sm:$0xff]
    %s1452 = scalar_lea.vmem [#allocation3], 312
    %v1453 = vld [vmem:[%s1452] ss:$2 sm:$0xff]
    %s1454 = scalar_lea.vmem [#allocation3], 336
    %v1455 = vld [vmem:[%s1454] ss:$2 sm:$0xff]
    %s1456 = scalar_lea.vmem [#allocation3], 360
    %v1457 = vld [vmem:[%s1456] ss:$2 sm:$0xff]
    %s1458 = scalar_lea.vmem [#allocation3], 384
    %v1459 = vld [vmem:[%s1458] ss:$2 sm:$0xff]
    %s1460 = scalar_lea.vmem [#allocation3], 408
    %v1461 = vld [vmem:[%s1460] ss:$2 sm:$0xff]
    %s1462 = scalar_lea.vmem [#allocation3], 432
    %v1463 = vld [vmem:[%s1462] ss:$2 sm:$0xff]
    %s1464 = scalar_lea.vmem [#allocation3], 456
    %v1465 = vld [vmem:[%s1464] ss:$2 sm:$0xff]
    %s1466 = scalar_lea.vmem [#allocation3], 480
    %v1467 = vld [vmem:[%s1466] ss:$2 sm:$0xff]
    %s1468 = scalar_lea.vmem [#allocation3], 504
    %v1469 = vld [vmem:[%s1468] ss:$2 sm:$0xff]
    %s1470 = scalar_lea.vmem [#allocation3], 528
    %v1471 = vld [vmem:[%s1470] ss:$2 sm:$0xff]
    %s1472 = scalar_lea.vmem [#allocation3], 552
    %v1473 = vld [vmem:[%s1472] ss:$2 sm:$0xff]
    %s1474 = scalar_lea.vmem [#allocation3], 576
    %v1475 = vld [vmem:[%s1474] ss:$2 sm:$0xff]
    %s1476 = scalar_lea.vmem [#allocation3], 600
    %v1477 = vld [vmem:[%s1476] ss:$2 sm:$0xff]
    %s1478 = scalar_lea.vmem [#allocation3], 624
    %v1479 = vld [vmem:[%s1478] ss:$2 sm:$0xff]
    %s1480 = scalar_lea.vmem [#allocation3], 648
    %v1481 = vld [vmem:[%s1480] ss:$2 sm:$0xff]
    %s1482 = scalar_lea.vmem [#allocation3], 672
    %v1483 = vld [vmem:[%s1482] ss:$2 sm:$0xff]
    %s1484 = scalar_lea.vmem [#allocation3], 696
    %v1485 = vld [vmem:[%s1484] ss:$2 sm:$0xff]
    %s1486 = scalar_lea.vmem [#allocation3], 720
    %v1487 = vld [vmem:[%s1486] ss:$2 sm:$0xff]
    %s1488 = scalar_lea.vmem [#allocation3], 744
    %v1489 = vld [vmem:[%s1488] ss:$2 sm:$0xff]
    %s1490 = scalar_lea.vmem [#allocation3], 768
    %v1491 = vld [vmem:[%s1490] ss:$2 sm:$0xff]
    %s1492 = scalar_lea.vmem [#allocation3], 792
    %v1493 = vld [vmem:[%s1492] ss:$2 sm:$0xff]
    %s1494 = scalar_lea.vmem [#allocation3], 1
    %v1495 = vld [vmem:[%s1494] ss:$2 sm:$0xff]
    %s1496 = scalar_lea.vmem [#allocation3], 25
    %v1497 = vld [vmem:[%s1496] ss:$2 sm:$0xff]
    %s1498 = scalar_lea.vmem [#allocation3], 49
    %v1499 = vld [vmem:[%s1498] ss:$2 sm:$0xff]
    %s1500 = scalar_lea.vmem [#allocation3], 73
    %v1501 = vld [vmem:[%s1500] ss:$2 sm:$0xff]
    %s1502 = scalar_lea.vmem [#allocation3], 97
    %v1503 = vld [vmem:[%s1502] ss:$2 sm:$0xff]
    %s1504 = scalar_lea.vmem [#allocation3], 121
    %v1505 = vld [vmem:[%s1504] ss:$2 sm:$0xff]
    %s1506 = scalar_lea.vmem [#allocation3], 145
    %v1507 = vld [vmem:[%s1506] ss:$2 sm:$0xff]
    %s1508 = scalar_lea.vmem [#allocation3], 169
    %v1509 = vld [vmem:[%s1508] ss:$2 sm:$0xff]
    %s1510 = scalar_lea.vmem [#allocation3], 193
    %v1511 = vld [vmem:[%s1510] ss:$2 sm:$0xff]
    %s1512 = scalar_lea.vmem [#allocation3], 217
    %v1513 = vld [vmem:[%s1512] ss:$2 sm:$0xff]
    %s1514 = scalar_lea.vmem [#allocation3], 241
    %v1515 = vld [vmem:[%s1514] ss:$2 sm:$0xff]
    %s1516 = scalar_lea.vmem [#allocation3], 265
    %v1517 = vld [vmem:[%s1516] ss:$2 sm:$0xff]
    %s1518 = scalar_lea.vmem [#allocation3], 289
    %v1519 = vld [vmem:[%s1518] ss:$2 sm:$0xff]
    %s1520 = scalar_lea.vmem [#allocation3], 313
    %v1521 = vld [vmem:[%s1520] ss:$2 sm:$0xff]
    %s1522 = scalar_lea.vmem [#allocation3], 337
    %v1523 = vld [vmem:[%s1522] ss:$2 sm:$0xff]
    %s1524 = scalar_lea.vmem [#allocation3], 361
    %v1525 = vld [vmem:[%s1524] ss:$2 sm:$0xff]
    %s1526 = scalar_lea.vmem [#allocation3], 385
    %v1527 = vld [vmem:[%s1526] ss:$2 sm:$0xff]
    %s1528 = scalar_lea.vmem [#allocation3], 409
    %v1529 = vld [vmem:[%s1528] ss:$2 sm:$0xff]
    %s1530 = scalar_lea.vmem [#allocation3], 433
    %v1531 = vld [vmem:[%s1530] ss:$2 sm:$0xff]
    %s1532 = scalar_lea.vmem [#allocation3], 457
    %v1533 = vld [vmem:[%s1532] ss:$2 sm:$0xff]
    %s1534 = scalar_lea.vmem [#allocation3], 481
    %v1535 = vld [vmem:[%s1534] ss:$2 sm:$0xff]
    %s1536 = scalar_lea.vmem [#allocation3], 505
    %v1537 = vld [vmem:[%s1536] ss:$2 sm:$0xff]
    %s1538 = scalar_lea.vmem [#allocation3], 529
    %v1539 = vld [vmem:[%s1538] ss:$2 sm:$0xff]
    %s1540 = scalar_lea.vmem [#allocation3], 553
    %v1541 = vld [vmem:[%s1540] ss:$2 sm:$0xff]
    %s1542 = scalar_lea.vmem [#allocation3], 577
    %v1543 = vld [vmem:[%s1542] ss:$2 sm:$0xff]
    %s1544 = scalar_lea.vmem [#allocation3], 601
    %v1545 = vld [vmem:[%s1544] ss:$2 sm:$0xff]
    %s1546 = scalar_lea.vmem [#allocation3], 625
    %v1547 = vld [vmem:[%s1546] ss:$2 sm:$0xff]
    %s1548 = scalar_lea.vmem [#allocation3], 649
    %v1549 = vld [vmem:[%s1548] ss:$2 sm:$0xff]
    %s1550 = scalar_lea.vmem [#allocation3], 673
    %v1551 = vld [vmem:[%s1550] ss:$2 sm:$0xff]
    %s1552 = scalar_lea.vmem [#allocation3], 697
    %v1553 = vld [vmem:[%s1552] ss:$2 sm:$0xff]
    %s1554 = scalar_lea.vmem [#allocation3], 721
    %v1555 = vld [vmem:[%s1554] ss:$2 sm:$0xff]
    %s1556 = scalar_lea.vmem [#allocation3], 745
    %v1557 = vld [vmem:[%s1556] ss:$2 sm:$0xff]
    %s1558 = scalar_lea.vmem [#allocation3], 769
    %v1559 = vld [vmem:[%s1558] ss:$2 sm:$0xff]
    %s1560 = scalar_lea.vmem [#allocation3], 793
    %v1561 = vld [vmem:[%s1560] ss:$2 sm:$0xff]
    %s1562 = scalar_lea.vmem [#allocation3], 2
    %v1563 = vld [vmem:[%s1562] ss:$2 sm:$0xff]
    %s1564 = scalar_lea.vmem [#allocation3], 26
    %v1565 = vld [vmem:[%s1564] ss:$2 sm:$0xff]
    %s1566 = scalar_lea.vmem [#allocation3], 50
    %v1567 = vld [vmem:[%s1566] ss:$2 sm:$0xff]
    %s1568 = scalar_lea.vmem [#allocation3], 74
    %v1569 = vld [vmem:[%s1568] ss:$2 sm:$0xff]
    %s1570 = scalar_lea.vmem [#allocation3], 98
    %v1571 = vld [vmem:[%s1570] ss:$2 sm:$0xff]
    %s1572 = scalar_lea.vmem [#allocation3], 122
    %v1573 = vld [vmem:[%s1572] ss:$2 sm:$0xff]
    %s1574 = scalar_lea.vmem [#allocation3], 146
    %v1575 = vld [vmem:[%s1574] ss:$2 sm:$0xff]
    %s1576 = scalar_lea.vmem [#allocation3], 170
    %v1577 = vld [vmem:[%s1576] ss:$2 sm:$0xff]
    %s1578 = scalar_lea.vmem [#allocation3], 194
    %v1579 = vld [vmem:[%s1578] ss:$2 sm:$0xff]
    %s1580 = scalar_lea.vmem [#allocation3], 218
    %v1581 = vld [vmem:[%s1580] ss:$2 sm:$0xff]
    %s1582 = scalar_lea.vmem [#allocation3], 242
    %v1583 = vld [vmem:[%s1582] ss:$2 sm:$0xff]
    %s1584 = scalar_lea.vmem [#allocation3], 266
    %v1585 = vld [vmem:[%s1584] ss:$2 sm:$0xff]
    %s1586 = scalar_lea.vmem [#allocation3], 290
    %v1587 = vld [vmem:[%s1586] ss:$2 sm:$0xff]
    %s1588 = scalar_lea.vmem [#allocation3], 314
    %v1589 = vld [vmem:[%s1588] ss:$2 sm:$0xff]
    %s1590 = scalar_lea.vmem [#allocation3], 338
    %v1591 = vld [vmem:[%s1590] ss:$2 sm:$0xff]
    %s1592 = scalar_lea.vmem [#allocation3], 362
    %v1593 = vld [vmem:[%s1592] ss:$2 sm:$0xff]
    %s1594 = scalar_lea.vmem [#allocation3], 386
    %v1595 = vld [vmem:[%s1594] ss:$2 sm:$0xff]
    %s1596 = scalar_lea.vmem [#allocation3], 410
    %v1597 = vld [vmem:[%s1596] ss:$2 sm:$0xff]
    %s1598 = scalar_lea.vmem [#allocation3], 434
    %v1599 = vld [vmem:[%s1598] ss:$2 sm:$0xff]
    %s1600 = scalar_lea.vmem [#allocation3], 458
    %v1601 = vld [vmem:[%s1600] ss:$2 sm:$0xff]
    %s1602 = scalar_lea.vmem [#allocation3], 482
    %v1603 = vld [vmem:[%s1602] ss:$2 sm:$0xff]
    %s1604 = scalar_lea.vmem [#allocation3], 506
    %v1605 = vld [vmem:[%s1604] ss:$2 sm:$0xff]
    %s1606 = scalar_lea.vmem [#allocation3], 530
    %v1607 = vld [vmem:[%s1606] ss:$2 sm:$0xff]
    %s1608 = scalar_lea.vmem [#allocation3], 554
    %v1609 = vld [vmem:[%s1608] ss:$2 sm:$0xff]
    %s1610 = scalar_lea.vmem [#allocation3], 578
    %v1611 = vld [vmem:[%s1610] ss:$2 sm:$0xff]
    %s1612 = scalar_lea.vmem [#allocation3], 602
    %v1613 = vld [vmem:[%s1612] ss:$2 sm:$0xff]
    %s1614 = scalar_lea.vmem [#allocation3], 626
    %v1615 = vld [vmem:[%s1614] ss:$2 sm:$0xff]
    %s1616 = scalar_lea.vmem [#allocation3], 650
    %v1617 = vld [vmem:[%s1616] ss:$2 sm:$0xff]
    %s1618 = scalar_lea.vmem [#allocation3], 674
    %v1619 = vld [vmem:[%s1618] ss:$2 sm:$0xff]
    %s1620 = scalar_lea.vmem [#allocation3], 698
    %v1621 = vld [vmem:[%s1620] ss:$2 sm:$0xff]
    %s1622 = scalar_lea.vmem [#allocation3], 722
    %v1623 = vld [vmem:[%s1622] ss:$2 sm:$0xff]
    %s1624 = scalar_lea.vmem [#allocation3], 746
    %v1625 = vld [vmem:[%s1624] ss:$2 sm:$0xff]
    %s1626 = scalar_lea.vmem [#allocation3], 770
    %v1627 = vld [vmem:[%s1626] ss:$2 sm:$0xff]
    %s1628 = scalar_lea.vmem [#allocation3], 794
    %v1629 = vld [vmem:[%s1628] ss:$2 sm:$0xff]
    %v1630 = vmax.f32 %v1427, %v1495
    %v1631 = vmax.f32 %v1429, %v1497
    %v1632 = vmax.f32 %v1431, %v1499
    %v1633 = vmax.f32 %v1433, %v1501
    %v1634 = vmax.f32 %v1435, %v1503
    %v1635 = vmax.f32 %v1437, %v1505
    %v1636 = vmax.f32 %v1439, %v1507
    %v1637 = vmax.f32 %v1441, %v1509
    %v1638 = vmax.f32 %v1443, %v1511
    %v1639 = vmax.f32 %v1445, %v1513
    %v1640 = vmax.f32 %v1447, %v1515
    %v1641 = vmax.f32 %v1449, %v1517
    %v1642 = vmax.f32 %v1451, %v1519
    %v1643 = vmax.f32 %v1453, %v1521
    %v1644 = vmax.f32 %v1455, %v1523
    %v1645 = vmax.f32 %v1457, %v1525
    %v1646 = vmax.f32 %v1459, %v1527
    %v1647 = vmax.f32 %v1461, %v1529
    %v1648 = vmax.f32 %v1463, %v1531
    %v1649 = vmax.f32 %v1465, %v1533
    %v1650 = vmax.f32 %v1467, %v1535
    %v1651 = vmax.f32 %v1469, %v1537
    %v1652 = vmax.f32 %v1471, %v1539
    %v1653 = vmax.f32 %v1473, %v1541
    %v1654 = vmax.f32 %v1475, %v1543
    %v1655 = vmax.f32 %v1477, %v1545
    %v1656 = vmax.f32 %v1479, %v1547
    %v1657 = vmax.f32 %v1481, %v1549
    %v1658 = vmax.f32 %v1483, %v1551
    %v1659 = vmax.f32 %v1485, %v1553
    %v1660 = vmax.f32 %v1487, %v1555
    %v1661 = vmax.f32 %v1489, %v1557
    %v1662 = vmax.f32 %v1491, %v1559
    %v1663 = vmax.f32 %v1493, %v1561
    %v1664 = vmax.f32 %v1630, %v1563
    %v1665 = vmax.f32 %v1631, %v1565
    %v1666 = vmax.f32 %v1632, %v1567
    %v1667 = vmax.f32 %v1633, %v1569
    %v1668 = vmax.f32 %v1634, %v1571
    %v1669 = vmax.f32 %v1635, %v1573
    %v1670 = vmax.f32 %v1636, %v1575
    %v1671 = vmax.f32 %v1637, %v1577
    %v1672 = vmax.f32 %v1638, %v1579
    %v1673 = vmax.f32 %v1639, %v1581
    %v1674 = vmax.f32 %v1640, %v1583
    %v1675 = vmax.f32 %v1641, %v1585
    %v1676 = vmax.f32 %v1642, %v1587
    %v1677 = vmax.f32 %v1643, %v1589
    %v1678 = vmax.f32 %v1644, %v1591
    %v1679 = vmax.f32 %v1645, %v1593
    %v1680 = vmax.f32 %v1646, %v1595
    %v1681 = vmax.f32 %v1647, %v1597
    %v1682 = vmax.f32 %v1648, %v1599
    %v1683 = vmax.f32 %v1649, %v1601
    %v1684 = vmax.f32 %v1650, %v1603
    %v1685 = vmax.f32 %v1651, %v1605
    %v1686 = vmax.f32 %v1652, %v1607
    %v1687 = vmax.f32 %v1653, %v1609
    %v1688 = vmax.f32 %v1654, %v1611
    %v1689 = vmax.f32 %v1655, %v1613
    %v1690 = vmax.f32 %v1656, %v1615
    %v1691 = vmax.f32 %v1657, %v1617
    %v1692 = vmax.f32 %v1658, %v1619
    %v1693 = vmax.f32 %v1659, %v1621
    %v1694 = vmax.f32 %v1660, %v1623
    %v1695 = vmax.f32 %v1661, %v1625
    %v1696 = vmax.f32 %v1662, %v1627
    %v1697 = vmax.f32 %v1663, %v1629
    %v1698 = vmax.f32 %v1664, %v1665
    %v1699 = vmax.f32 %v1681, %v1682
    %v1700 = vmax.f32 %v1698, %v1666
    %v1701 = vmax.f32 %v1699, %v1683
    %v1702 = vmax.f32 %v1666, %v1667
    %v1703 = vmax.f32 %v1683, %v1684
    %v1704 = vmax.f32 %v1702, %v1668
    %v1705 = vmax.f32 %v1703, %v1685
    %v1706 = vmax.f32 %v1668, %v1669
    %v1707 = vmax.f32 %v1685, %v1686
    %v1708 = vmax.f32 %v1706, %v1670
    %v1709 = vmax.f32 %v1707, %v1687
    %v1710 = vmax.f32 %v1670, %v1671
    %v1711 = vmax.f32 %v1687, %v1688
    %v1712 = vmax.f32 %v1710, %v1672
    %v1713 = vmax.f32 %v1711, %v1689
    %v1714 = vmax.f32 %v1672, %v1673
    %v1715 = vmax.f32 %v1689, %v1690
    %v1716 = vmax.f32 %v1714, %v1674
    %v1717 = vmax.f32 %v1715, %v1691
    %v1718 = vmax.f32 %v1674, %v1675
    %v1719 = vmax.f32 %v1691, %v1692
    %v1720 = vmax.f32 %v1718, %v1676
    %v1721 = vmax.f32 %v1719, %v1693
    %v1722 = vmax.f32 %v1676, %v1677
    %v1723 = vmax.f32 %v1693, %v1694
    %v1724 = vmax.f32 %v1722, %v1678
    %v1725 = vmax.f32 %v1723, %v1695
    %v1726 = vmax.f32 %v1678, %v1679
    %v1727 = vmax.f32 %v1695, %v1696
    %v1728 = vmax.f32 %v1726, %v1680
    %v1729 = vmax.f32 %v1727, %v1697
    %v1730 = vpack.c.bf16 %v1704, %v1700
    %v1731 = vpack.c.bf16 %v1712, %v1708
    %v1732 = vpack.c.bf16 %v1720, %v1716
    %v1733 = vpack.c.bf16 %v1728, %v1724
    %v1734 = vpack.c.bf16 %v1705, %v1701
    %v1735 = vpack.c.bf16 %v1713, %v1709
    %v1736 = vpack.c.bf16 %v1721, %v1717
    %v1737 = vpack.c.bf16 %v1729, %v1725
    %v1738 = vld [vmem:[%s4] sm:$0xf]
    %v1739 = vld [vmem:[%s4 + $0x4] sm:$0xf]
    %v1742 = vunpack.c.l.b16 %v1738
    %v1743 = vunpack.c.l.b16 %v1739
    %v1744 = vpack.c.b16 %v1743, %v1742
    %v1747 = vsel %vm646, %v1730, 0
    %v1750 = vsel %vm646, %v1731, 0
    %v1753 = vsel %vm646, %v1732, 0
    %v1756 = vsel %vm646, %v1733, 0
    %v1759 = vsel %vm646, %v1734, 0
    %v1762 = vsel %vm646, %v1735, 0
    %v1765 = vsel %vm646, %v1736, 0
    %v1768 = vsel %vm646, %v1737, 0
    %1770 = vmatprep.subr.bf16.mxu0 0
    %1771 = vmatpush1.bf16.msra.mxu0 %v1744
    %1772 = vmatprep.subr.bf16.mxu0 0
    %1773 = vmatpush1.bf16.msra.mxu0 0
    %1774 = vmatprep.subr.bf16.mxu0 0
    %1775 = vmatpush1.bf16.msra.mxu0 0
    %1776 = vmatprep.subr.bf16.mxu0 0
    %1777 = vmatpush1.bf16.msra.mxu0 0
    %1778 = vmatprep.subr.bf16.mxu0 0
    %1779 = vmatpush1.bf16.msra.mxu0 0
    %1780 = vmatprep.subr.bf16.mxu0 0
    %1781 = vmatpush1.bf16.msra.mxu0 0
    %1782 = vmatprep.subr.bf16.mxu0 0
    %1783 = vmatpush1.bf16.msra.mxu0 0
    %1784 = vmatprep.subr.bf16.mxu0 0
    %1785 = vmatpush1.bf16.msra.mxu0 0
    %1786 = vmatprep.subr.bf16.mxu0 0
    %1787 = vmatpush1.bf16.msra.mxu0 0
    %1788 = vmatprep.subr.bf16.mxu0 0
    %1789 = vmatpush1.bf16.msra.mxu0 0
    %1790 = vmatprep.subr.bf16.mxu0 0
    %1791 = vmatpush1.bf16.msra.mxu0 0
    %1792 = vmatprep.subr.bf16.mxu0 0
    %1793 = vmatpush1.bf16.msra.mxu0 0
    %1794 = vmatprep.subr.bf16.mxu0 0
    %1795 = vmatpush1.bf16.msra.mxu0 0
    %1796 = vmatprep.subr.bf16.mxu0 0
    %1797 = vmatpush1.bf16.msra.mxu0 0
    %1798 = vmatprep.subr.bf16.mxu0 0
    %1799 = vmatpush1.bf16.msra.mxu0 0
    %1800 = vmatprep.subr.bf16.mxu0 0
    %1801 = vmatpush1.bf16.msra.mxu0 0
    %1802 = vmatprep.mubr.bf16.mxu0 0
    %1803 = vmatmul.mubr.bf16.gmra.mrb[0].mxu0 %v1747
    %v1804 = vpop.f32.mrb[0].mxu0
    %v1805 = vadd.f32 0.0, %v1804
    %v1806 = vpop.f32.mrb[0].mxu0
    %v1807 = vpop.f32.mrb[0].mxu0
    %v1808 = vadd.f32 0.0, %v1807
    %v1809 = vpop.f32.mrb[0].mxu0
    %1810 = vmatprep.mubr.bf16.mxu0 0
    %1811 = vmatmul.mubr.bf16.gmra.mrb[0].mxu0 %v1750
    %v1812 = vpop.f32.mrb[0].mxu0
    %v1813 = vadd.f32 0.0, %v1812
    %v1814 = vpop.f32.mrb[0].mxu0
    %v1815 = vpop.f32.mrb[0].mxu0
    %v1816 = vadd.f32 0.0, %v1815
    %v1817 = vpop.f32.mrb[0].mxu0
    %1818 = vmatprep.mubr.bf16.mxu0 0
    %1819 = vmatmul.mubr.bf16.gmra.mrb[0].mxu0 %v1753
    %v1820 = vpop.f32.mrb[0].mxu0
    %v1821 = vadd.f32 0.0, %v1820
    %v1822 = vpop.f32.mrb[0].mxu0
    %v1823 = vpop.f32.mrb[0].mxu0
    %v1824 = vadd.f32 0.0, %v1823
    %v1825 = vpop.f32.mrb[0].mxu0
    %1826 = vmatprep.mubr.bf16.mxu0 0
    %1827 = vmatmul.mubr.bf16.gmra.mrb[0].mxu0 %v1756
    %v1828 = vpop.f32.mrb[0].mxu0
    %v1829 = vadd.f32 0.0, %v1828
    %v1830 = vpop.f32.mrb[0].mxu0
    %v1831 = vpop.f32.mrb[0].mxu0
    %v1832 = vadd.f32 0.0, %v1831
    %v1833 = vpop.f32.mrb[0].mxu0
    %1834 = vmatprep.mubr.bf16.mxu0 0
    %1835 = vmatmul.mubr.bf16.gmra.mrb[0].mxu0 %v1759
    %v1836 = vpop.f32.mrb[0].mxu0
    %v1837 = vadd.f32 0.0, %v1836
    %v1838 = vpop.f32.mrb[0].mxu0
    %v1839 = vpop.f32.mrb[0].mxu0
    %v1840 = vadd.f32 0.0, %v1839
    %v1841 = vpop.f32.mrb[0].mxu0
    %1842 = vmatprep.mubr.bf16.mxu0 0
    %1843 = vmatmul.mubr.bf16.gmra.mrb[0].mxu0 %v1762
    %v1844 = vpop.f32.mrb[0].mxu0
    %v1845 = vadd.f32 0.0, %v1844
    %v1846 = vpop.f32.mrb[0].mxu0
    %v1847 = vpop.f32.mrb[0].mxu0
    %v1848 = vadd.f32 0.0, %v1847
    %v1849 = vpop.f32.mrb[0].mxu0
    %1850 = vmatprep.mubr.bf16.mxu0 0
    %1851 = vmatmul.mubr.bf16.gmra.mrb[0].mxu0 %v1765
    %v1852 = vpop.f32.mrb[0].mxu0
    %v1853 = vadd.f32 0.0, %v1852
    %v1854 = vpop.f32.mrb[0].mxu0
    %v1855 = vpop.f32.mrb[0].mxu0
    %v1856 = vadd.f32 0.0, %v1855
    %v1857 = vpop.f32.mrb[0].mxu0
    %1858 = vmatprep.mubr.bf16.mxu0 0
    %1859 = vmatmul.mubr.bf16.gmra.mrb[0].mxu0 %v1768
    %v1860 = vpop.f32.mrb[0].mxu0
    %v1861 = vadd.f32 0.0, %v1860
    %v1862 = vpop.f32.mrb[0].mxu0
    %v1863 = vpop.f32.mrb[0].mxu0
    %v1864 = vadd.f32 0.0, %v1863
    %v1865 = vpop.f32.mrb[0].mxu0
    %1866 = vdwg.mxu0
    %v1867 = vld [vmem:[%s5] sm:$0x1]
    %v1868 = vld [vmem:[%s6] sm:$0x1]
    %vm1869 = vcmask 523264
    %v1870 = vsel %vm1869, %v1805, 0.0
    %v1871 = vsel %vm1869, %v1808, 0.0
    %v1872 = vadd.f32 %v1870, %v1871
    %v1873 = vsel %vm1869, %v1813, 0.0
    %v1874 = vadd.f32 %v1872, %v1873
    %v1875 = vsel %vm1869, %v1816, 0.0
    %v1876 = vadd.f32 %v1874, %v1875
    %v1877 = vsel %vm1869, %v1821, 0.0
    %v1878 = vadd.f32 %v1876, %v1877
    %v1879 = vsel %vm1869, %v1824, 0.0
    %v1880 = vadd.f32 %v1878, %v1879
    %v1881 = vsel %vm1869, %v1829, 0.0
    %v1882 = vadd.f32 %v1880, %v1881
    %v1883 = vsel %vm1869, %v1832, 0.0
    %v1884 = vadd.f32 %v1882, %v1883
    %v1885 = vsel %vm1869, %v1837, 0.0
    %v1886 = vadd.f32 %v1884, %v1885
    %v1887 = vsel %vm1869, %v1840, 0.0
    %v1888 = vadd.f32 %v1886, %v1887
    %v1889 = vsel %vm1869, %v1845, 0.0
    %v1890 = vadd.f32 %v1888, %v1889
    %v1891 = vsel %vm1869, %v1848, 0.0
    %v1892 = vadd.f32 %v1890, %v1891
    %v1893 = vsel %vm1869, %v1853, 0.0
    %v1894 = vadd.f32 %v1892, %v1893
    %v1895 = vsel %vm1869, %v1856, 0.0
    %v1896 = vadd.f32 %v1894, %v1895
    %v1897 = vsel %vm1869, %v1861, 0.0
    %v1898 = vadd.f32 %v1896, %v1897
    %v1899 = vsel %vm1869, %v1864, 0.0
    %v1900 = vadd.f32 %v1898, %v1899
    %v1901 = vrot.slane %v1900, 4
    %v1902 = vadd.f32 %v1900, %v1901
    %v1903 = vrot.slane %v1902, 2
    %v1904 = vadd.f32 %v1902, %v1903
    %v1905 = vrot.slane %v1904, 1
    %v1906 = vadd.f32 %v1904, %v1905
    %v1907 = vmul.f32 %v1805, %v1805
    %v1908 = vmul.f32 %v1808, %v1808
    %v1909 = vmul.f32 %v1813, %v1813
    %v1910 = vmul.f32 %v1816, %v1816
    %v1911 = vmul.f32 %v1821, %v1821
    %v1912 = vmul.f32 %v1824, %v1824
    %v1913 = vmul.f32 %v1829, %v1829
    %v1914 = vmul.f32 %v1832, %v1832
    %v1915 = vmul.f32 %v1837, %v1837
    %v1916 = vmul.f32 %v1840, %v1840
    %v1917 = vmul.f32 %v1845, %v1845
    %v1918 = vmul.f32 %v1848, %v1848
    %v1919 = vmul.f32 %v1853, %v1853
    %v1920 = vmul.f32 %v1856, %v1856
    %v1921 = vmul.f32 %v1861, %v1861
    %v1922 = vmul.f32 %v1864, %v1864
    %v1923 = vsel %vm1869, %v1907, 0.0
    %v1924 = vsel %vm1869, %v1908, 0.0
    %v1925 = vadd.f32 %v1923, %v1924
    %v1926 = vsel %vm1869, %v1909, 0.0
    %v1927 = vadd.f32 %v1925, %v1926
    %v1928 = vsel %vm1869, %v1910, 0.0
    %v1929 = vadd.f32 %v1927, %v1928
    %v1930 = vsel %vm1869, %v1911, 0.0
    %v1931 = vadd.f32 %v1929, %v1930
    %v1932 = vsel %vm1869, %v1912, 0.0
    %v1933 = vadd.f32 %v1931, %v1932
    %v1934 = vsel %vm1869, %v1913, 0.0
    %v1935 = vadd.f32 %v1933, %v1934
    %v1936 = vsel %vm1869, %v1914, 0.0
    %v1937 = vadd.f32 %v1935, %v1936
    %v1938 = vsel %vm1869, %v1915, 0.0
    %v1939 = vadd.f32 %v1937, %v1938
    %v1940 = vsel %vm1869, %v1916, 0.0
    %v1941 = vadd.f32 %v1939, %v1940
    %v1942 = vsel %vm1869, %v1917, 0.0
    %v1943 = vadd.f32 %v1941, %v1942
    %v1944 = vsel %vm1869, %v1918, 0.0
    %v1945 = vadd.f32 %v1943, %v1944
    %v1946 = vsel %vm1869, %v1919, 0.0
    %v1947 = vadd.f32 %v1945, %v1946
    %v1948 = vsel %vm1869, %v1920, 0.0
    %v1949 = vadd.f32 %v1947, %v1948
    %v1950 = vsel %vm1869, %v1921, 0.0
    %v1951 = vadd.f32 %v1949, %v1950
    %v1952 = vsel %vm1869, %v1922, 0.0
    %v1953 = vadd.f32 %v1951, %v1952
    %v1954 = vrot.slane %v1953, 4
    %v1955 = vadd.f32 %v1953, %v1954
    %v1956 = vrot.slane %v1955, 2
    %v1957 = vadd.f32 %v1955, %v1956
    %v1958 = vrot.slane %v1957, 1
    %v1959 = vadd.f32 %v1957, %v1958
    %v1960 = vmul.f32 %v1906, 0.0078125
    %v1961 = vmul.f32 %v1959, 0.0078125
    %v1962 = vmul.f32 %v1960, %v1960
    %v1963 = vsub.f32 %v1961, %v1962
    %v1964 = vmax.f32 %v1963, 0.0
    %v1965 = vadd.f32 %v1964, 0.001
    %v1966 = vrsqrt.pop %v1965
    %v1967 = vmul.f32 %v1867, %v1966
    %v1968 = vmul.f32 %v1960, %v1967
    %v1969 = vsub.f32 %v1868, %v1968
    %v1971 = vlaneseq
    %v1972 = vshrl.u32 %v1971, 7
    %v1973 = vsub.s32 0, %v1972
    %v1974 = vrot.slane %v1967, %v1973
    %v1976 = vmul.f32 %v1805, %v1974
    %v1977 = vmul.f32 %v1808, %v1974
    %v1978 = vmul.f32 %v1813, %v1974
    %v1979 = vmul.f32 %v1816, %v1974
    %v1980 = vmul.f32 %v1821, %v1974
    %v1981 = vmul.f32 %v1824, %v1974
    %v1982 = vmul.f32 %v1829, %v1974
    %v1983 = vmul.f32 %v1832, %v1974
    %v1984 = vmul.f32 %v1837, %v1974
    %v1985 = vmul.f32 %v1840, %v1974
    %v1986 = vmul.f32 %v1845, %v1974
    %v1987 = vmul.f32 %v1848, %v1974
    %v1988 = vmul.f32 %v1853, %v1974
    %v1989 = vmul.f32 %v1856, %v1974
    %v1990 = vmul.f32 %v1861, %v1974
    %v1991 = vmul.f32 %v1864, %v1974
    %v1993 = vlaneseq
    %v1994 = vshrl.u32 %v1993, 7
    %v1995 = vsub.s32 0, %v1994
    %v1996 = vrot.slane %v1969, %v1995
    %v1998 = vadd.f32 %v1976, %v1996
    %v1999 = vadd.f32 %v1977, %v1996
    %v2000 = vadd.f32 %v1978, %v1996
    %v2001 = vadd.f32 %v1979, %v1996
    %v2002 = vadd.f32 %v1980, %v1996
    %v2003 = vadd.f32 %v1981, %v1996
    %v2004 = vadd.f32 %v1982, %v1996
    %v2005 = vadd.f32 %v1983, %v1996
    %v2006 = vadd.f32 %v1984, %v1996
    %v2007 = vadd.f32 %v1985, %v1996
    %v2008 = vadd.f32 %v1986, %v1996
    %v2009 = vadd.f32 %v1987, %v1996
    %v2010 = vadd.f32 %v1988, %v1996
    %v2011 = vadd.f32 %v1989, %v1996
    %v2012 = vadd.f32 %v1990, %v1996
    %v2013 = vadd.f32 %v1991, %v1996
    %v2014 = vmax.f32 %v1998, 0.0
    %v2015 = vmax.f32 %v1999, 0.0
    %v2016 = vmax.f32 %v2000, 0.0
    %v2017 = vmax.f32 %v2001, 0.0
    %v2018 = vmax.f32 %v2002, 0.0
    %v2019 = vmax.f32 %v2003, 0.0
    %v2020 = vmax.f32 %v2004, 0.0
    %v2021 = vmax.f32 %v2005, 0.0
    %v2022 = vmax.f32 %v2006, 0.0
    %v2023 = vmax.f32 %v2007, 0.0
    %v2024 = vmax.f32 %v2008, 0.0
    %v2025 = vmax.f32 %v2009, 0.0
    %v2026 = vmax.f32 %v2010, 0.0
    %v2027 = vmax.f32 %v2011, 0.0
    %v2028 = vmax.f32 %v2012, 0.0
    %v2029 = vmax.f32 %v2013, 0.0
    %s2030 = scalar_lea.vmem [#allocation4], 16
    %2031 = vst.msk [vmem:[%s2030 + $0x1] sm:$0xff] %vm1869, %v2014
    %2032 = vst.msk [vmem:[%s2030 + $0x11] sm:$0xff] %vm1869, %v2015
    %2033 = vst.msk [vmem:[%s2030 + $0x21] sm:$0xff] %vm1869, %v2016
    %2034 = vst.msk [vmem:[%s2030 + $0x31] sm:$0xff] %vm1869, %v2017
    %2035 = vst.msk [vmem:[%s2030 + $0x41] sm:$0xff] %vm1869, %v2018
    %2036 = vst.msk [vmem:[%s2030 + $0x51] sm:$0xff] %vm1869, %v2019
    %2037 = vst.msk [vmem:[%s2030 + $0x61] sm:$0xff] %vm1869, %v2020
    %2038 = vst.msk [vmem:[%s2030 + $0x71] sm:$0xff] %vm1869, %v2021
    %2039 = vst.msk [vmem:[%s2030 + $0xa1] sm:$0xff] %vm1869, %v2022
    %2040 = vst.msk [vmem:[%s2030 + $0xb1] sm:$0xff] %vm1869, %v2023
    %2041 = vst.msk [vmem:[%s2030 + $0xc1] sm:$0xff] %vm1869, %v2024
    %2042 = vst.msk [vmem:[%s2030 + $0xd1] sm:$0xff] %vm1869, %v2025
    %2043 = vst.msk [vmem:[%s2030 + $0xe1] sm:$0xff] %vm1869, %v2026
    %2044 = vst.msk [vmem:[%s2030 + $0xf1] sm:$0xff] %vm1869, %v2027
    %2045 = vst.msk [vmem:[%s2030 + $0x101] sm:$0xff] %vm1869, %v2028
    %2046 = vst.msk [vmem:[%s2030 + $0x111] sm:$0xff] %vm1869, %v2029
    %2047 = vst.msk [vmem:[#allocation4] sm:$0xff] %vm1869, 0.0
    %vm2048 = vcmask 517120
    %2049 = vst.msk [vmem:[#allocation4 + $0x8] sm:$0x3] %vm2048, 0.0
    %2050 = vst.msk [vmem:[#allocation4 + $0xa0] sm:$0xff] %vm1869, 0.0
    %2051 = vst.msk [vmem:[#allocation4 + $0xa8] sm:$0x3] %vm2048, 0.0
    %s2052 = scalar_lea.vmem [#allocation4], 144
    %2053 = vst.msk [vmem:[%s2052] sm:$0xff] %vm1869, 0.0
    %2054 = vst.msk [vmem:[%s2052 + $0x8] sm:$0x3] %vm2048, 0.0
    %2055 = vst.msk [vmem:[%s2052 + $0xa0] sm:$0xff] %vm1869, 0.0
    %2056 = vst.msk [vmem:[%s2052 + $0xa8] sm:$0x3] %vm2048, 0.0
    %vm2057 = vcmask 516096
    %2058 = vst.msk [vmem:[#allocation4] sm:$0x1] %vm2057, 0.0
    %2059 = vst.msk [vmem:[#allocation4 + $0x10] sm:$0x1] %vm2057, 0.0
    %2060 = vst.msk [vmem:[#allocation4 + $0x20] sm:$0x1] %vm2057, 0.0
    %2061 = vst.msk [vmem:[#allocation4 + $0x30] sm:$0x1] %vm2057, 0.0
    %2062 = vst.msk [vmem:[#allocation4 + $0x40] sm:$0x1] %vm2057, 0.0
    %2063 = vst.msk [vmem:[#allocation4 + $0x50] sm:$0x1] %vm2057, 0.0
    %2064 = vst.msk [vmem:[#allocation4 + $0x60] sm:$0x1] %vm2057, 0.0
    %2065 = vst.msk [vmem:[#allocation4 + $0x70] sm:$0x1] %vm2057, 0.0
    %2066 = vst.msk [vmem:[#allocation4 + $0x80] sm:$0x1] %vm2057, 0.0
    %2067 = vst.msk [vmem:[#allocation4 + $0x90] sm:$0x1] %vm2057, 0.0
    %2068 = vst.msk [vmem:[#allocation4 + $0xa0] sm:$0x1] %vm2057, 0.0
    %2069 = vst.msk [vmem:[#allocation4 + $0xb0] sm:$0x1] %vm2057, 0.0
    %2070 = vst.msk [vmem:[#allocation4 + $0xc0] sm:$0x1] %vm2057, 0.0
    %2071 = vst.msk [vmem:[#allocation4 + $0xd0] sm:$0x1] %vm2057, 0.0
    %2072 = vst.msk [vmem:[#allocation4 + $0xe0] sm:$0x1] %vm2057, 0.0
    %2073 = vst.msk [vmem:[#allocation4 + $0xf0] sm:$0x1] %vm2057, 0.0
    %2074 = vst.msk [vmem:[#allocation4 + $0x100] sm:$0x1] %vm2057, 0.0
    %2075 = vst.msk [vmem:[#allocation4 + $0x110] sm:$0x1] %vm2057, 0.0
    %2076 = vst.msk [vmem:[#allocation4 + $0x120] sm:$0x1] %vm2057, 0.0
    %2077 = vst.msk [vmem:[#allocation4 + $0x130] sm:$0x1] %vm2057, 0.0
    %2078 = vst.msk [vmem:[#allocation4 + $0x9] sm:$0x1] %vm2057, 0.0
    %2079 = vst.msk [vmem:[#allocation4 + $0x19] sm:$0x1] %vm2057, 0.0
    %2080 = vst.msk [vmem:[#allocation4 + $0x29] sm:$0x1] %vm2057, 0.0
    %2081 = vst.msk [vmem:[#allocation4 + $0x39] sm:$0x1] %vm2057, 0.0
    %2082 = vst.msk [vmem:[#allocation4 + $0x49] sm:$0x1] %vm2057, 0.0
    %2083 = vst.msk [vmem:[#allocation4 + $0x59] sm:$0x1] %vm2057, 0.0
    %2084 = vst.msk [vmem:[#allocation4 + $0x69] sm:$0x1] %vm2057, 0.0
    %2085 = vst.msk [vmem:[#allocation4 + $0x79] sm:$0x1] %vm2057, 0.0
    %2086 = vst.msk [vmem:[#allocation4 + $0x89] sm:$0x1] %vm2057, 0.0
    %2087 = vst.msk [vmem:[#allocation4 + $0x99] sm:$0x1] %vm2057, 0.0
    %2088 = vst.msk [vmem:[#allocation4 + $0xa9] sm:$0x1] %vm2057, 0.0
    %2089 = vst.msk [vmem:[#allocation4 + $0xb9] sm:$0x1] %vm2057, 0.0
    %2090 = vst.msk [vmem:[#allocation4 + $0xc9] sm:$0x1] %vm2057, 0.0
    %2091 = vst.msk [vmem:[#allocation4 + $0xd9] sm:$0x1] %vm2057, 0.0
    %2092 = vst.msk [vmem:[#allocation4 + $0xe9] sm:$0x1] %vm2057, 0.0
    %2093 = vst.msk [vmem:[#allocation4 + $0xf9] sm:$0x1] %vm2057, 0.0
    %2094 = vst.msk [vmem:[#allocation4 + $0x109] sm:$0x1] %vm2057, 0.0
    %2095 = vst.msk [vmem:[#allocation4 + $0x119] sm:$0x1] %vm2057, 0.0
    %2096 = vst.msk [vmem:[#allocation4 + $0x129] sm:$0x1] %vm2057, 0.0
    %2097 = vst.msk [vmem:[#allocation4 + $0x139] sm:$0x1] %vm2057, 0.0
    %v2098 = vld [vmem:[#allocation4] sm:$0xff]
    %v2099 = vld [vmem:[#allocation4 + $0x10] sm:$0xff]
    %v2100 = vld [vmem:[#allocation4 + $0x20] sm:$0xff]
    %v2101 = vld [vmem:[#allocation4 + $0x30] sm:$0xff]
    %v2102 = vld [vmem:[#allocation4 + $0x40] sm:$0xff]
    %v2103 = vld [vmem:[#allocation4 + $0x50] sm:$0xff]
    %v2104 = vld [vmem:[#allocation4 + $0x60] sm:$0xff]
    %v2105 = vld [vmem:[#allocation4 + $0x70] sm:$0xff]
    %v2106 = vld [vmem:[#allocation4 + $0xa0] sm:$0xff]
    %v2107 = vld [vmem:[#allocation4 + $0xb0] sm:$0xff]
    %v2108 = vld [vmem:[#allocation4 + $0xc0] sm:$0xff]
    %v2109 = vld [vmem:[#allocation4 + $0xd0] sm:$0xff]
    %v2110 = vld [vmem:[#allocation4 + $0xe0] sm:$0xff]
    %v2111 = vld [vmem:[#allocation4 + $0xf0] sm:$0xff]
    %v2112 = vld [vmem:[#allocation4 + $0x100] sm:$0xff]
    %v2113 = vld [vmem:[#allocation4 + $0x110] sm:$0xff]
    %v2114 = vpack.c.bf16 %v2099, %v2098
    %v2115 = vpack.c.bf16 %v2101, %v2100
    %v2116 = vpack.c.bf16 %v2103, %v2102
    %v2117 = vpack.c.bf16 %v2105, %v2104
    %v2118 = vpack.c.bf16 %v2107, %v2106
    %v2119 = vpack.c.bf16 %v2109, %v2108
    %v2120 = vpack.c.bf16 %v2111, %v2110
    %v2121 = vpack.c.bf16 %v2113, %v2112
    %2122 = vst.msk [vmem:[#allocation5] sm:$0xff] %vm1869, %v2114
    %2123 = vst.msk [vmem:[#allocation5 + $0x28] sm:$0xff] %vm1869, %v2115
    %2124 = vst.msk [vmem:[#allocation5 + $0x50] sm:$0xff] %vm1869, %v2116
    %2125 = vst.msk [vmem:[#allocation5 + $0x78] sm:$0xff] %vm1869, %v2117
    %2126 = vst.msk [vmem:[#allocation5 + $0xa0] sm:$0xff] %vm1869, %v2118
    %2127 = vst.msk [vmem:[#allocation5 + $0xc8] sm:$0xff] %vm1869, %v2119
    %2128 = vst.msk [vmem:[#allocation5 + $0xf0] sm:$0xff] %vm1869, %v2120
    %2129 = vst.msk [vmem:[#allocation5 + $0x118] sm:$0xff] %vm1869, %v2121
    %v2130 = vld [vmem:[#allocation4 + $0x1] sm:$0xff]
    %v2131 = vld [vmem:[#allocation4 + $0x11] sm:$0xff]
    %v2132 = vld [vmem:[#allocation4 + $0x21] sm:$0xff]
    %v2133 = vld [vmem:[#allocation4 + $0x31] sm:$0xff]
    %v2134 = vld [vmem:[#allocation4 + $0x41] sm:$0xff]
    %v2135 = vld [vmem:[#allocation4 + $0x51] sm:$0xff]
    %v2136 = vld [vmem:[#allocation4 + $0x61] sm:$0xff]
    %v2137 = vld [vmem:[#allocation4 + $0x71] sm:$0xff]
    %v2138 = vld [vmem:[#allocation4 + $0xa1] sm:$0xff]
    %v2139 = vld [vmem:[#allocation4 + $0xb1] sm:$0xff]
    %v2140 = vld [vmem:[#allocation4 + $0xc1] sm:$0xff]
    %v2141 = vld [vmem:[#allocation4 + $0xd1] sm:$0xff]
    %v2142 = vld [vmem:[#allocation4 + $0xe1] sm:$0xff]
    %v2143 = vld [vmem:[#allocation4 + $0xf1] sm:$0xff]
    %v2144 = vld [vmem:[#allocation4 + $0x101] sm:$0xff]
    %v2145 = vld [vmem:[#allocation4 + $0x111] sm:$0xff]
    %v2146 = vpack.c.bf16 %v2131, %v2130
    %v2147 = vpack.c.bf16 %v2133, %v2132
    %v2148 = vpack.c.bf16 %v2135, %v2134
    %v2149 = vpack.c.bf16 %v2137, %v2136
    %v2150 = vpack.c.bf16 %v2139, %v2138
    %v2151 = vpack.c.bf16 %v2141, %v2140
    %v2152 = vpack.c.bf16 %v2143, %v2142
    %v2153 = vpack.c.bf16 %v2145, %v2144
    %2162 = vrot.lane.b32.xlu0 %v2146, 64
    %v2163 = vpop.permute.xlu0 %2162
    %2164 = vrot.lane.b32.xlu0 %v2147, 64
    %v2165 = vpop.permute.xlu0 %2164
    %2166 = vrot.lane.b32.xlu0 %v2148, 64
    %v2167 = vpop.permute.xlu0 %2166
    %2168 = vrot.lane.b32.xlu0 %v2149, 64
    %v2169 = vpop.permute.xlu0 %2168
    %2170 = vrot.lane.b32.xlu0 %v2150, 64
    %v2171 = vpop.permute.xlu0 %2170
    %2172 = vrot.lane.b32.xlu0 %v2151, 64
    %v2173 = vpop.permute.xlu0 %2172
    %2174 = vrot.lane.b32.xlu0 %v2152, 64
    %v2175 = vpop.permute.xlu0 %2174
    %2176 = vrot.lane.b32.xlu0 %v2153, 64
    %v2177 = vpop.permute.xlu0 %2176
    %vm2186 = vcmask 1048064
    %2187 = vst.msk [vmem:[#allocation5] sm:$0xff] %vm2186, %v2163
    %2188 = vst.msk [vmem:[#allocation5 + $0x28] sm:$0xff] %vm2186, %v2165
    %2189 = vst.msk [vmem:[#allocation5 + $0x50] sm:$0xff] %vm2186, %v2167
    %2190 = vst.msk [vmem:[#allocation5 + $0x78] sm:$0xff] %vm2186, %v2169
    %2191 = vst.msk [vmem:[#allocation5 + $0xa0] sm:$0xff] %vm2186, %v2171
    %2192 = vst.msk [vmem:[#allocation5 + $0xc8] sm:$0xff] %vm2186, %v2173
    %2193 = vst.msk [vmem:[#allocation5 + $0xf0] sm:$0xff] %vm2186, %v2175
    %2194 = vst.msk [vmem:[#allocation5 + $0x118] sm:$0xff] %vm2186, %v2177
    %v2195 = vld [vmem:[#allocation4 + $0x2] sm:$0xff]
    %v2196 = vld [vmem:[#allocation4 + $0x12] sm:$0xff]
    %v2197 = vld [vmem:[#allocation4 + $0x22] sm:$0xff]
    %v2198 = vld [vmem:[#allocation4 + $0x32] sm:$0xff]
    %v2199 = vld [vmem:[#allocation4 + $0x42] sm:$0xff]
    %v2200 = vld [vmem:[#allocation4 + $0x52] sm:$0xff]
    %v2201 = vld [vmem:[#allocation4 + $0x62] sm:$0xff]
    %v2202 = vld [vmem:[#allocation4 + $0x72] sm:$0xff]
    %v2203 = vld [vmem:[#allocation4 + $0xa2] sm:$0xff]
    %v2204 = vld [vmem:[#allocation4 + $0xb2] sm:$0xff]
    %v2205 = vld [vmem:[#allocation4 + $0xc2] sm:$0xff]
    %v2206 = vld [vmem:[#allocation4 + $0xd2] sm:$0xff]
    %v2207 = vld [vmem:[#allocation4 + $0xe2] sm:$0xff]
    %v2208 = vld [vmem:[#allocation4 + $0xf2] sm:$0xff]
    %v2209 = vld [vmem:[#allocation4 + $0x102] sm:$0xff]
    %v2210 = vld [vmem:[#allocation4 + $0x112] sm:$0xff]
    %v2211 = vpack.c.bf16 %v2196, %v2195
    %v2212 = vpack.c.bf16 %v2198, %v2197
    %v2213 = vpack.c.bf16 %v2200, %v2199
    %v2214 = vpack.c.bf16 %v2202, %v2201
    %v2215 = vpack.c.bf16 %v2204, %v2203
    %v2216 = vpack.c.bf16 %v2206, %v2205
    %v2217 = vpack.c.bf16 %v2208, %v2207
    %v2218 = vpack.c.bf16 %v2210, %v2209
    %2219 = vst.msk [vmem:[#allocation5 + $0x8] sm:$0xff] %vm1869, %v2211
    %2220 = vst.msk [vmem:[#allocation5 + $0x30] sm:$0xff] %vm1869, %v2212
    %2221 = vst.msk [vmem:[#allocation5 + $0x58] sm:$0xff] %vm1869, %v2213
    %2222 = vst.msk [vmem:[#allocation5 + $0x80] sm:$0xff] %vm1869, %v2214
    %2223 = vst.msk [vmem:[#allocation5 + $0xa8] sm:$0xff] %vm1869, %v2215
    %2224 = vst.msk [vmem:[#allocation5 + $0xd0] sm:$0xff] %vm1869, %v2216
    %2225 = vst.msk [vmem:[#allocation5 + $0xf8] sm:$0xff] %vm1869, %v2217
    %2226 = vst.msk [vmem:[#allocation5 + $0x120] sm:$0xff] %vm1869, %v2218
    %v2227 = vld [vmem:[%s2030] sm:$0xff]
    %v2228 = vld [vmem:[%s2030 + $0x10] sm:$0xff]
    %v2229 = vld [vmem:[%s2030 + $0x20] sm:$0xff]
    %v2230 = vld [vmem:[%s2030 + $0x30] sm:$0xff]
    %v2231 = vld [vmem:[%s2030 + $0x40] sm:$0xff]
    %v2232 = vld [vmem:[%s2030 + $0x50] sm:$0xff]
    %v2233 = vld [vmem:[%s2030 + $0x60] sm:$0xff]
    %v2234 = vld [vmem:[%s2030 + $0x70] sm:$0xff]
    %v2235 = vld [vmem:[%s2030 + $0xa0] sm:$0xff]
    %v2236 = vld [vmem:[%s2030 + $0xb0] sm:$0xff]
    %v2237 = vld [vmem:[%s2030 + $0xc0] sm:$0xff]
    %v2238 = vld [vmem:[%s2030 + $0xd0] sm:$0xff]
    %v2239 = vld [vmem:[%s2030 + $0xe0] sm:$0xff]
    %v2240 = vld [vmem:[%s2030 + $0xf0] sm:$0xff]
    %v2241 = vld [vmem:[%s2030 + $0x100] sm:$0xff]
    %v2242 = vld [vmem:[%s2030 + $0x110] sm:$0xff]
    %v2243 = vpack.c.bf16 %v2228, %v2227
    %v2244 = vpack.c.bf16 %v2230, %v2229
    %v2245 = vpack.c.bf16 %v2232, %v2231
    %v2246 = vpack.c.bf16 %v2234, %v2233
    %v2247 = vpack.c.bf16 %v2236, %v2235
    %v2248 = vpack.c.bf16 %v2238, %v2237
    %v2249 = vpack.c.bf16 %v2240, %v2239
    %v2250 = vpack.c.bf16 %v2242, %v2241
    %2259 = vrot.lane.b32.xlu0 %v2243, 64
    %v2260 = vpop.permute.xlu0 %2259
    %2261 = vrot.lane.b32.xlu0 %v2244, 64
    %v2262 = vpop.permute.xlu0 %2261
    %2263 = vrot.lane.b32.xlu0 %v2245, 64
    %v2264 = vpop.permute.xlu0 %2263
    %2265 = vrot.lane.b32.xlu0 %v2246, 64
    %v2266 = vpop.permute.xlu0 %2265
    %2267 = vrot.lane.b32.xlu0 %v2247, 64
    %v2268 = vpop.permute.xlu0 %2267
    %2269 = vrot.lane.b32.xlu0 %v2248, 64
    %v2270 = vpop.permute.xlu0 %2269
    %2271 = vrot.lane.b32.xlu0 %v2249, 64
    %v2272 = vpop.permute.xlu0 %2271
    %2273 = vrot.lane.b32.xlu0 %v2250, 64
    %v2274 = vpop.permute.xlu0 %2273
    %2283 = vst.msk [vmem:[#allocation5 + $0x8] sm:$0xff] %vm2186, %v2260
    %2284 = vst.msk [vmem:[#allocation5 + $0x30] sm:$0xff] %vm2186, %v2262
    %2285 = vst.msk [vmem:[#allocation5 + $0x58] sm:$0xff] %vm2186, %v2264
    %2286 = vst.msk [vmem:[#allocation5 + $0x80] sm:$0xff] %vm2186, %v2266
    %2287 = vst.msk [vmem:[#allocation5 + $0xa8] sm:$0xff] %vm2186, %v2268
    %2288 = vst.msk [vmem:[#allocation5 + $0xd0] sm:$0xff] %vm2186, %v2270
    %2289 = vst.msk [vmem:[#allocation5 + $0xf8] sm:$0xff] %vm2186, %v2272
    %2290 = vst.msk [vmem:[#allocation5 + $0x120] sm:$0xff] %vm2186, %v2274
    %v2291 = vld [vmem:[%s2030 + $0x1] sm:$0xff]
    %v2292 = vld [vmem:[%s2030 + $0x11] sm:$0xff]
    %v2293 = vld [vmem:[%s2030 + $0x21] sm:$0xff]
    %v2294 = vld [vmem:[%s2030 + $0x31] sm:$0xff]
    %v2295 = vld [vmem:[%s2030 + $0x41] sm:$0xff]
    %v2296 = vld [vmem:[%s2030 + $0x51] sm:$0xff]
    %v2297 = vld [vmem:[%s2030 + $0x61] sm:$0xff]
    %v2298 = vld [vmem:[%s2030 + $0x71] sm:$0xff]
    %v2299 = vld [vmem:[%s2030 + $0xa1] sm:$0xff]
    %v2300 = vld [vmem:[%s2030 + $0xb1] sm:$0xff]
    %v2301 = vld [vmem:[%s2030 + $0xc1] sm:$0xff]
    %v2302 = vld [vmem:[%s2030 + $0xd1] sm:$0xff]
    %v2303 = vld [vmem:[%s2030 + $0xe1] sm:$0xff]
    %v2304 = vld [vmem:[%s2030 + $0xf1] sm:$0xff]
    %v2305 = vld [vmem:[%s2030 + $0x101] sm:$0xff]
    %v2306 = vld [vmem:[%s2030 + $0x111] sm:$0xff]
    %v2307 = vpack.c.bf16 %v2292, %v2291
    %v2308 = vpack.c.bf16 %v2294, %v2293
    %v2309 = vpack.c.bf16 %v2296, %v2295
    %v2310 = vpack.c.bf16 %v2298, %v2297
    %v2311 = vpack.c.bf16 %v2300, %v2299
    %v2312 = vpack.c.bf16 %v2302, %v2301
    %v2313 = vpack.c.bf16 %v2304, %v2303
    %v2314 = vpack.c.bf16 %v2306, %v2305
    %2315 = vst.msk [vmem:[#allocation5 + $0x10] sm:$0xff] %vm1869, %v2307
    %2316 = vst.msk [vmem:[#allocation5 + $0x38] sm:$0xff] %vm1869, %v2308
    %2317 = vst.msk [vmem:[#allocation5 + $0x60] sm:$0xff] %vm1869, %v2309
    %2318 = vst.msk [vmem:[#allocation5 + $0x88] sm:$0xff] %vm1869, %v2310
    %2319 = vst.msk [vmem:[#allocation5 + $0xb0] sm:$0xff] %vm1869, %v2311
    %2320 = vst.msk [vmem:[#allocation5 + $0xd8] sm:$0xff] %vm1869, %v2312
    %2321 = vst.msk [vmem:[#allocation5 + $0x100] sm:$0xff] %vm1869, %v2313
    %2322 = vst.msk [vmem:[#allocation5 + $0x128] sm:$0xff] %vm1869, %v2314
    %v2323 = vld [vmem:[%s2030 + $0x2] sm:$0xff]
    %v2324 = vld [vmem:[%s2030 + $0x12] sm:$0xff]
    %v2325 = vld [vmem:[%s2030 + $0x22] sm:$0xff]
    %v2326 = vld [vmem:[%s2030 + $0x32] sm:$0xff]
    %v2327 = vld [vmem:[%s2030 + $0x42] sm:$0xff]
    %v2328 = vld [vmem:[%s2030 + $0x52] sm:$0xff]
    %v2329 = vld [vmem:[%s2030 + $0x62] sm:$0xff]
    %v2330 = vld [vmem:[%s2030 + $0x72] sm:$0xff]
    %v2331 = vld [vmem:[%s2030 + $0xa2] sm:$0xff]
    %v2332 = vld [vmem:[%s2030 + $0xb2] sm:$0xff]
    %v2333 = vld [vmem:[%s2030 + $0xc2] sm:$0xff]
    %v2334 = vld [vmem:[%s2030 + $0xd2] sm:$0xff]
    %v2335 = vld [vmem:[%s2030 + $0xe2] sm:$0xff]
    %v2336 = vld [vmem:[%s2030 + $0xf2] sm:$0xff]
    %v2337 = vld [vmem:[%s2030 + $0x102] sm:$0xff]
    %v2338 = vld [vmem:[%s2030 + $0x112] sm:$0xff]
    %v2339 = vpack.c.bf16 %v2324, %v2323
    %v2340 = vpack.c.bf16 %v2326, %v2325
    %v2341 = vpack.c.bf16 %v2328, %v2327
    %v2342 = vpack.c.bf16 %v2330, %v2329
    %v2343 = vpack.c.bf16 %v2332, %v2331
    %v2344 = vpack.c.bf16 %v2334, %v2333
    %v2345 = vpack.c.bf16 %v2336, %v2335
    %v2346 = vpack.c.bf16 %v2338, %v2337
    %2355 = vrot.lane.b32.xlu0 %v2339, 64
    %v2356 = vpop.permute.xlu0 %2355
    %2357 = vrot.lane.b32.xlu0 %v2340, 64
    %v2358 = vpop.permute.xlu0 %2357
    %2359 = vrot.lane.b32.xlu0 %v2341, 64
    %v2360 = vpop.permute.xlu0 %2359
    %2361 = vrot.lane.b32.xlu0 %v2342, 64
    %v2362 = vpop.permute.xlu0 %2361
    %2363 = vrot.lane.b32.xlu0 %v2343, 64
    %v2364 = vpop.permute.xlu0 %2363
    %2365 = vrot.lane.b32.xlu0 %v2344, 64
    %v2366 = vpop.permute.xlu0 %2365
    %2367 = vrot.lane.b32.xlu0 %v2345, 64
    %v2368 = vpop.permute.xlu0 %2367
    %2369 = vrot.lane.b32.xlu0 %v2346, 64
    %v2370 = vpop.permute.xlu0 %2369
    %2379 = vst.msk [vmem:[#allocation5 + $0x10] sm:$0xff] %vm2186, %v2356
    %2380 = vst.msk [vmem:[#allocation5 + $0x38] sm:$0xff] %vm2186, %v2358
    %2381 = vst.msk [vmem:[#allocation5 + $0x60] sm:$0xff] %vm2186, %v2360
    %2382 = vst.msk [vmem:[#allocation5 + $0x88] sm:$0xff] %vm2186, %v2362
    %2383 = vst.msk [vmem:[#allocation5 + $0xb0] sm:$0xff] %vm2186, %v2364
    %2384 = vst.msk [vmem:[#allocation5 + $0xd8] sm:$0xff] %vm2186, %v2366
    %2385 = vst.msk [vmem:[#allocation5 + $0x100] sm:$0xff] %vm2186, %v2368
    %2386 = vst.msk [vmem:[#allocation5 + $0x128] sm:$0xff] %vm2186, %v2370
    %s2387 = scalar_lea.vmem [#allocation4], 32
    %v2388 = vld [vmem:[%s2387] sm:$0xff]
    %v2389 = vld [vmem:[%s2387 + $0x10] sm:$0xff]
    %v2390 = vld [vmem:[%s2387 + $0x20] sm:$0xff]
    %v2391 = vld [vmem:[%s2387 + $0x30] sm:$0xff]
    %v2392 = vld [vmem:[%s2387 + $0x40] sm:$0xff]
    %v2393 = vld [vmem:[%s2387 + $0x50] sm:$0xff]
    %v2394 = vld [vmem:[%s2387 + $0x60] sm:$0xff]
    %v2395 = vld [vmem:[%s2387 + $0x70] sm:$0xff]
    %v2396 = vld [vmem:[%s2387 + $0xa0] sm:$0xff]
    %v2397 = vld [vmem:[%s2387 + $0xb0] sm:$0xff]
    %v2398 = vld [vmem:[%s2387 + $0xc0] sm:$0xff]
    %v2399 = vld [vmem:[%s2387 + $0xd0] sm:$0xff]
    %v2400 = vld [vmem:[%s2387 + $0xe0] sm:$0xff]
    %v2401 = vld [vmem:[%s2387 + $0xf0] sm:$0xff]
    %v2402 = vld [vmem:[%s2387 + $0x100] sm:$0xff]
    %v2403 = vld [vmem:[%s2387 + $0x110] sm:$0xff]
    %v2404 = vpack.c.bf16 %v2389, %v2388
    %v2405 = vpack.c.bf16 %v2391, %v2390
    %v2406 = vpack.c.bf16 %v2393, %v2392
    %v2407 = vpack.c.bf16 %v2395, %v2394
    %v2408 = vpack.c.bf16 %v2397, %v2396
    %v2409 = vpack.c.bf16 %v2399, %v2398
    %v2410 = vpack.c.bf16 %v2401, %v2400
    %v2411 = vpack.c.bf16 %v2403, %v2402
    %2412 = vst.msk [vmem:[#allocation5 + $0x18] sm:$0xff] %vm1869, %v2404
    %2413 = vst.msk [vmem:[#allocation5 + $0x40] sm:$0xff] %vm1869, %v2405
    %2414 = vst.msk [vmem:[#allocation5 + $0x68] sm:$0xff] %vm1869, %v2406
    %2415 = vst.msk [vmem:[#allocation5 + $0x90] sm:$0xff] %vm1869, %v2407
    %2416 = vst.msk [vmem:[#allocation5 + $0xb8] sm:$0xff] %vm1869, %v2408
    %2417 = vst.msk [vmem:[#allocation5 + $0xe0] sm:$0xff] %vm1869, %v2409
    %2418 = vst.msk [vmem:[#allocation5 + $0x108] sm:$0xff] %vm1869, %v2410
    %2419 = vst.msk [vmem:[#allocation5 + $0x130] sm:$0xff] %vm1869, %v2411
    %v2420 = vld [vmem:[%s2387 + $0x1] sm:$0xff]
    %v2421 = vld [vmem:[%s2387 + $0x11] sm:$0xff]
    %v2422 = vld [vmem:[%s2387 + $0x21] sm:$0xff]
    %v2423 = vld [vmem:[%s2387 + $0x31] sm:$0xff]
    %v2424 = vld [vmem:[%s2387 + $0x41] sm:$0xff]
    %v2425 = vld [vmem:[%s2387 + $0x51] sm:$0xff]
    %v2426 = vld [vmem:[%s2387 + $0x61] sm:$0xff]
    %v2427 = vld [vmem:[%s2387 + $0x71] sm:$0xff]
    %v2428 = vld [vmem:[%s2387 + $0xa1] sm:$0xff]
    %v2429 = vld [vmem:[%s2387 + $0xb1] sm:$0xff]
    %v2430 = vld [vmem:[%s2387 + $0xc1] sm:$0xff]
    %v2431 = vld [vmem:[%s2387 + $0xd1] sm:$0xff]
    %v2432 = vld [vmem:[%s2387 + $0xe1] sm:$0xff]
    %v2433 = vld [vmem:[%s2387 + $0xf1] sm:$0xff]
    %v2434 = vld [vmem:[%s2387 + $0x101] sm:$0xff]
    %v2435 = vld [vmem:[%s2387 + $0x111] sm:$0xff]
    %v2436 = vpack.c.bf16 %v2421, %v2420
    %v2437 = vpack.c.bf16 %v2423, %v2422
    %v2438 = vpack.c.bf16 %v2425, %v2424
    %v2439 = vpack.c.bf16 %v2427, %v2426
    %v2440 = vpack.c.bf16 %v2429, %v2428
    %v2441 = vpack.c.bf16 %v2431, %v2430
    %v2442 = vpack.c.bf16 %v2433, %v2432
    %v2443 = vpack.c.bf16 %v2435, %v2434
    %2452 = vrot.lane.b32.xlu0 %v2436, 64
    %v2453 = vpop.permute.xlu0 %2452
    %2454 = vrot.lane.b32.xlu0 %v2437, 64
    %v2455 = vpop.permute.xlu0 %2454
    %2456 = vrot.lane.b32.xlu0 %v2438, 64
    %v2457 = vpop.permute.xlu0 %2456
    %2458 = vrot.lane.b32.xlu0 %v2439, 64
    %v2459 = vpop.permute.xlu0 %2458
    %2460 = vrot.lane.b32.xlu0 %v2440, 64
    %v2461 = vpop.permute.xlu0 %2460
    %2462 = vrot.lane.b32.xlu0 %v2441, 64
    %v2463 = vpop.permute.xlu0 %2462
    %2464 = vrot.lane.b32.xlu0 %v2442, 64
    %v2465 = vpop.permute.xlu0 %2464
    %2466 = vrot.lane.b32.xlu0 %v2443, 64
    %v2467 = vpop.permute.xlu0 %2466
    %2476 = vst.msk [vmem:[#allocation5 + $0x18] sm:$0xff] %vm2186, %v2453
    %2477 = vst.msk [vmem:[#allocation5 + $0x40] sm:$0xff] %vm2186, %v2455
    %2478 = vst.msk [vmem:[#allocation5 + $0x68] sm:$0xff] %vm2186, %v2457
    %2479 = vst.msk [vmem:[#allocation5 + $0x90] sm:$0xff] %vm2186, %v2459
    %2480 = vst.msk [vmem:[#allocation5 + $0xb8] sm:$0xff] %vm2186, %v2461
    %2481 = vst.msk [vmem:[#allocation5 + $0xe0] sm:$0xff] %vm2186, %v2463
    %2482 = vst.msk [vmem:[#allocation5 + $0x108] sm:$0xff] %vm2186, %v2465
    %2483 = vst.msk [vmem:[#allocation5 + $0x130] sm:$0xff] %vm2186, %v2467
    %v2484 = vld [vmem:[%s2387 + $0x2] sm:$0xff]
    %v2485 = vld [vmem:[%s2387 + $0x12] sm:$0xff]
    %v2486 = vld [vmem:[%s2387 + $0x22] sm:$0xff]
    %v2487 = vld [vmem:[%s2387 + $0x32] sm:$0xff]
    %v2488 = vld [vmem:[%s2387 + $0x42] sm:$0xff]
    %v2489 = vld [vmem:[%s2387 + $0x52] sm:$0xff]
    %v2490 = vld [vmem:[%s2387 + $0x62] sm:$0xff]
    %v2491 = vld [vmem:[%s2387 + $0x72] sm:$0xff]
    %v2492 = vld [vmem:[%s2387 + $0xa2] sm:$0xff]
    %v2493 = vld [vmem:[%s2387 + $0xb2] sm:$0xff]
    %v2494 = vld [vmem:[%s2387 + $0xc2] sm:$0xff]
    %v2495 = vld [vmem:[%s2387 + $0xd2] sm:$0xff]
    %v2496 = vld [vmem:[%s2387 + $0xe2] sm:$0xff]
    %v2497 = vld [vmem:[%s2387 + $0xf2] sm:$0xff]
    %v2498 = vld [vmem:[%s2387 + $0x102] sm:$0xff]
    %v2499 = vld [vmem:[%s2387 + $0x112] sm:$0xff]
    %v2500 = vpack.c.bf16 %v2485, %v2484
    %v2501 = vpack.c.bf16 %v2487, %v2486
    %v2502 = vpack.c.bf16 %v2489, %v2488
    %v2503 = vpack.c.bf16 %v2491, %v2490
    %v2504 = vpack.c.bf16 %v2493, %v2492
    %v2505 = vpack.c.bf16 %v2495, %v2494
    %v2506 = vpack.c.bf16 %v2497, %v2496
    %v2507 = vpack.c.bf16 %v2499, %v2498
    %2508 = vst.msk [vmem:[#allocation5 + $0x20] sm:$0xff] %vm1869, %v2500
    %2509 = vst.msk [vmem:[#allocation5 + $0x48] sm:$0xff] %vm1869, %v2501
    %2510 = vst.msk [vmem:[#allocation5 + $0x70] sm:$0xff] %vm1869, %v2502
    %2511 = vst.msk [vmem:[#allocation5 + $0x98] sm:$0xff] %vm1869, %v2503
    %2512 = vst.msk [vmem:[#allocation5 + $0xc0] sm:$0xff] %vm1869, %v2504
    %2513 = vst.msk [vmem:[#allocation5 + $0xe8] sm:$0xff] %vm1869, %v2505
    %2514 = vst.msk [vmem:[#allocation5 + $0x110] sm:$0xff] %vm1869, %v2506
    %2515 = vst.msk [vmem:[#allocation5 + $0x138] sm:$0xff] %vm1869, %v2507
    %v2516 = vld [vmem:[#allocation5] sm:$0xff]
    %v2517 = vld [vmem:[#allocation5 + $0x8] sm:$0xff]
    %v2518 = vld [vmem:[#allocation5 + $0x10] sm:$0xff]
    %v2519 = vld [vmem:[#allocation5 + $0x18] sm:$0xff]
    %v2520 = vld [vmem:[#allocation5 + $0x20] sm:$0xff]
    %v2521 = vld [vmem:[#allocation5 + $0x28] sm:$0xff]
    %v2522 = vld [vmem:[#allocation5 + $0x30] sm:$0xff]
    %v2523 = vld [vmem:[#allocation5 + $0x38] sm:$0xff]
    %v2524 = vld [vmem:[#allocation5 + $0x40] sm:$0xff]
    %v2525 = vld [vmem:[#allocation5 + $0x48] sm:$0xff]
    %v2526 = vld [vmem:[#allocation5 + $0x50] sm:$0xff]
    %v2527 = vld [vmem:[#allocation5 + $0x58] sm:$0xff]
    %v2528 = vld [vmem:[#allocation5 + $0x60] sm:$0xff]
    %v2529 = vld [vmem:[#allocation5 + $0x68] sm:$0xff]
    %v2530 = vld [vmem:[#allocation5 + $0x70] sm:$0xff]
    %v2531 = vld [vmem:[#allocation5 + $0x78] sm:$0xff]
    %v2532 = vld [vmem:[#allocation5 + $0x80] sm:$0xff]
    %v2533 = vld [vmem:[#allocation5 + $0x88] sm:$0xff]
    %v2534 = vld [vmem:[#allocation5 + $0x90] sm:$0xff]
    %v2535 = vld [vmem:[#allocation5 + $0x98] sm:$0xff]
    %v2536 = vld [vmem:[#allocation5 + $0xa0] sm:$0xff]
    %v2537 = vld [vmem:[#allocation5 + $0xa8] sm:$0xff]
    %v2538 = vld [vmem:[#allocation5 + $0xb0] sm:$0xff]
    %v2539 = vld [vmem:[#allocation5 + $0xb8] sm:$0xff]
    %v2540 = vld [vmem:[#allocation5 + $0xc0] sm:$0xff]
    %v2541 = vld [vmem:[#allocation5 + $0xc8] sm:$0xff]
    %v2542 = vld [vmem:[#allocation5 + $0xd0] sm:$0xff]
    %v2543 = vld [vmem:[#allocation5 + $0xd8] sm:$0xff]
    %v2544 = vld [vmem:[#allocation5 + $0xe0] sm:$0xff]
    %v2545 = vld [vmem:[#allocation5 + $0xe8] sm:$0xff]
    %v2546 = vld [vmem:[#allocation5 + $0xf0] sm:$0xff]
    %v2547 = vld [vmem:[#allocation5 + $0xf8] sm:$0xff]
    %v2548 = vld [vmem:[#allocation5 + $0x100] sm:$0xff]
    %v2549 = vld [vmem:[#allocation5 + $0x108] sm:$0xff]
    %v2550 = vld [vmem:[#allocation5 + $0x110] sm:$0xff]
    %v2551 = vld [vmem:[#allocation5 + $0x118] sm:$0xff]
    %v2552 = vld [vmem:[#allocation5 + $0x120] sm:$0xff]
    %v2553 = vld [vmem:[#allocation5 + $0x128] sm:$0xff]
    %v2554 = vld [vmem:[#allocation5 + $0x130] sm:$0xff]
    %v2555 = vld [vmem:[#allocation5 + $0x138] sm:$0xff]
    %v2556 = vld [vmem:[%s7] sm:$0xf]
    %v2557 = vld [vmem:[%s7 + $0x4] sm:$0xf]
    %v2558 = vld [vmem:[%s7 + $0x8] sm:$0xf]
    %v2559 = vld [vmem:[%s7 + $0xc] sm:$0xf]
    %v2560 = vld [vmem:[%s7 + $0x10] sm:$0xf]
    %v2561 = vld [vmem:[%s7 + $0x14] sm:$0xf]
    %v2562 = vld [vmem:[%s7 + $0x18] sm:$0xf]
    %v2563 = vld [vmem:[%s7 + $0x1c] sm:$0xf]
    %v2564 = vld [vmem:[%s7 + $0x20] sm:$0xf]
    %v2565 = vld [vmem:[%s7 + $0x24] sm:$0xf]
    %v2566 = vld [vmem:[%s7 + $0x28] sm:$0xf]
    %v2567 = vld [vmem:[%s7 + $0x2c] sm:$0xf]
    %v2568 = vld [vmem:[%s7 + $0x30] sm:$0xf]
    %v2569 = vld [vmem:[%s7 + $0x34] sm:$0xf]
    %v2570 = vld [vmem:[%s7 + $0x38] sm:$0xf]
    %v2571 = vld [vmem:[%s7 + $0x3c] sm:$0xf]
    %v2572 = vld [vmem:[%s7 + $0x40] sm:$0xf]
    %v2573 = vld [vmem:[%s7 + $0x44] sm:$0xf]
    %v2574 = vld [vmem:[%s7 + $0x48] sm:$0xf]
    %v2575 = vld [vmem:[%s7 + $0x4c] sm:$0xf]
    %v2576 = vld [vmem:[%s7 + $0x50] sm:$0xf]
    %v2577 = vld [vmem:[%s7 + $0x54] sm:$0xf]
    %v2578 = vld [vmem:[%s7 + $0x58] sm:$0xf]
    %v2579 = vld [vmem:[%s7 + $0x5c] sm:$0xf]
    %v2580 = vld [vmem:[%s7 + $0x60] sm:$0xf]
    %v2581 = vld [vmem:[%s7 + $0x64] sm:$0xf]
    %v2582 = vld [vmem:[%s7 + $0x68] sm:$0xf]
    %v2583 = vld [vmem:[%s7 + $0x6c] sm:$0xf]
    %v2584 = vld [vmem:[%s7 + $0x70] sm:$0xf]
    %v2585 = vld [vmem:[%s7 + $0x74] sm:$0xf]
    %v2586 = vld [vmem:[%s7 + $0x78] sm:$0xf]
    %v2587 = vld [vmem:[%s7 + $0x7c] sm:$0xf]
    %v2588 = vld [vmem:[%s7 + $0x80] sm:$0xf]
    %v2589 = vld [vmem:[%s7 + $0x84] sm:$0xf]
    %v2590 = vld [vmem:[%s7 + $0x88] sm:$0xf]
    %v2591 = vld [vmem:[%s7 + $0x8c] sm:$0xf]
    %v2592 = vld [vmem:[%s7 + $0x90] sm:$0xf]
    %v2593 = vld [vmem:[%s7 + $0x94] sm:$0xf]
    %v2594 = vld [vmem:[%s7 + $0x98] sm:$0xf]
    %v2595 = vld [vmem:[%s7 + $0x9c] sm:$0xf]
    %v2596 = vld [vmem:[%s7 + $0xa0] sm:$0xf]
    %v2597 = vld [vmem:[%s7 + $0xa4] sm:$0xf]
    %v2598 = vld [vmem:[%s7 + $0xa8] sm:$0xf]
    %v2599 = vld [vmem:[%s7 + $0xac] sm:$0xf]
    %v2600 = vld [vmem:[%s7 + $0xb0] sm:$0xf]
    %v2601 = vld [vmem:[%s7 + $0xb4] sm:$0xf]
    %v2602 = vld [vmem:[%s7 + $0xb8] sm:$0xf]
    %v2603 = vld [vmem:[%s7 + $0xbc] sm:$0xf]
    %v2604 = vld [vmem:[%s7 + $0xc0] sm:$0xf]
    %v2605 = vld [vmem:[%s7 + $0xc4] sm:$0xf]
    %v2606 = vld [vmem:[%s7 + $0xc8] sm:$0xf]
    %v2607 = vld [vmem:[%s7 + $0xcc] sm:$0xf]
    %v2608 = vld [vmem:[%s7 + $0xd0] sm:$0xf]
    %v2609 = vld [vmem:[%s7 + $0xd4] sm:$0xf]
    %v2610 = vld [vmem:[%s7 + $0xd8] sm:$0xf]
    %v2611 = vld [vmem:[%s7 + $0xdc] sm:$0xf]
    %v2612 = vld [vmem:[%s7 + $0xe0] sm:$0xf]
    %v2613 = vld [vmem:[%s7 + $0xe4] sm:$0xf]
    %v2614 = vld [vmem:[%s7 + $0xe8] sm:$0xf]
    %v2615 = vld [vmem:[%s7 + $0xec] sm:$0xf]
    %v2616 = vld [vmem:[%s7 + $0xf0] sm:$0xf]
    %v2617 = vld [vmem:[%s7 + $0xf4] sm:$0xf]
    %v2618 = vld [vmem:[%s7 + $0xf8] sm:$0xf]
    %v2619 = vld [vmem:[%s7 + $0xfc] sm:$0xf]
    %v2620 = vld [vmem:[%s7 + $0x100] sm:$0xf]
    %v2621 = vld [vmem:[%s7 + $0x104] sm:$0xf]
    %v2622 = vld [vmem:[%s7 + $0x108] sm:$0xf]
    %v2623 = vld [vmem:[%s7 + $0x10c] sm:$0xf]
    %v2624 = vld [vmem:[%s7 + $0x110] sm:$0xf]
    %v2625 = vld [vmem:[%s7 + $0x114] sm:$0xf]
    %v2626 = vld [vmem:[%s7 + $0x118] sm:$0xf]
    %v2627 = vld [vmem:[%s7 + $0x11c] sm:$0xf]
    %v2700 = vunpack.c.l.b16 %v2556
    %v2701 = vunpack.c.l.b16 %v2557
    %v2702 = vunpack.c.l.b16 %v2558
    %v2703 = vunpack.c.l.b16 %v2559
    %v2704 = vunpack.c.l.b16 %v2560
    %v2705 = vunpack.c.l.b16 %v2561
    %v2706 = vunpack.c.l.b16 %v2562
    %v2707 = vunpack.c.l.b16 %v2563
    %v2708 = vunpack.c.l.b16 %v2564
    %v2709 = vunpack.c.l.b16 %v2565
    %v2710 = vunpack.c.l.b16 %v2566
    %v2711 = vunpack.c.l.b16 %v2567
    %v2712 = vunpack.c.l.b16 %v2568
    %v2713 = vunpack.c.l.b16 %v2569
    %v2714 = vunpack.c.l.b16 %v2570
    %v2715 = vunpack.c.l.b16 %v2571
    %v2716 = vunpack.c.l.b16 %v2572
    %v2717 = vunpack.c.l.b16 %v2573
    %v2718 = vunpack.c.l.b16 %v2574
    %v2719 = vunpack.c.l.b16 %v2575
    %v2720 = vunpack.c.l.b16 %v2576
    %v2721 = vunpack.c.l.b16 %v2577
    %v2722 = vunpack.c.l.b16 %v2578
    %v2723 = vunpack.c.l.b16 %v2579
    %v2724 = vunpack.c.l.b16 %v2580
    %v2725 = vunpack.c.l.b16 %v2581
    %v2726 = vunpack.c.l.b16 %v2582
    %v2727 = vunpack.c.l.b16 %v2583
    %v2728 = vunpack.c.l.b16 %v2584
    %v2729 = vunpack.c.l.b16 %v2585
    %v2730 = vunpack.c.l.b16 %v2586
    %v2731 = vunpack.c.l.b16 %v2587
    %v2732 = vunpack.c.l.b16 %v2588
    %v2733 = vunpack.c.l.b16 %v2589
    %v2734 = vunpack.c.l.b16 %v2590
    %v2735 = vunpack.c.l.b16 %v2591
    %v2736 = vunpack.c.l.b16 %v2592
    %v2737 = vunpack.c.l.b16 %v2593
    %v2738 = vunpack.c.l.b16 %v2594
    %v2739 = vunpack.c.l.b16 %v2595
    %v2740 = vunpack.c.l.b16 %v2596
    %v2741 = vunpack.c.l.b16 %v2597
    %v2742 = vunpack.c.l.b16 %v2598
    %v2743 = vunpack.c.l.b16 %v2599
    %v2744 = vunpack.c.l.b16 %v2600
    %v2745 = vunpack.c.l.b16 %v2601
    %v2746 = vunpack.c.l.b16 %v2602
    %v2747 = vunpack.c.l.b16 %v2603
    %v2748 = vunpack.c.l.b16 %v2604
    %v2749 = vunpack.c.l.b16 %v2605
    %v2750 = vunpack.c.l.b16 %v2606
    %v2751 = vunpack.c.l.b16 %v2607
    %v2752 = vunpack.c.l.b16 %v2608
    %v2753 = vunpack.c.l.b16 %v2609
    %v2754 = vunpack.c.l.b16 %v2610
    %v2755 = vunpack.c.l.b16 %v2611
    %v2756 = vunpack.c.l.b16 %v2612
    %v2757 = vunpack.c.l.b16 %v2613
    %v2758 = vunpack.c.l.b16 %v2614
    %v2759 = vunpack.c.l.b16 %v2615
    %v2760 = vunpack.c.l.b16 %v2616
    %v2761 = vunpack.c.l.b16 %v2617
    %v2762 = vunpack.c.l.b16 %v2618
    %v2763 = vunpack.c.l.b16 %v2619
    %v2764 = vunpack.c.l.b16 %v2620
    %v2765 = vunpack.c.l.b16 %v2621
    %v2766 = vunpack.c.l.b16 %v2622
    %v2767 = vunpack.c.l.b16 %v2623
    %v2768 = vunpack.c.l.b16 %v2624
    %v2769 = vunpack.c.l.b16 %v2625
    %v2770 = vunpack.c.l.b16 %v2626
    %v2771 = vunpack.c.l.b16 %v2627
    %v2772 = vpack.c.b16 %v2701, %v2700
    %v2773 = vpack.c.b16 %v2703, %v2702
    %v2774 = vpack.c.b16 %v2705, %v2704
    %v2775 = vpack.c.b16 %v2707, %v2706
    %v2776 = vpack.c.b16 %v2709, %v2708
    %v2777 = vpack.c.b16 %v2711, %v2710
    %v2778 = vpack.c.b16 %v2713, %v2712
    %v2779 = vpack.c.b16 %v2715, %v2714
    %v2780 = vpack.c.b16 %v2717, %v2716
    %v2781 = vpack.c.b16 %v2719, %v2718
    %v2782 = vpack.c.b16 %v2721, %v2720
    %v2783 = vpack.c.b16 %v2723, %v2722
    %v2784 = vpack.c.b16 %v2725, %v2724
    %v2785 = vpack.c.b16 %v2727, %v2726
    %v2786 = vpack.c.b16 %v2729, %v2728
    %v2787 = vpack.c.b16 %v2731, %v2730
    %v2788 = vpack.c.b16 %v2733, %v2732
    %v2789 = vpack.c.b16 %v2735, %v2734
    %v2790 = vpack.c.b16 %v2737, %v2736
    %v2791 = vpack.c.b16 %v2739, %v2738
    %v2792 = vpack.c.b16 %v2741, %v2740
    %v2793 = vpack.c.b16 %v2743, %v2742
    %v2794 = vpack.c.b16 %v2745, %v2744
    %v2795 = vpack.c.b16 %v2747, %v2746
    %v2796 = vpack.c.b16 %v2749, %v2748
    %v2797 = vpack.c.b16 %v2751, %v2750
    %v2798 = vpack.c.b16 %v2753, %v2752
    %v2799 = vpack.c.b16 %v2755, %v2754
    %v2800 = vpack.c.b16 %v2757, %v2756
    %v2801 = vpack.c.b16 %v2759, %v2758
    %v2802 = vpack.c.b16 %v2761, %v2760
    %v2803 = vpack.c.b16 %v2763, %v2762
    %v2804 = vpack.c.b16 %v2765, %v2764
    %v2805 = vpack.c.b16 %v2767, %v2766
    %v2806 = vpack.c.b16 %v2769, %v2768
    %v2807 = vpack.c.b16 %v2771, %v2770
    %v2845 = vsel %vm1869, %v2520, 0
    %v2848 = vsel %vm1869, %v2525, 0
    %v2851 = vsel %vm1869, %v2530, 0
    %v2854 = vsel %vm1869, %v2535, 0
    %v2857 = vsel %vm1869, %v2540, 0
    %v2860 = vsel %vm1869, %v2545, 0
    %v2863 = vsel %vm1869, %v2550, 0
    %v2866 = vsel %vm1869, %v2555, 0
    %2868 = vmatprep.subr.bf16.mxu0 0
    %2869 = vmatpush1.bf16.msra.mxu0 %v2772
    %2870 = vmatprep.subr.bf16.mxu0 0
    %2871 = vmatpush1.bf16.msra.mxu0 %v2773
    %2872 = vmatprep.subr.bf16.mxu0 0
    %2873 = vmatpush1.bf16.msra.mxu0 %v2774
    %2874 = vmatprep.subr.bf16.mxu0 0
    %2875 = vmatpush1.bf16.msra.mxu0 %v2775
    %2876 = vmatprep.subr.bf16.mxu0 0
    %2877 = vmatpush1.bf16.msra.mxu0 %v2776
    %2878 = vmatprep.subr.bf16.mxu0 0
    %2879 = vmatpush1.bf16.msra.mxu0 %v2777
    %2880 = vmatprep.subr.bf16.mxu0 0
    %2881 = vmatpush1.bf16.msra.mxu0 %v2778
    %2882 = vmatprep.subr.bf16.mxu0 0
    %2883 = vmatpush1.bf16.msra.mxu0 %v2779
    %2884 = vmatprep.subr.bf16.mxu0 0
    %2885 = vmatpush1.bf16.msra.mxu0 %v2780
    %2886 = vmatprep.subr.bf16.mxu0 0
    %2887 = vmatpush1.bf16.msra.mxu0 %v2781
    %2888 = vmatprep.subr.bf16.mxu0 0
    %2889 = vmatpush1.bf16.msra.mxu0 %v2782
    %2890 = vmatprep.subr.bf16.mxu0 0
    %2891 = vmatpush1.bf16.msra.mxu0 %v2783
    %2892 = vmatprep.subr.bf16.mxu0 0
    %2893 = vmatpush1.bf16.msra.mxu0 %v2784
    %2894 = vmatprep.subr.bf16.mxu0 0
    %2895 = vmatpush1.bf16.msra.mxu0 %v2785
    %2896 = vmatprep.subr.bf16.mxu0 0
    %2897 = vmatpush1.bf16.msra.mxu0 %v2786
    %2898 = vmatprep.subr.bf16.mxu0 0
    %2899 = vmatpush1.bf16.msra.mxu0 %v2787
    %2900 = vmatprep.mubr.bf16.mxu0 %v2517
    %2901 = vmatmul.mubr.bf16.gmra.mrb[0].mxu0 %v2516
    %v2902 = vpop.f32.mrb[0].mxu0
    %v2903 = vadd.f32 0.0, %v2902
    %v2904 = vpop.f32.mrb[0].mxu0
    %v2905 = vpop.f32.mrb[0].mxu0
    %v2906 = vadd.f32 0.0, %v2905
    %v2907 = vpop.f32.mrb[0].mxu0
    %2908 = vmatprep.mubr.bf16.mxu0 %v2522
    %2909 = vmatmul.mubr.bf16.gmra.mrb[0].mxu0 %v2521
    %v2910 = vpop.f32.mrb[0].mxu0
    %v2911 = vadd.f32 0.0, %v2910
    %v2912 = vpop.f32.mrb[0].mxu0
    %v2913 = vpop.f32.mrb[0].mxu0
    %v2914 = vadd.f32 0.0, %v2913
    %v2915 = vpop.f32.mrb[0].mxu0
    %2916 = vmatprep.mubr.bf16.mxu0 %v2527
    %2917 = vmatmul.mubr.bf16.gmra.mrb[0].mxu0 %v2526
    %v2918 = vpop.f32.mrb[0].mxu0
    %v2919 = vadd.f32 0.0, %v2918
    %v2920 = vpop.f32.mrb[0].mxu0
    %v2921 = vpop.f32.mrb[0].mxu0
    %v2922 = vadd.f32 0.0, %v2921
    %v2923 = vpop.f32.mrb[0].mxu0
    %2924 = vmatprep.mubr.bf16.mxu0 %v2532
    %2925 = vmatmul.mubr.bf16.gmra.mrb[0].mxu0 %v2531
    %v2926 = vpop.f32.mrb[0].mxu0
    %v2927 = vadd.f32 0.0, %v2926
    %v2928 = vpop.f32.mrb[0].mxu0
    %v2929 = vpop.f32.mrb[0].mxu0
    %v2930 = vadd.f32 0.0, %v2929
    %v2931 = vpop.f32.mrb[0].mxu0
    %2932 = vmatprep.mubr.bf16.mxu0 %v2537
    %2933 = vmatmul.mubr.bf16.gmra.mrb[0].mxu0 %v2536
    %v2934 = vpop.f32.mrb[0].mxu0
    %v2935 = vadd.f32 0.0, %v2934
    %v2936 = vpop.f32.mrb[0].mxu0
    %v2937 = vpop.f32.mrb[0].mxu0
    %v2938 = vadd.f32 0.0, %v2937
    %v2939 = vpop.f32.mrb[0].mxu0
    %2940 = vmatprep.mubr.bf16.mxu0 %v2542
    %2941 = vmatmul.mubr.bf16.gmra.mrb[0].mxu0 %v2541
    %v2942 = vpop.f32.mrb[0].mxu0
    %v2943 = vadd.f32 0.0, %v2942
    %v2944 = vpop.f32.mrb[0].mxu0
    %v2945 = vpop.f32.mrb[0].mxu0
    %v2946 = vadd.f32 0.0, %v2945
    %v2947 = vpop.f32.mrb[0].mxu0
    %2948 = vmatprep.mubr.bf16.mxu0 %v2547
    %2949 = vmatmul.mubr.bf16.gmra.mrb[0].mxu0 %v2546
    %v2950 = vpop.f32.mrb[0].mxu0
    %v2951 = vadd.f32 0.0, %v2950
    %v2952 = vpop.f32.mrb[0].mxu0
    %v2953 = vpop.f32.mrb[0].mxu0
    %v2954 = vadd.f32 0.0, %v2953
    %v2955 = vpop.f32.mrb[0].mxu0
    %2956 = vmatprep.mubr.bf16.mxu0 %v2552
    %2957 = vmatmul.mubr.bf16.gmra.mrb[0].mxu0 %v2551
    %v2958 = vpop.f32.mrb[0].mxu0
    %v2959 = vadd.f32 0.0, %v2958
    %v2960 = vpop.f32.mrb[0].mxu0
    %v2961 = vpop.f32.mrb[0].mxu0
    %v2962 = vadd.f32 0.0, %v2961
    %v2963 = vpop.f32.mrb[0].mxu0
    %2964 = vdwg.mxu0
    %2965 = vmatprep.subr.bf16.mxu0 0
    %2966 = vmatpush1.bf16.msra.mxu0 %v2788
    %2967 = vmatprep.subr.bf16.mxu0 0
    %2968 = vmatpush1.bf16.msra.mxu0 %v2789
    %2969 = vmatprep.subr.bf16.mxu0 0
    %2970 = vmatpush1.bf16.msra.mxu0 %v2790
    %2971 = vmatprep.subr.bf16.mxu0 0
    %2972 = vmatpush1.bf16.msra.mxu0 %v2791
    %2973 = vmatprep.subr.bf16.mxu0 0
    %2974 = vmatpush1.bf16.msra.mxu0 %v2792
    %2975 = vmatprep.subr.bf16.mxu0 0
    %2976 = vmatpush1.bf16.msra.mxu0 %v2793
    %2977 = vmatprep.subr.bf16.mxu0 0
    %2978 = vmatpush1.bf16.msra.mxu0 %v2794
    %2979 = vmatprep.subr.bf16.mxu0 0
    %2980 = vmatpush1.bf16.msra.mxu0 %v2795
    %2981 = vmatprep.subr.bf16.mxu0 0
    %2982 = vmatpush1.bf16.msra.mxu0 %v2796
    %2983 = vmatprep.subr.bf16.mxu0 0
    %2984 = vmatpush1.bf16.msra.mxu0 %v2797
    %2985 = vmatprep.subr.bf16.mxu0 0
    %2986 = vmatpush1.bf16.msra.mxu0 %v2798
    %2987 = vmatprep.subr.bf16.mxu0 0
    %2988 = vmatpush1.bf16.msra.mxu0 %v2799
    %2989 = vmatprep.subr.bf16.mxu0 0
    %2990 = vmatpush1.bf16.msra.mxu0 %v2800
    %2991 = vmatprep.subr.bf16.mxu0 0
    %2992 = vmatpush1.bf16.msra.mxu0 %v2801
    %2993 = vmatprep.subr.bf16.mxu0 0
    %2994 = vmatpush1.bf16.msra.mxu0 %v2802
    %2995 = vmatprep.subr.bf16.mxu0 0
    %2996 = vmatpush1.bf16.msra.mxu0 %v2803
    %2997 = vmatprep.mubr.bf16.mxu0 %v2519
    %2998 = vmatmul.mubr.bf16.gmra.mrb[0].mxu0 %v2518
    %v2999 = vpop.f32.mrb[0].mxu0
    %v3000 = vadd.f32 %v2903, %v2999
    %v3001 = vpop.f32.mrb[0].mxu0
    %v3002 = vpop.f32.mrb[0].mxu0
    %v3003 = vadd.f32 %v2906, %v3002
    %v3004 = vpop.f32.mrb[0].mxu0
    %3005 = vmatprep.mubr.bf16.mxu0 %v2524
    %3006 = vmatmul.mubr.bf16.gmra.mrb[0].mxu0 %v2523
    %v3007 = vpop.f32.mrb[0].mxu0
    %v3008 = vadd.f32 %v2911, %v3007
    %v3009 = vpop.f32.mrb[0].mxu0
    %v3010 = vpop.f32.mrb[0].mxu0
    %v3011 = vadd.f32 %v2914, %v3010
    %v3012 = vpop.f32.mrb[0].mxu0
    %3013 = vmatprep.mubr.bf16.mxu0 %v2529
    %3014 = vmatmul.mubr.bf16.gmra.mrb[0].mxu0 %v2528
    %v3015 = vpop.f32.mrb[0].mxu0
    %v3016 = vadd.f32 %v2919, %v3015
    %v3017 = vpop.f32.mrb[0].mxu0
    %v3018 = vpop.f32.mrb[0].mxu0
    %v3019 = vadd.f32 %v2922, %v3018
    %v3020 = vpop.f32.mrb[0].mxu0
    %3021 = vmatprep.mubr.bf16.mxu0 %v2534
    %3022 = vmatmul.mubr.bf16.gmra.mrb[0].mxu0 %v2533
    %v3023 = vpop.f32.mrb[0].mxu0
    %v3024 = vadd.f32 %v2927, %v3023
    %v3025 = vpop.f32.mrb[0].mxu0
    %v3026 = vpop.f32.mrb[0].mxu0
    %v3027 = vadd.f32 %v2930, %v3026
    %v3028 = vpop.f32.mrb[0].mxu0
    %3029 = vmatprep.mubr.bf16.mxu0 %v2539
    %3030 = vmatmul.mubr.bf16.gmra.mrb[0].mxu0 %v2538
    %v3031 = vpop.f32.mrb[0].mxu0
    %v3032 = vadd.f32 %v2935, %v3031
    %v3033 = vpop.f32.mrb[0].mxu0
    %v3034 = vpop.f32.mrb[0].mxu0
    %v3035 = vadd.f32 %v2938, %v3034
    %v3036 = vpop.f32.mrb[0].mxu0
    %3037 = vmatprep.mubr.bf16.mxu0 %v2544
    %3038 = vmatmul.mubr.bf16.gmra.mrb[0].mxu0 %v2543
    %v3039 = vpop.f32.mrb[0].mxu0
    %v3040 = vadd.f32 %v2943, %v3039
    %v3041 = vpop.f32.mrb[0].mxu0
    %v3042 = vpop.f32.mrb[0].mxu0
    %v3043 = vadd.f32 %v2946, %v3042
    %v3044 = vpop.f32.mrb[0].mxu0
    %3045 = vmatprep.mubr.bf16.mxu0 %v2549
    %3046 = vmatmul.mubr.bf16.gmra.mrb[0].mxu0 %v2548
    %v3047 = vpop.f32.mrb[0].mxu0
    %v3048 = vadd.f32 %v2951, %v3047
    %v3049 = vpop.f32.mrb[0].mxu0
    %v3050 = vpop.f32.mrb[0].mxu0
    %v3051 = vadd.f32 %v2954, %v3050
    %v3052 = vpop.f32.mrb[0].mxu0
    %3053 = vmatprep.mubr.bf16.mxu0 %v2554
    %3054 = vmatmul.mubr.bf16.gmra.mrb[0].mxu0 %v2553
    %v3055 = vpop.f32.mrb[0].mxu0
    %v3056 = vadd.f32 %v2959, %v3055
    %v3057 = vpop.f32.mrb[0].mxu0
    %v3058 = vpop.f32.mrb[0].mxu0
    %v3059 = vadd.f32 %v2962, %v3058
    %v3060 = vpop.f32.mrb[0].mxu0
    %3061 = vdwg.mxu0
    %3062 = vmatprep.subr.bf16.mxu0 0
    %3063 = vmatpush1.bf16.msra.mxu0 %v2804
    %3064 = vmatprep.subr.bf16.mxu0 0
    %3065 = vmatpush1.bf16.msra.mxu0 %v2805
    %3066 = vmatprep.subr.bf16.mxu0 0
    %3067 = vmatpush1.bf16.msra.mxu0 %v2806
    %3068 = vmatprep.subr.bf16.mxu0 0
    %3069 = vmatpush1.bf16.msra.mxu0 %v2807
    %3070 = vmatprep.subr.bf16.mxu0 0
    %3071 = vmatpush1.bf16.msra.mxu0 0
    %3072 = vmatprep.subr.bf16.mxu0 0
    %3073 = vmatpush1.bf16.msra.mxu0 0
    %3074 = vmatprep.subr.bf16.mxu0 0
    %3075 = vmatpush1.bf16.msra.mxu0 0
    %3076 = vmatprep.subr.bf16.mxu0 0
    %3077 = vmatpush1.bf16.msra.mxu0 0
    %3078 = vmatprep.subr.bf16.mxu0 0
    %3079 = vmatpush1.bf16.msra.mxu0 0
    %3080 = vmatprep.subr.bf16.mxu0 0
    %3081 = vmatpush1.bf16.msra.mxu0 0
    %3082 = vmatprep.subr.bf16.mxu0 0
    %3083 = vmatpush1.bf16.msra.mxu0 0
    %3084 = vmatprep.subr.bf16.mxu0 0
    %3085 = vmatpush1.bf16.msra.mxu0 0
    %3086 = vmatprep.subr.bf16.mxu0 0
    %3087 = vmatpush1.bf16.msra.mxu0 0
    %3088 = vmatprep.subr.bf16.mxu0 0
    %3089 = vmatpush1.bf16.msra.mxu0 0
    %3090 = vmatprep.subr.bf16.mxu0 0
    %3091 = vmatpush1.bf16.msra.mxu0 0
    %3092 = vmatprep.subr.bf16.mxu0 0
    %3093 = vmatpush1.bf16.msra.mxu0 0
    %3094 = vmatprep.mubr.bf16.mxu0 0
    %3095 = vmatmul.mubr.bf16.gmra.mrb[0].mxu0 %v2845
    %v3096 = vpop.f32.mrb[0].mxu0
    %v3097 = vadd.f32 %v3000, %v3096
    %v3098 = vpop.f32.mrb[0].mxu0
    %v3099 = vpop.f32.mrb[0].mxu0
    %v3100 = vadd.f32 %v3003, %v3099
    %v3101 = vpop.f32.mrb[0].mxu0
    %3102 = vmatprep.mubr.bf16.mxu0 0
    %3103 = vmatmul.mubr.bf16.gmra.mrb[0].mxu0 %v2848
    %v3104 = vpop.f32.mrb[0].mxu0
    %v3105 = vadd.f32 %v3008, %v3104
    %v3106 = vpop.f32.mrb[0].mxu0
    %v3107 = vpop.f32.mrb[0].mxu0
    %v3108 = vadd.f32 %v3011, %v3107
    %v3109 = vpop.f32.mrb[0].mxu0
    %3110 = vmatprep.mubr.bf16.mxu0 0
    %3111 = vmatmul.mubr.bf16.gmra.mrb[0].mxu0 %v2851
    %v3112 = vpop.f32.mrb[0].mxu0
    %v3113 = vadd.f32 %v3016, %v3112
    %v3114 = vpop.f32.mrb[0].mxu0
    %v3115 = vpop.f32.mrb[0].mxu0
    %v3116 = vadd.f32 %v3019, %v3115
    %v3117 = vpop.f32.mrb[0].mxu0
    %3118 = vmatprep.mubr.bf16.mxu0 0
    %3119 = vmatmul.mubr.bf16.gmra.mrb[0].mxu0 %v2854
    %v3120 = vpop.f32.mrb[0].mxu0
    %v3121 = vadd.f32 %v3024, %v3120
    %v3122 = vpop.f32.mrb[0].mxu0
    %v3123 = vpop.f32.mrb[0].mxu0
    %v3124 = vadd.f32 %v3027, %v3123
    %v3125 = vpop.f32.mrb[0].mxu0
    %3126 = vmatprep.mubr.bf16.mxu0 0
    %3127 = vmatmul.mubr.bf16.gmra.mrb[0].mxu0 %v2857
    %v3128 = vpop.f32.mrb[0].mxu0
    %v3129 = vadd.f32 %v3032, %v3128
    %v3130 = vpop.f32.mrb[0].mxu0
    %v3131 = vpop.f32.mrb[0].mxu0
    %v3132 = vadd.f32 %v3035, %v3131
    %v3133 = vpop.f32.mrb[0].mxu0
    %3134 = vmatprep.mubr.bf16.mxu0 0
    %3135 = vmatmul.mubr.bf16.gmra.mrb[0].mxu0 %v2860
    %v3136 = vpop.f32.mrb[0].mxu0
    %v3137 = vadd.f32 %v3040, %v3136
    %v3138 = vpop.f32.mrb[0].mxu0
    %v3139 = vpop.f32.mrb[0].mxu0
    %v3140 = vadd.f32 %v3043, %v3139
    %v3141 = vpop.f32.mrb[0].mxu0
    %3142 = vmatprep.mubr.bf16.mxu0 0
    %3143 = vmatmul.mubr.bf16.gmra.mrb[0].mxu0 %v2863
    %v3144 = vpop.f32.mrb[0].mxu0
    %v3145 = vadd.f32 %v3048, %v3144
    %v3146 = vpop.f32.mrb[0].mxu0
    %v3147 = vpop.f32.mrb[0].mxu0
    %v3148 = vadd.f32 %v3051, %v3147
    %v3149 = vpop.f32.mrb[0].mxu0
    %3150 = vmatprep.mubr.bf16.mxu0 0
    %3151 = vmatmul.mubr.bf16.gmra.mrb[0].mxu0 %v2866
    %v3152 = vpop.f32.mrb[0].mxu0
    %v3153 = vadd.f32 %v3056, %v3152
    %v3154 = vpop.f32.mrb[0].mxu0
    %v3155 = vpop.f32.mrb[0].mxu0
    %v3156 = vadd.f32 %v3059, %v3155
    %v3157 = vpop.f32.mrb[0].mxu0
    %3158 = vdwg.mxu0
    %v3159 = vld [vmem:[%s8] sm:$0x1]
    %v3160 = vld [vmem:[%s9] sm:$0x1]
    %v3161 = vadd.f32 %v3097, %v3100
    %v3162 = vadd.f32 %v3161, %v3105
    %v3163 = vadd.f32 %v3162, %v3108
    %v3164 = vadd.f32 %v3163, %v3113
    %v3165 = vadd.f32 %v3164, %v3116
    %v3166 = vadd.f32 %v3165, %v3121
    %v3167 = vadd.f32 %v3166, %v3124
    %v3168 = vadd.f32 %v3167, %v3129
    %v3169 = vadd.f32 %v3168, %v3132
    %v3170 = vadd.f32 %v3169, %v3137
    %v3171 = vadd.f32 %v3170, %v3140
    %v3172 = vadd.f32 %v3171, %v3145
    %v3173 = vadd.f32 %v3172, %v3148
    %v3174 = vadd.f32 %v3173, %v3153
    %v3175 = vadd.f32 %v3174, %v3156
    %v3176 = vrot.slane %v3175, 4
    %v3177 = vadd.f32 %v3175, %v3176
    %v3178 = vrot.slane %v3177, 2
    %v3179 = vadd.f32 %v3177, %v3178
    %v3180 = vrot.slane %v3179, 1
    %v3181 = vadd.f32 %v3179, %v3180
    %v3182 = vmul.f32 %v3097, %v3097
    %v3183 = vmul.f32 %v3100, %v3100
    %v3184 = vmul.f32 %v3105, %v3105
    %v3185 = vmul.f32 %v3108, %v3108
    %v3186 = vmul.f32 %v3113, %v3113
    %v3187 = vmul.f32 %v3116, %v3116
    %v3188 = vmul.f32 %v3121, %v3121
    %v3189 = vmul.f32 %v3124, %v3124
    %v3190 = vmul.f32 %v3129, %v3129
    %v3191 = vmul.f32 %v3132, %v3132
    %v3192 = vmul.f32 %v3137, %v3137
    %v3193 = vmul.f32 %v3140, %v3140
    %v3194 = vmul.f32 %v3145, %v3145
    %v3195 = vmul.f32 %v3148, %v3148
    %v3196 = vmul.f32 %v3153, %v3153
    %v3197 = vmul.f32 %v3156, %v3156
    %v3198 = vadd.f32 %v3182, %v3183
    %v3199 = vadd.f32 %v3198, %v3184
    %v3200 = vadd.f32 %v3199, %v3185
    %v3201 = vadd.f32 %v3200, %v3186
    %v3202 = vadd.f32 %v3201, %v3187
    %v3203 = vadd.f32 %v3202, %v3188
    %v3204 = vadd.f32 %v3203, %v3189
    %v3205 = vadd.f32 %v3204, %v3190
    %v3206 = vadd.f32 %v3205, %v3191
    %v3207 = vadd.f32 %v3206, %v3192
    %v3208 = vadd.f32 %v3207, %v3193
    %v3209 = vadd.f32 %v3208, %v3194
    %v3210 = vadd.f32 %v3209, %v3195
    %v3211 = vadd.f32 %v3210, %v3196
    %v3212 = vadd.f32 %v3211, %v3197
    %v3213 = vrot.slane %v3212, 4
    %v3214 = vadd.f32 %v3212, %v3213
    %v3215 = vrot.slane %v3214, 2
    %v3216 = vadd.f32 %v3214, %v3215
    %v3217 = vrot.slane %v3216, 1
    %v3218 = vadd.f32 %v3216, %v3217
    %v3219 = vmul.f32 %v3181, 0.0078125
    %v3220 = vmul.f32 %v3218, 0.0078125
    %v3221 = vmul.f32 %v3219, %v3219
    %v3222 = vsub.f32 %v3220, %v3221
    %v3223 = vmax.f32 %v3222, 0.0
    %v3224 = vadd.f32 %v3223, 0.001
    %v3225 = vrsqrt.pop %v3224
    %v3226 = vmul.f32 %v3159, %v3225
    %v3227 = vmul.f32 %v3219, %v3226
    %v3228 = vsub.f32 %v3160, %v3227
    %v3230 = vlaneseq
    %v3231 = vshrl.u32 %v3230, 7
    %v3232 = vsub.s32 0, %v3231
    %v3233 = vrot.slane %v3226, %v3232
    %v3235 = vmul.f32 %v3097, %v3233
    %v3236 = vmul.f32 %v3100, %v3233
    %v3237 = vmul.f32 %v3105, %v3233
    %v3238 = vmul.f32 %v3108, %v3233
    %v3239 = vmul.f32 %v3113, %v3233
    %v3240 = vmul.f32 %v3116, %v3233
    %v3241 = vmul.f32 %v3121, %v3233
    %v3242 = vmul.f32 %v3124, %v3233
    %v3243 = vmul.f32 %v3129, %v3233
    %v3244 = vmul.f32 %v3132, %v3233
    %v3245 = vmul.f32 %v3137, %v3233
    %v3246 = vmul.f32 %v3140, %v3233
    %v3247 = vmul.f32 %v3145, %v3233
    %v3248 = vmul.f32 %v3148, %v3233
    %v3249 = vmul.f32 %v3153, %v3233
    %v3250 = vmul.f32 %v3156, %v3233
    %v3252 = vlaneseq
    %v3253 = vshrl.u32 %v3252, 7
    %v3254 = vsub.s32 0, %v3253
    %v3255 = vrot.slane %v3228, %v3254
    %v3257 = vadd.f32 %v3235, %v3255
    %v3258 = vadd.f32 %v3236, %v3255
    %v3259 = vadd.f32 %v3237, %v3255
    %v3260 = vadd.f32 %v3238, %v3255
    %v3261 = vadd.f32 %v3239, %v3255
    %v3262 = vadd.f32 %v3240, %v3255
    %v3263 = vadd.f32 %v3241, %v3255
    %v3264 = vadd.f32 %v3242, %v3255
    %v3265 = vadd.f32 %v3243, %v3255
    %v3266 = vadd.f32 %v3244, %v3255
    %v3267 = vadd.f32 %v3245, %v3255
    %v3268 = vadd.f32 %v3246, %v3255
    %v3269 = vadd.f32 %v3247, %v3255
    %v3270 = vadd.f32 %v3248, %v3255
    %v3271 = vadd.f32 %v3249, %v3255
    %v3272 = vadd.f32 %v3250, %v3255
    %v3273 = vmax.f32 %v3257, 0.0
    %v3274 = vmax.f32 %v3258, 0.0
    %v3275 = vmax.f32 %v3259, 0.0
    %v3276 = vmax.f32 %v3260, 0.0
    %v3277 = vmax.f32 %v3261, 0.0
    %v3278 = vmax.f32 %v3262, 0.0
    %v3279 = vmax.f32 %v3263, 0.0
    %v3280 = vmax.f32 %v3264, 0.0
    %v3281 = vmax.f32 %v3265, 0.0
    %v3282 = vmax.f32 %v3266, 0.0
    %v3283 = vmax.f32 %v3267, 0.0
    %v3284 = vmax.f32 %v3268, 0.0
    %v3285 = vmax.f32 %v3269, 0.0
    %v3286 = vmax.f32 %v3270, 0.0
    %v3287 = vmax.f32 %v3271, 0.0
    %v3288 = vmax.f32 %v3272, 0.0
    %3289 = vst [vmem:[#allocation6] sm:$0xff] %v3273
    %3290 = vst [vmem:[#allocation6 + $0x10] sm:$0xff] %v3274
    %3291 = vst [vmem:[#allocation6 + $0x20] sm:$0xff] %v3275
    %3292 = vst [vmem:[#allocation6 + $0x30] sm:$0xff] %v3276
    %3293 = vst [vmem:[#allocation6 + $0x40] sm:$0xff] %v3277
    %3294 = vst [vmem:[#allocation6 + $0x50] sm:$0xff] %v3278
    %3295 = vst [vmem:[#allocation6 + $0x60] sm:$0xff] %v3279
    %3296 = vst [vmem:[#allocation6 + $0x70] sm:$0xff] %v3280
    %3297 = vst [vmem:[#allocation6 + $0x90] sm:$0xff] %v3281
    %3298 = vst [vmem:[#allocation6 + $0xa0] sm:$0xff] %v3282
    %3299 = vst [vmem:[#allocation6 + $0xb0] sm:$0xff] %v3283
    %3300 = vst [vmem:[#allocation6 + $0xc0] sm:$0xff] %v3284
    %3301 = vst [vmem:[#allocation6 + $0xd0] sm:$0xff] %v3285
    %3302 = vst [vmem:[#allocation6 + $0xe0] sm:$0xff] %v3286
    %3303 = vst [vmem:[#allocation6 + $0xf0] sm:$0xff] %v3287
    %3304 = vst [vmem:[#allocation6 + $0x100] sm:$0xff] %v3288
    %s3305 = scalar_lea.vmem [#allocation6], 128
    %3306 = vst [vmem:[%s3305] sm:$0xff] 0.0
    %3307 = vst [vmem:[%s3305 + $0x8] sm:$0x1] 0.0
    %3308 = vst [vmem:[%s3305 + $0x90] sm:$0xff] 0.0
    %3309 = vst [vmem:[%s3305 + $0x98] sm:$0x1] 0.0
    %3310 = vst [vmem:[#allocation6 + $0x8] sm:$0x1] 0.0
    %3311 = vst [vmem:[#allocation6 + $0x18] sm:$0x1] 0.0
    %3312 = vst [vmem:[#allocation6 + $0x28] sm:$0x1] 0.0
    %3313 = vst [vmem:[#allocation6 + $0x38] sm:$0x1] 0.0
    %3314 = vst [vmem:[#allocation6 + $0x48] sm:$0x1] 0.0
    %3315 = vst [vmem:[#allocation6 + $0x58] sm:$0x1] 0.0
    %3316 = vst [vmem:[#allocation6 + $0x68] sm:$0x1] 0.0
    %3317 = vst [vmem:[#allocation6 + $0x78] sm:$0x1] 0.0
    %3318 = vst [vmem:[#allocation6 + $0x88] sm:$0x1] 0.0
    %3319 = vst [vmem:[#allocation6 + $0x98] sm:$0x1] 0.0
    %3320 = vst [vmem:[#allocation6 + $0xa8] sm:$0x1] 0.0
    %3321 = vst [vmem:[#allocation6 + $0xb8] sm:$0x1] 0.0
    %3322 = vst [vmem:[#allocation6 + $0xc8] sm:$0x1] 0.0
    %3323 = vst [vmem:[#allocation6 + $0xd8] sm:$0x1] 0.0
    %3324 = vst [vmem:[#allocation6 + $0xe8] sm:$0x1] 0.0
    %3325 = vst [vmem:[#allocation6 + $0xf8] sm:$0x1] 0.0
    %3326 = vst [vmem:[#allocation6 + $0x108] sm:$0x1] 0.0
    %3327 = vst [vmem:[#allocation6 + $0x118] sm:$0x1] 0.0
    %v3328 = vld [vmem:[#allocation6] ss:$2 sm:$0xf]
    %s3329 = scalar_lea.vmem [#allocation6], 16
    %v3330 = vld [vmem:[%s3329] ss:$2 sm:$0xf]
    %s3331 = scalar_lea.vmem [#allocation6], 32
    %v3332 = vld [vmem:[%s3331] ss:$2 sm:$0xf]
    %s3333 = scalar_lea.vmem [#allocation6], 48
    %v3334 = vld [vmem:[%s3333] ss:$2 sm:$0xf]
    %s3335 = scalar_lea.vmem [#allocation6], 64
    %v3336 = vld [vmem:[%s3335] ss:$2 sm:$0xf]
    %s3337 = scalar_lea.vmem [#allocation6], 80
    %v3338 = vld [vmem:[%s3337] ss:$2 sm:$0xf]
    %s3339 = scalar_lea.vmem [#allocation6], 96
    %v3340 = vld [vmem:[%s3339] ss:$2 sm:$0xf]
    %s3341 = scalar_lea.vmem [#allocation6], 112
    %v3342 = vld [vmem:[%s3341] ss:$2 sm:$0xf]
    %s3343 = scalar_lea.vmem [#allocation6], 128
    %v3344 = vld [vmem:[%s3343] ss:$2 sm:$0xf]
    %s3345 = scalar_lea.vmem [#allocation6], 144
    %v3346 = vld [vmem:[%s3345] ss:$2 sm:$0xf]
    %s3347 = scalar_lea.vmem [#allocation6], 160
    %v3348 = vld [vmem:[%s3347] ss:$2 sm:$0xf]
    %s3349 = scalar_lea.vmem [#allocation6], 176
    %v3350 = vld [vmem:[%s3349] ss:$2 sm:$0xf]
    %s3351 = scalar_lea.vmem [#allocation6], 192
    %v3352 = vld [vmem:[%s3351] ss:$2 sm:$0xf]
    %s3353 = scalar_lea.vmem [#allocation6], 208
    %v3354 = vld [vmem:[%s3353] ss:$2 sm:$0xf]
    %s3355 = scalar_lea.vmem [#allocation6], 224
    %v3356 = vld [vmem:[%s3355] ss:$2 sm:$0xf]
    %s3357 = scalar_lea.vmem [#allocation6], 240
    %v3358 = vld [vmem:[%s3357] ss:$2 sm:$0xf]
    %s3359 = scalar_lea.vmem [#allocation6], 256
    %v3360 = vld [vmem:[%s3359] ss:$2 sm:$0xf]
    %s3361 = scalar_lea.vmem [#allocation6], 272
    %v3362 = vld [vmem:[%s3361] ss:$2 sm:$0xf]
    %s3363 = scalar_lea.vmem [#allocation6], 1
    %v3364 = vld [vmem:[%s3363] ss:$2 sm:$0xf]
    %s3365 = scalar_lea.vmem [#allocation6], 17
    %v3366 = vld [vmem:[%s3365] ss:$2 sm:$0xf]
    %s3367 = scalar_lea.vmem [#allocation6], 33
    %v3368 = vld [vmem:[%s3367] ss:$2 sm:$0xf]
    %s3369 = scalar_lea.vmem [#allocation6], 49
    %v3370 = vld [vmem:[%s3369] ss:$2 sm:$0xf]
    %s3371 = scalar_lea.vmem [#allocation6], 65
    %v3372 = vld [vmem:[%s3371] ss:$2 sm:$0xf]
    %s3373 = scalar_lea.vmem [#allocation6], 81
    %v3374 = vld [vmem:[%s3373] ss:$2 sm:$0xf]
    %s3375 = scalar_lea.vmem [#allocation6], 97
    %v3376 = vld [vmem:[%s3375] ss:$2 sm:$0xf]
    %s3377 = scalar_lea.vmem [#allocation6], 113
    %v3378 = vld [vmem:[%s3377] ss:$2 sm:$0xf]
    %s3379 = scalar_lea.vmem [#allocation6], 129
    %v3380 = vld [vmem:[%s3379] ss:$2 sm:$0xf]
    %s3381 = scalar_lea.vmem [#allocation6], 145
    %v3382 = vld [vmem:[%s3381] ss:$2 sm:$0xf]
    %s3383 = scalar_lea.vmem [#allocation6], 161
    %v3384 = vld [vmem:[%s3383] ss:$2 sm:$0xf]
    %s3385 = scalar_lea.vmem [#allocation6], 177
    %v3386 = vld [vmem:[%s3385] ss:$2 sm:$0xf]
    %s3387 = scalar_lea.vmem [#allocation6], 193
    %v3388 = vld [vmem:[%s3387] ss:$2 sm:$0xf]
    %s3389 = scalar_lea.vmem [#allocation6], 209
    %v3390 = vld [vmem:[%s3389] ss:$2 sm:$0xf]
    %s3391 = scalar_lea.vmem [#allocation6], 225
    %v3392 = vld [vmem:[%s3391] ss:$2 sm:$0xf]
    %s3393 = scalar_lea.vmem [#allocation6], 241
    %v3394 = vld [vmem:[%s3393] ss:$2 sm:$0xf]
    %s3395 = scalar_lea.vmem [#allocation6], 257
    %v3396 = vld [vmem:[%s3395] ss:$2 sm:$0xf]
    %s3397 = scalar_lea.vmem [#allocation6], 273
    %v3398 = vld [vmem:[%s3397] ss:$2 sm:$0xf]
    %s3399 = scalar_lea.vmem [#allocation6], 2
    %v3400 = vld [vmem:[%s3399] ss:$2 sm:$0xf]
    %s3401 = scalar_lea.vmem [#allocation6], 18
    %v3402 = vld [vmem:[%s3401] ss:$2 sm:$0xf]
    %s3403 = scalar_lea.vmem [#allocation6], 34
    %v3404 = vld [vmem:[%s3403] ss:$2 sm:$0xf]
    %s3405 = scalar_lea.vmem [#allocation6], 50
    %v3406 = vld [vmem:[%s3405] ss:$2 sm:$0xf]
    %s3407 = scalar_lea.vmem [#allocation6], 66
    %v3408 = vld [vmem:[%s3407] ss:$2 sm:$0xf]
    %s3409 = scalar_lea.vmem [#allocation6], 82
    %v3410 = vld [vmem:[%s3409] ss:$2 sm:$0xf]
    %s3411 = scalar_lea.vmem [#allocation6], 98
    %v3412 = vld [vmem:[%s3411] ss:$2 sm:$0xf]
    %s3413 = scalar_lea.vmem [#allocation6], 114
    %v3414 = vld [vmem:[%s3413] ss:$2 sm:$0xf]
    %s3415 = scalar_lea.vmem [#allocation6], 130
    %v3416 = vld [vmem:[%s3415] ss:$2 sm:$0xf]
    %s3417 = scalar_lea.vmem [#allocation6], 146
    %v3418 = vld [vmem:[%s3417] ss:$2 sm:$0xf]
    %s3419 = scalar_lea.vmem [#allocation6], 162
    %v3420 = vld [vmem:[%s3419] ss:$2 sm:$0xf]
    %s3421 = scalar_lea.vmem [#allocation6], 178
    %v3422 = vld [vmem:[%s3421] ss:$2 sm:$0xf]
    %s3423 = scalar_lea.vmem [#allocation6], 194
    %v3424 = vld [vmem:[%s3423] ss:$2 sm:$0xf]
    %s3425 = scalar_lea.vmem [#allocation6], 210
    %v3426 = vld [vmem:[%s3425] ss:$2 sm:$0xf]
    %s3427 = scalar_lea.vmem [#allocation6], 226
    %v3428 = vld [vmem:[%s3427] ss:$2 sm:$0xf]
    %s3429 = scalar_lea.vmem [#allocation6], 242
    %v3430 = vld [vmem:[%s3429] ss:$2 sm:$0xf]
    %s3431 = scalar_lea.vmem [#allocation6], 258
    %v3432 = vld [vmem:[%s3431] ss:$2 sm:$0xf]
    %s3433 = scalar_lea.vmem [#allocation6], 274
    %v3434 = vld [vmem:[%s3433] ss:$2 sm:$0xf]
    %v3435 = vmax.f32 %v3328, %v3364
    %v3436 = vmax.f32 %v3330, %v3366
    %v3437 = vmax.f32 %v3332, %v3368
    %v3438 = vmax.f32 %v3334, %v3370
    %v3439 = vmax.f32 %v3336, %v3372
    %v3440 = vmax.f32 %v3338, %v3374
    %v3441 = vmax.f32 %v3340, %v3376
    %v3442 = vmax.f32 %v3342, %v3378
    %v3443 = vmax.f32 %v3344, %v3380
    %v3444 = vmax.f32 %v3346, %v3382
    %v3445 = vmax.f32 %v3348, %v3384
    %v3446 = vmax.f32 %v3350, %v3386
    %v3447 = vmax.f32 %v3352, %v3388
    %v3448 = vmax.f32 %v3354, %v3390
    %v3449 = vmax.f32 %v3356, %v3392
    %v3450 = vmax.f32 %v3358, %v3394
    %v3451 = vmax.f32 %v3360, %v3396
    %v3452 = vmax.f32 %v3362, %v3398
    %v3453 = vmax.f32 %v3435, %v3400
    %v3454 = vmax.f32 %v3436, %v3402
    %v3455 = vmax.f32 %v3437, %v3404
    %v3456 = vmax.f32 %v3438, %v3406
    %v3457 = vmax.f32 %v3439, %v3408
    %v3458 = vmax.f32 %v3440, %v3410
    %v3459 = vmax.f32 %v3441, %v3412
    %v3460 = vmax.f32 %v3442, %v3414
    %v3461 = vmax.f32 %v3443, %v3416
    %v3462 = vmax.f32 %v3444, %v3418
    %v3463 = vmax.f32 %v3445, %v3420
    %v3464 = vmax.f32 %v3446, %v3422
    %v3465 = vmax.f32 %v3447, %v3424
    %v3466 = vmax.f32 %v3448, %v3426
    %v3467 = vmax.f32 %v3449, %v3428
    %v3468 = vmax.f32 %v3450, %v3430
    %v3469 = vmax.f32 %v3451, %v3432
    %v3470 = vmax.f32 %v3452, %v3434
    %v3471 = vmax.f32 %v3453, %v3454
    %v3472 = vmax.f32 %v3462, %v3463
    %v3473 = vmax.f32 %v3471, %v3455
    %v3474 = vmax.f32 %v3472, %v3464
    %v3475 = vmax.f32 %v3455, %v3456
    %v3476 = vmax.f32 %v3464, %v3465
    %v3477 = vmax.f32 %v3475, %v3457
    %v3478 = vmax.f32 %v3476, %v3466
    %v3479 = vmax.f32 %v3457, %v3458
    %v3480 = vmax.f32 %v3466, %v3467
    %v3481 = vmax.f32 %v3479, %v3459
    %v3482 = vmax.f32 %v3480, %v3468
    %v3483 = vmax.f32 %v3459, %v3460
    %v3484 = vmax.f32 %v3468, %v3469
    %v3485 = vmax.f32 %v3483, %v3461
    %v3486 = vmax.f32 %v3484, %v3470
    %v3489 = vrot.slane %v3477, 4
    %v3490 = vrot.slane %v3478, 4
    %v3495 = vrot.slane %v3485, 4
    %v3496 = vrot.slane %v3486, 4
    %vm3499 = vcmask 1043456
    %v3500 = vsel %vm3499, %v3473, %v3489
    %v3501 = vsel %vm3499, %v3474, %v3490
    %v3502 = vsel %vm3499, %v3481, %v3495
    %v3503 = vsel %vm3499, %v3482, %v3496
    %3504 = vst [vmem:[#allocation7] sm:$0xff] %v3500
    %3505 = vst [vmem:[#allocation7 + $0x8] sm:$0xff] %v3502
    %3506 = vst [vmem:[#allocation7 + $0x10] sm:$0xff] %v3501
    %3507 = vst [vmem:[#allocation7 + $0x18] sm:$0xff] %v3503
    // Predicated region
    $region42: #{googlenet_cifar10_forward.1} parent=1 // pred_check
      _
    $region43: #{googlenet_cifar10_forward.1} parent=1 // pred_check_branch
      %3509 = sbr.rel (0) target = $region45
    $region44: #{googlenet_cifar10_forward.1} parent=1 // pred_region
      %s3511 = ssub.s32 512, 512
      %3512 = vsyncadd [#allocation8], %s3511
      %s3513 = sshll.u32 [#allocation7], 4
      %s3514 = int_to_ptr.vmem [resolvable:$true] %s3513
      %3519 = dma.vmem_to_hbm [thread:$0]  %s3514, 512, %s10, [#allocation8], 128, 128, 8
    $region45: #{googlenet_cifar10_forward.1} parent=1 // pred_fallthru
      _
    // Predicated region
    $region46: #{googlenet_cifar10_forward.1} parent=1 // pred_check
      _
    $region47: #{googlenet_cifar10_forward.1} parent=1 // pred_check_branch
      %3521 = sbr.rel (0) target = $region49
    $region48: #{googlenet_cifar10_forward.1} parent=1 // pred_region
      %3522 = dma.done [#allocation8], 512
    $region49: #{googlenet_cifar10_forward.1} parent=1 // pred_fallthru
      _
    %3523 = vsyncpa [#allocation8], 1

</llo_original>
